<compile_context>
chip_gen: v7x
topology: tpu7x:2x2x1
jax: 0.10.0
libtpu: 0.0.40
codegen_flags: <defaults>
</compile_context>

<pallas_src>
import functools

import jax
import jax.numpy as jnp
import numpy as np
from jax import lax
from jax.experimental import pallas as pl
from jax.experimental.pallas import tpu as pltpu


# ------------------------------ Pallas kernel -------------------------------

def _convnet_kernel(x_ref, band1_ref, b1row_ref, band2_ref, b2row_ref,
                    wl3_ref, blrow_ref, logits_ref, emb_ref, *, oc2):
    """Fused conv1+relu -> conv2+relu -> maxpool(2,1) -> linear.

    Layouts (channels-last "rows", c fastest inside each row):
      x_ref     : (B, H, W*C)            x[b, h, w*C + c]
      band{i}   : (KH, Win*Cin, OW*OC)   banded conv weights (see _banded_conv_weight)
      b{i}row   : (1, OW*OC)             bias tiled over output width
      wl3       : (PH, PW*OC2, classes)  linear weight permuted to kernel layout
      blrow     : (1, classes)
      logits_ref: (B, classes)
      emb_ref   : (B, PH, PW*OC2)        pooled activations (kernel layout)
    """
    B = x_ref.shape[0]
    K1 = band1_ref.shape[0]
    K2 = band2_ref.shape[0]

    for b in range(B):                                    # static unroll (B is tiny)
        # ---- conv_1 + ReLU :  a1[oh, ow*OC1 + oc] ----
        oh1 = x_ref.shape[1] - K1 + 1
        acc1 = jnp.zeros((oh1, band1_ref.shape[2]), jnp.float32)
        for kh in range(K1):
            acc1 = acc1 + jnp.dot(x_ref[b, kh:kh + oh1, :], band1_ref[kh],
                                  preferred_element_type=jnp.float32)
        a1 = jnp.maximum(acc1 + b1row_ref[...], 0.0)      # (OH1, OW1*OC1)

        # ---- conv_2 + ReLU :  a2[oh, ow*OC2 + oc] ----
        oh2 = a1.shape[0] - K2 + 1
        acc2 = jnp.zeros((oh2, band2_ref.shape[2]), jnp.float32)
        for kh in range(K2):
            acc2 = acc2 + jnp.dot(a1[kh:kh + oh2, :], band2_ref[kh],
                                  preferred_element_type=jnp.float32)
        a2 = jnp.maximum(acc2 + b2row_ref[...], 0.0)      # (OH2, OW2*OC2)

        # ---- MaxPool2d(kernel_size=2, stride=1): shifted maxima, in-register ----
        v = jnp.maximum(a2[:-1, :], a2[1:, :])            # vertical   (PH, OW2*OC2)
        pooled = jnp.maximum(v[:, :-oc2], v[:, oc2:])     # horizontal (PH, PW*OC2)

        emb_ref[b, :, :] = pooled

        # ---- Linear: bias + sum over pooled rows of small matmuls ----
        logit = blrow_ref[...]                            # (1, classes)
        for ph in range(pooled.shape[0]):
            logit = logit + jnp.dot(pooled[ph:ph + 1, :], wl3_ref[ph],
                                    preferred_element_type=jnp.float32)
        logits_ref[b:b + 1, :] = logit


# --------------------------- host-side weight prep --------------------------

def _banded_conv_weight(w, in_width):
    """Pack an OIHW conv weight into per-kernel-row banded matmul matrices.

    band[kh, wi*Cin + c, ow*OC + oc] == w[oc, c, kh, wi - ow]   (0 <= wi-ow < KW)
    so that a valid (stride-1, no-pad) conv over an input stored as rows
    A[h, w*Cin + c] is simply:   out = sum_kh  A[kh:kh+OH, :] @ band[kh].
    """
    w = np.asarray(w, dtype=np.float32)
    OC, Cin, KH, KW = w.shape
    OW = in_width - KW + 1
    band = np.zeros((KH, in_width * Cin, OW * OC), dtype=np.float32)
    for kh in range(KH):
        for ow in range(OW):
            for kw in range(KW):
                wi = ow + kw
                band[kh, wi * Cin:(wi + 1) * Cin, ow * OC:(ow + 1) * OC] = \
                    w[:, :, kh, kw].T
    return band


def prepare_params(params, height, width):
    """One-time repack of PyTorch-layout parameters into kernel-friendly layouts."""
    w1 = np.asarray(params["w1"]); b1 = np.asarray(params["b1"])
    w2 = np.asarray(params["w2"]); b2 = np.asarray(params["b2"])
    wl = np.asarray(params["wl"]); bl = np.asarray(params["bl"])

    oc1, _, k1, _ = w1.shape
    oh1, ow1 = height - k1 + 1, width - k1 + 1
    oc2, _, k2, _ = w2.shape
    oh2, ow2 = oh1 - k2 + 1, ow1 - k2 + 1
    ph, pw = oh2 - 1, ow2 - 1                       # MaxPool2d(2, stride=1)
    classes = wl.shape[0]

    wl3 = (wl.reshape(classes, oc2, ph, pw)         # torch flatten order (c, ph, pw)
             .transpose(2, 3, 1, 0)                 # -> (ph, pw, c, classes)
             .reshape(ph, pw * oc2, classes)
             .astype(np.float32))

    packed = dict(
        band1=_banded_conv_weight(w1, width),       # (K1, W*C,     OW1*OC1)
        b1row=np.tile(b1, ow1).reshape(1, ow1 * oc1).astype(np.float32),
        band2=_banded_conv_weight(w2, ow1),         # (K2, OW1*OC1, OW2*OC2)
        b2row=np.tile(b2, ow2).reshape(1, ow2 * oc2).astype(np.float32),
        wl3=wl3,
        blrow=bl.reshape(1, classes).astype(np.float32),
    )
    return {k: jnp.asarray(v) for k, v in packed.items()}


# --------------------------------- forward ----------------------------------

def convnet_forward(x_nchw, kp):
    # TODO(synk): nn.Dropout is stochastic; implemented as identity (eval-mode semantics).
    B, C, H, W = x_nchw.shape
    classes = kp["blrow"].shape[1]
    ph = kp["wl3"].shape[0]
    pwoc2 = kp["wl3"].shape[1]
    oc2 = kp["band2"].shape[2] - pwoc2              # (OW2 - PW) * OC2 == OC2
    pw = pwoc2 // oc2

    # Single cheap boundary transpose: NCHW -> channels-last rows (B, H, W*C).
    x_rows = x_nchw.transpose(0, 2, 3, 1).reshape(B, H, W * C)

    vmem = pl.BlockSpec(memory_space=pltpu.MemorySpace.VMEM)
    logits, emb_rows = pl.pallas_call(
        functools.partial(_convnet_kernel, oc2=oc2),
        out_shape=(
            jax.ShapeDtypeStruct((B, classes), jnp.float32),
            jax.ShapeDtypeStruct((B, ph, pwoc2), jnp.float32),
        ),
        in_specs=[vmem] * 7,
        out_specs=(vmem, vmem),
    )(x_rows, kp["band1"], kp["b1row"], kp["band2"], kp["b2row"],
      kp["wl3"], kp["blrow"])

    # Embeddings in PyTorch reshape(-1, lin_in) order, i.e. (c, ph, pw) flatten.
    emb = (emb_rows.reshape(B, ph, pw, oc2)
                   .transpose(0, 3, 1, 2)
                   .reshape(B, oc2 * ph * pw))
    return logits, emb


# ---------------------------- params / reference ----------------------------

def init_params(key, channels, classes, lin_in):
    ks = jax.random.split(key, 6)

    def u(k, shape, fan_in):
        bound = 1.0 / np.sqrt(fan_in)
        return jax.random.uniform(k, shape, jnp.float32, -bound, bound)

    return dict(
        w1=u(ks[0], (16, channels, 8, 8), channels * 8 * 8),
        b1=u(ks[1], (16,), channels * 8 * 8),
        w2=u(ks[2], (8, 16, 4, 4), 16 * 4 * 4),
        b2=u(ks[3], (8,), 16 * 4 * 4),
        wl=u(ks[4], (classes, lin_in), lin_in),
        bl=u(ks[5], (classes,), lin_in),
    )


def reference_forward(x, p):
    dn1 = lax.conv_dimension_numbers(x.shape, p["w1"].shape, ("NCHW", "OIHW", "NCHW"))
    h = lax.conv_general_dilated(x, p["w1"], (1, 1), "VALID", dimension_numbers=dn1)
    h = jax.nn.relu(h + p["b1"][None, :, None, None])
    dn2 = lax.conv_dimension_numbers(h.shape, p["w2"].shape, ("NCHW", "OIHW", "NCHW"))
    h = lax.conv_general_dilated(h, p["w2"], (1, 1), "VALID", dimension_numbers=dn2)
    h = jax.nn.relu(h + p["b2"][None, :, None, None])
    h = lax.reduce_window(h, -jnp.inf, lax.max, (1, 1, 2, 2), (1, 1, 1, 1), "VALID")
    emb = h.reshape(x.shape[0], -1)
    return emb @ p["wl"].T + p["bl"], emb


# ----------------------------------- main ------------------------------------

if __name__ == "__main__":
    # Small shapes consistent with the module: height=width=16, channels=1.
    B, C, H, W, classes = 2, 1, 16, 16, 10
    conv1_dim = (H - 8 + 1, W - 8 + 1)                          # (9, 9)
    conv2_dim = (conv1_dim[0] - 4 + 1, conv1_dim[1] - 4 + 1)    # (6, 6)
    pool_dim = (conv2_dim[0] - 1, conv2_dim[1] - 1)             # (5, 5)
    lin_in = 8 * pool_dim[0] * pool_dim[1]                      # 200

    key = jax.random.PRNGKey(0)
    kx, kparam = jax.random.split(key)
    x = jax.random.normal(kx, (B, C, H, W), jnp.float32)
    params = init_params(kparam, C, classes, lin_in)
    kp = prepare_params(params, H, W)                           # one-time weight repack

    fwd = jax.jit(convnet_forward)
    logits, emb = fwd(x, kp)
    logits, emb = jax.block_until_ready((logits, emb))

    assert logits.shape == (B, classes)
    assert emb.shape == (B, lin_in)

    ref_logits, ref_emb = reference_forward(x, params)
    np.testing.assert_allclose(np.asarray(emb), np.asarray(ref_emb), rtol=2e-2, atol=2e-2)
    np.testing.assert_allclose(np.asarray(logits), np.asarray(ref_logits), rtol=2e-2, atol=2e-2)

    print("KERNEL_OK")
</pallas_src>

<mosaic_0001>
module attributes {stable_mosaic.version = 11 : i64} {
  func.func @_convnet_kernel(%arg0: memref<2x16x16xf32, #tpu.memory_space<vmem>>, %arg1: memref<8x16x144xf32, #tpu.memory_space<vmem>>, %arg2: memref<1x144xf32, #tpu.memory_space<vmem>>, %arg3: memref<4x144x48xf32, #tpu.memory_space<vmem>>, %arg4: memref<1x48xf32, #tpu.memory_space<vmem>>, %arg5: memref<5x40x10xf32, #tpu.memory_space<vmem>>, %arg6: memref<1x10xf32, #tpu.memory_space<vmem>>, %arg7: memref<2x10xf32, #tpu.memory_space<vmem>>, %arg8: memref<2x5x40xf32, #tpu.memory_space<vmem>>) attributes {dimension_semantics = [], scalar_prefetch = 0 : i64, scratch_operands = 0 : i64, tpu.core_type = #tpu.core_type<tc>} {
    %cst = arith.constant 0.000000e+00 : f32
    %0 = vector.broadcast %cst : f32 to vector<9x144xf32>
    %c0 = arith.constant 0 : index
    %c0_0 = arith.constant 0 : index
    %c0_1 = arith.constant 0 : index
    %1 = vector.load %arg0[%c0, %c0_0, %c0_1] : memref<2x16x16xf32, #tpu.memory_space<vmem>>, vector<1x9x16xf32>
    %2 = vector.shape_cast %1 : vector<1x9x16xf32> to vector<9x16xf32>
    %c0_2 = arith.constant 0 : index
    %c0_3 = arith.constant 0 : index
    %c0_4 = arith.constant 0 : index
    %3 = vector.load %arg1[%c0_2, %c0_3, %c0_4] : memref<8x16x144xf32, #tpu.memory_space<vmem>>, vector<1x16x144xf32>
    %4 = vector.shape_cast %3 : vector<1x16x144xf32> to vector<16x144xf32>
    %cst_5 = arith.constant dense<0.000000e+00> : vector<9x144xf32>
    %5 = tpu.matmul %2, %4, %cst_5 {dimension_numbers = #tpu.dot_dimension_numbers<[1], [0], [0], [1], [0, 0, 1, 1], [], []>} : vector<9x16xf32>, vector<16x144xf32>, vector<9x144xf32> -> vector<9x144xf32>
    %6 = arith.addf %0, %5 : vector<9x144xf32>
    %c0_6 = arith.constant 0 : index
    %c1 = arith.constant 1 : index
    %c0_7 = arith.constant 0 : index
    %7 = vector.load %arg0[%c0_6, %c1, %c0_7] : memref<2x16x16xf32, #tpu.memory_space<vmem>>, vector<1x9x16xf32>
    %8 = vector.shape_cast %7 : vector<1x9x16xf32> to vector<9x16xf32>
    %c1_8 = arith.constant 1 : index
    %c0_9 = arith.constant 0 : index
    %c0_10 = arith.constant 0 : index
    %9 = vector.load %arg1[%c1_8, %c0_9, %c0_10] : memref<8x16x144xf32, #tpu.memory_space<vmem>>, vector<1x16x144xf32>
    %10 = vector.shape_cast %9 : vector<1x16x144xf32> to vector<16x144xf32>
    %cst_11 = arith.constant dense<0.000000e+00> : vector<9x144xf32>
    %11 = tpu.matmul %8, %10, %cst_11 {dimension_numbers = #tpu.dot_dimension_numbers<[1], [0], [0], [1], [0, 0, 1, 1], [], []>} : vector<9x16xf32>, vector<16x144xf32>, vector<9x144xf32> -> vector<9x144xf32>
    %12 = arith.addf %6, %11 : vector<9x144xf32>
    %c0_12 = arith.constant 0 : index
    %c2 = arith.constant 2 : index
    %c0_13 = arith.constant 0 : index
    %13 = vector.load %arg0[%c0_12, %c2, %c0_13] : memref<2x16x16xf32, #tpu.memory_space<vmem>>, vector<1x9x16xf32>
    %14 = vector.shape_cast %13 : vector<1x9x16xf32> to vector<9x16xf32>
    %c2_14 = arith.constant 2 : index
    %c0_15 = arith.constant 0 : index
    %c0_16 = arith.constant 0 : index
    %15 = vector.load %arg1[%c2_14, %c0_15, %c0_16] : memref<8x16x144xf32, #tpu.memory_space<vmem>>, vector<1x16x144xf32>
    %16 = vector.shape_cast %15 : vector<1x16x144xf32> to vector<16x144xf32>
    %cst_17 = arith.constant dense<0.000000e+00> : vector<9x144xf32>
    %17 = tpu.matmul %14, %16, %cst_17 {dimension_numbers = #tpu.dot_dimension_numbers<[1], [0], [0], [1], [0, 0, 1, 1], [], []>} : vector<9x16xf32>, vector<16x144xf32>, vector<9x144xf32> -> vector<9x144xf32>
    %18 = arith.addf %12, %17 : vector<9x144xf32>
    %c0_18 = arith.constant 0 : index
    %c3 = arith.constant 3 : index
    %c0_19 = arith.constant 0 : index
    %19 = vector.load %arg0[%c0_18, %c3, %c0_19] : memref<2x16x16xf32, #tpu.memory_space<vmem>>, vector<1x9x16xf32>
    %20 = vector.shape_cast %19 : vector<1x9x16xf32> to vector<9x16xf32>
    %c3_20 = arith.constant 3 : index
    %c0_21 = arith.constant 0 : index
    %c0_22 = arith.constant 0 : index
    %21 = vector.load %arg1[%c3_20, %c0_21, %c0_22] : memref<8x16x144xf32, #tpu.memory_space<vmem>>, vector<1x16x144xf32>
    %22 = vector.shape_cast %21 : vector<1x16x144xf32> to vector<16x144xf32>
    %cst_23 = arith.constant dense<0.000000e+00> : vector<9x144xf32>
    %23 = tpu.matmul %20, %22, %cst_23 {dimension_numbers = #tpu.dot_dimension_numbers<[1], [0], [0], [1], [0, 0, 1, 1], [], []>} : vector<9x16xf32>, vector<16x144xf32>, vector<9x144xf32> -> vector<9x144xf32>
    %24 = arith.addf %18, %23 : vector<9x144xf32>
    %c0_24 = arith.constant 0 : index
    %c4 = arith.constant 4 : index
    %c0_25 = arith.constant 0 : index
    %25 = vector.load %arg0[%c0_24, %c4, %c0_25] : memref<2x16x16xf32, #tpu.memory_space<vmem>>, vector<1x9x16xf32>
    %26 = vector.shape_cast %25 : vector<1x9x16xf32> to vector<9x16xf32>
    %c4_26 = arith.constant 4 : index
    %c0_27 = arith.constant 0 : index
    %c0_28 = arith.constant 0 : index
    %27 = vector.load %arg1[%c4_26, %c0_27, %c0_28] : memref<8x16x144xf32, #tpu.memory_space<vmem>>, vector<1x16x144xf32>
    %28 = vector.shape_cast %27 : vector<1x16x144xf32> to vector<16x144xf32>
    %cst_29 = arith.constant dense<0.000000e+00> : vector<9x144xf32>
    %29 = tpu.matmul %26, %28, %cst_29 {dimension_numbers = #tpu.dot_dimension_numbers<[1], [0], [0], [1], [0, 0, 1, 1], [], []>} : vector<9x16xf32>, vector<16x144xf32>, vector<9x144xf32> -> vector<9x144xf32>
    %30 = arith.addf %24, %29 : vector<9x144xf32>
    %c0_30 = arith.constant 0 : index
    %c5 = arith.constant 5 : index
    %c0_31 = arith.constant 0 : index
    %31 = vector.load %arg0[%c0_30, %c5, %c0_31] : memref<2x16x16xf32, #tpu.memory_space<vmem>>, vector<1x9x16xf32>
    %32 = vector.shape_cast %31 : vector<1x9x16xf32> to vector<9x16xf32>
    %c5_32 = arith.constant 5 : index
    %c0_33 = arith.constant 0 : index
    %c0_34 = arith.constant 0 : index
    %33 = vector.load %arg1[%c5_32, %c0_33, %c0_34] : memref<8x16x144xf32, #tpu.memory_space<vmem>>, vector<1x16x144xf32>
    %34 = vector.shape_cast %33 : vector<1x16x144xf32> to vector<16x144xf32>
    %cst_35 = arith.constant dense<0.000000e+00> : vector<9x144xf32>
    %35 = tpu.matmul %32, %34, %cst_35 {dimension_numbers = #tpu.dot_dimension_numbers<[1], [0], [0], [1], [0, 0, 1, 1], [], []>} : vector<9x16xf32>, vector<16x144xf32>, vector<9x144xf32> -> vector<9x144xf32>
    %36 = arith.addf %30, %35 : vector<9x144xf32>
    %c0_36 = arith.constant 0 : index
    %c6 = arith.constant 6 : index
    %c0_37 = arith.constant 0 : index
    %37 = vector.load %arg0[%c0_36, %c6, %c0_37] : memref<2x16x16xf32, #tpu.memory_space<vmem>>, vector<1x9x16xf32>
    %38 = vector.shape_cast %37 : vector<1x9x16xf32> to vector<9x16xf32>
    %c6_38 = arith.constant 6 : index
    %c0_39 = arith.constant 0 : index
    %c0_40 = arith.constant 0 : index
    %39 = vector.load %arg1[%c6_38, %c0_39, %c0_40] : memref<8x16x144xf32, #tpu.memory_space<vmem>>, vector<1x16x144xf32>
    %40 = vector.shape_cast %39 : vector<1x16x144xf32> to vector<16x144xf32>
    %cst_41 = arith.constant dense<0.000000e+00> : vector<9x144xf32>
    %41 = tpu.matmul %38, %40, %cst_41 {dimension_numbers = #tpu.dot_dimension_numbers<[1], [0], [0], [1], [0, 0, 1, 1], [], []>} : vector<9x16xf32>, vector<16x144xf32>, vector<9x144xf32> -> vector<9x144xf32>
    %42 = arith.addf %36, %41 : vector<9x144xf32>
    %c0_42 = arith.constant 0 : index
    %c7 = arith.constant 7 : index
    %c0_43 = arith.constant 0 : index
    %43 = vector.load %arg0[%c0_42, %c7, %c0_43] : memref<2x16x16xf32, #tpu.memory_space<vmem>>, vector<1x9x16xf32>
    %44 = vector.shape_cast %43 : vector<1x9x16xf32> to vector<9x16xf32>
    %c7_44 = arith.constant 7 : index
    %c0_45 = arith.constant 0 : index
    %c0_46 = arith.constant 0 : index
    %45 = vector.load %arg1[%c7_44, %c0_45, %c0_46] : memref<8x16x144xf32, #tpu.memory_space<vmem>>, vector<1x16x144xf32>
    %46 = vector.shape_cast %45 : vector<1x16x144xf32> to vector<16x144xf32>
    %cst_47 = arith.constant dense<0.000000e+00> : vector<9x144xf32>
    %47 = tpu.matmul %44, %46, %cst_47 {dimension_numbers = #tpu.dot_dimension_numbers<[1], [0], [0], [1], [0, 0, 1, 1], [], []>} : vector<9x16xf32>, vector<16x144xf32>, vector<9x144xf32> -> vector<9x144xf32>
    %48 = arith.addf %42, %47 : vector<9x144xf32>
    %c0_48 = arith.constant 0 : index
    %c0_49 = arith.constant 0 : index
    %49 = vector.load %arg2[%c0_48, %c0_49] : memref<1x144xf32, #tpu.memory_space<vmem>>, vector<1x144xf32>
    %50 = vector.broadcast %49 : vector<1x144xf32> to vector<9x144xf32>
    %51 = arith.addf %48, %50 : vector<9x144xf32>
    %cst_50 = arith.constant 0.000000e+00 : f32
    %52 = vector.broadcast %cst_50 : f32 to vector<9x144xf32>
    %53 = arith.maximumf %51, %52 : vector<9x144xf32>
    %cst_51 = arith.constant 0.000000e+00 : f32
    %54 = vector.broadcast %cst_51 : f32 to vector<6x48xf32>
    %55 = vector.extract_strided_slice %53 {offsets = [0, 0], sizes = [6, 144], strides = [1, 1]} : vector<9x144xf32> to vector<6x144xf32>
    %c0_52 = arith.constant 0 : index
    %c0_53 = arith.constant 0 : index
    %c0_54 = arith.constant 0 : index
    %56 = vector.load %arg3[%c0_52, %c0_53, %c0_54] : memref<4x144x48xf32, #tpu.memory_space<vmem>>, vector<1x144x48xf32>
    %57 = vector.shape_cast %56 : vector<1x144x48xf32> to vector<144x48xf32>
    %cst_55 = arith.constant dense<0.000000e+00> : vector<6x48xf32>
    %58 = tpu.matmul %55, %57, %cst_55 {dimension_numbers = #tpu.dot_dimension_numbers<[1], [0], [0], [1], [0, 0, 1, 1], [], []>} : vector<6x144xf32>, vector<144x48xf32>, vector<6x48xf32> -> vector<6x48xf32>
    %59 = arith.addf %54, %58 : vector<6x48xf32>
    %60 = vector.extract_strided_slice %53 {offsets = [1, 0], sizes = [6, 144], strides = [1, 1]} : vector<9x144xf32> to vector<6x144xf32>
    %c1_56 = arith.constant 1 : index
    %c0_57 = arith.constant 0 : index
    %c0_58 = arith.constant 0 : index
    %61 = vector.load %arg3[%c1_56, %c0_57, %c0_58] : memref<4x144x48xf32, #tpu.memory_space<vmem>>, vector<1x144x48xf32>
    %62 = vector.shape_cast %61 : vector<1x144x48xf32> to vector<144x48xf32>
    %cst_59 = arith.constant dense<0.000000e+00> : vector<6x48xf32>
    %63 = tpu.matmul %60, %62, %cst_59 {dimension_numbers = #tpu.dot_dimension_numbers<[1], [0], [0], [1], [0, 0, 1, 1], [], []>} : vector<6x144xf32>, vector<144x48xf32>, vector<6x48xf32> -> vector<6x48xf32>
    %64 = arith.addf %59, %63 : vector<6x48xf32>
    %65 = vector.extract_strided_slice %53 {offsets = [2, 0], sizes = [6, 144], strides = [1, 1]} : vector<9x144xf32> to vector<6x144xf32>
    %c2_60 = arith.constant 2 : index
    %c0_61 = arith.constant 0 : index
    %c0_62 = arith.constant 0 : index
    %66 = vector.load %arg3[%c2_60, %c0_61, %c0_62] : memref<4x144x48xf32, #tpu.memory_space<vmem>>, vector<1x144x48xf32>
    %67 = vector.shape_cast %66 : vector<1x144x48xf32> to vector<144x48xf32>
    %cst_63 = arith.constant dense<0.000000e+00> : vector<6x48xf32>
    %68 = tpu.matmul %65, %67, %cst_63 {dimension_numbers = #tpu.dot_dimension_numbers<[1], [0], [0], [1], [0, 0, 1, 1], [], []>} : vector<6x144xf32>, vector<144x48xf32>, vector<6x48xf32> -> vector<6x48xf32>
    %69 = arith.addf %64, %68 : vector<6x48xf32>
    %70 = vector.extract_strided_slice %53 {offsets = [3, 0], sizes = [6, 144], strides = [1, 1]} : vector<9x144xf32> to vector<6x144xf32>
    %c3_64 = arith.constant 3 : index
    %c0_65 = arith.constant 0 : index
    %c0_66 = arith.constant 0 : index
    %71 = vector.load %arg3[%c3_64, %c0_65, %c0_66] : memref<4x144x48xf32, #tpu.memory_space<vmem>>, vector<1x144x48xf32>
    %72 = vector.shape_cast %71 : vector<1x144x48xf32> to vector<144x48xf32>
    %cst_67 = arith.constant dense<0.000000e+00> : vector<6x48xf32>
    %73 = tpu.matmul %70, %72, %cst_67 {dimension_numbers = #tpu.dot_dimension_numbers<[1], [0], [0], [1], [0, 0, 1, 1], [], []>} : vector<6x144xf32>, vector<144x48xf32>, vector<6x48xf32> -> vector<6x48xf32>
    %74 = arith.addf %69, %73 : vector<6x48xf32>
    %c0_68 = arith.constant 0 : index
    %c0_69 = arith.constant 0 : index
    %75 = vector.load %arg4[%c0_68, %c0_69] : memref<1x48xf32, #tpu.memory_space<vmem>>, vector<1x48xf32>
    %76 = vector.broadcast %75 : vector<1x48xf32> to vector<6x48xf32>
    %77 = arith.addf %74, %76 : vector<6x48xf32>
    %cst_70 = arith.constant 0.000000e+00 : f32
    %78 = vector.broadcast %cst_70 : f32 to vector<6x48xf32>
    %79 = arith.maximumf %77, %78 : vector<6x48xf32>
    %80 = vector.extract_strided_slice %79 {offsets = [0, 0], sizes = [5, 48], strides = [1, 1]} : vector<6x48xf32> to vector<5x48xf32>
    %81 = vector.extract_strided_slice %79 {offsets = [1, 0], sizes = [5, 48], strides = [1, 1]} : vector<6x48xf32> to vector<5x48xf32>
    %82 = arith.maximumf %80, %81 : vector<5x48xf32>
    %83 = vector.extract_strided_slice %82 {offsets = [0, 0], sizes = [5, 40], strides = [1, 1]} : vector<5x48xf32> to vector<5x40xf32>
    %84 = vector.extract_strided_slice %82 {offsets = [0, 8], sizes = [5, 40], strides = [1, 1]} : vector<5x48xf32> to vector<5x40xf32>
    %85 = arith.maximumf %83, %84 : vector<5x40xf32>
    %c0_71 = arith.constant 0 : index
    %c0_72 = arith.constant 0 : index
    %c0_73 = arith.constant 0 : index
    %86 = vector.load %arg8[%c0_71, %c0_72, %c0_73] : memref<2x5x40xf32, #tpu.memory_space<vmem>>, vector<1x5x40xf32>
    %87 = vector.shape_cast %86 : vector<1x5x40xf32> to vector<5x40xf32>
    %88 = vector.shape_cast %85 : vector<5x40xf32> to vector<1x5x40xf32>
    tpu.vector_store %arg8[%c0_71, %c0_72, %c0_73], %88 {strides = array<i32>} : memref<2x5x40xf32, #tpu.memory_space<vmem>>, vector<1x5x40xf32>,
    %c0_74 = arith.constant 0 : index
    %c0_75 = arith.constant 0 : index
    %89 = vector.load %arg6[%c0_74, %c0_75] : memref<1x10xf32, #tpu.memory_space<vmem>>, vector<1x10xf32>
    %90 = vector.extract_strided_slice %85 {offsets = [0, 0], sizes = [1, 40], strides = [1, 1]} : vector<5x40xf32> to vector<1x40xf32>
    %c0_76 = arith.constant 0 : index
    %c0_77 = arith.constant 0 : index
    %c0_78 = arith.constant 0 : index
    %91 = vector.load %arg5[%c0_76, %c0_77, %c0_78] : memref<5x40x10xf32, #tpu.memory_space<vmem>>, vector<1x40x10xf32>
    %92 = vector.shape_cast %91 : vector<1x40x10xf32> to vector<40x10xf32>
    %cst_79 = arith.constant dense<0.000000e+00> : vector<1x10xf32>
    %93 = tpu.matmul %90, %92, %cst_79 {dimension_numbers = #tpu.dot_dimension_numbers<[1], [0], [0], [1], [0, 0, 1, 1], [], []>} : vector<1x40xf32>, vector<40x10xf32>, vector<1x10xf32> -> vector<1x10xf32>
    %94 = arith.addf %89, %93 : vector<1x10xf32>
    %95 = vector.extract_strided_slice %85 {offsets = [1, 0], sizes = [1, 40], strides = [1, 1]} : vector<5x40xf32> to vector<1x40xf32>
    %c1_80 = arith.constant 1 : index
    %c0_81 = arith.constant 0 : index
    %c0_82 = arith.constant 0 : index
    %96 = vector.load %arg5[%c1_80, %c0_81, %c0_82] : memref<5x40x10xf32, #tpu.memory_space<vmem>>, vector<1x40x10xf32>
    %97 = vector.shape_cast %96 : vector<1x40x10xf32> to vector<40x10xf32>
    %cst_83 = arith.constant dense<0.000000e+00> : vector<1x10xf32>
    %98 = tpu.matmul %95, %97, %cst_83 {dimension_numbers = #tpu.dot_dimension_numbers<[1], [0], [0], [1], [0, 0, 1, 1], [], []>} : vector<1x40xf32>, vector<40x10xf32>, vector<1x10xf32> -> vector<1x10xf32>
    %99 = arith.addf %94, %98 : vector<1x10xf32>
    %100 = vector.extract_strided_slice %85 {offsets = [2, 0], sizes = [1, 40], strides = [1, 1]} : vector<5x40xf32> to vector<1x40xf32>
    %c2_84 = arith.constant 2 : index
    %c0_85 = arith.constant 0 : index
    %c0_86 = arith.constant 0 : index
    %101 = vector.load %arg5[%c2_84, %c0_85, %c0_86] : memref<5x40x10xf32, #tpu.memory_space<vmem>>, vector<1x40x10xf32>
    %102 = vector.shape_cast %101 : vector<1x40x10xf32> to vector<40x10xf32>
    %cst_87 = arith.constant dense<0.000000e+00> : vector<1x10xf32>
    %103 = tpu.matmul %100, %102, %cst_87 {dimension_numbers = #tpu.dot_dimension_numbers<[1], [0], [0], [1], [0, 0, 1, 1], [], []>} : vector<1x40xf32>, vector<40x10xf32>, vector<1x10xf32> -> vector<1x10xf32>
    %104 = arith.addf %99, %103 : vector<1x10xf32>
    %105 = vector.extract_strided_slice %85 {offsets = [3, 0], sizes = [1, 40], strides = [1, 1]} : vector<5x40xf32> to vector<1x40xf32>
    %c3_88 = arith.constant 3 : index
    %c0_89 = arith.constant 0 : index
    %c0_90 = arith.constant 0 : index
    %106 = vector.load %arg5[%c3_88, %c0_89, %c0_90] : memref<5x40x10xf32, #tpu.memory_space<vmem>>, vector<1x40x10xf32>
    %107 = vector.shape_cast %106 : vector<1x40x10xf32> to vector<40x10xf32>
    %cst_91 = arith.constant dense<0.000000e+00> : vector<1x10xf32>
    %108 = tpu.matmul %105, %107, %cst_91 {dimension_numbers = #tpu.dot_dimension_numbers<[1], [0], [0], [1], [0, 0, 1, 1], [], []>} : vector<1x40xf32>, vector<40x10xf32>, vector<1x10xf32> -> vector<1x10xf32>
    %109 = arith.addf %104, %108 : vector<1x10xf32>
    %110 = vector.extract_strided_slice %85 {offsets = [4, 0], sizes = [1, 40], strides = [1, 1]} : vector<5x40xf32> to vector<1x40xf32>
    %c4_92 = arith.constant 4 : index
    %c0_93 = arith.constant 0 : index
    %c0_94 = arith.constant 0 : index
    %111 = vector.load %arg5[%c4_92, %c0_93, %c0_94] : memref<5x40x10xf32, #tpu.memory_space<vmem>>, vector<1x40x10xf32>
    %112 = vector.shape_cast %111 : vector<1x40x10xf32> to vector<40x10xf32>
    %cst_95 = arith.constant dense<0.000000e+00> : vector<1x10xf32>
    %113 = tpu.matmul %110, %112, %cst_95 {dimension_numbers = #tpu.dot_dimension_numbers<[1], [0], [0], [1], [0, 0, 1, 1], [], []>} : vector<1x40xf32>, vector<40x10xf32>, vector<1x10xf32> -> vector<1x10xf32>
    %114 = arith.addf %109, %113 : vector<1x10xf32>
    %c0_96 = arith.constant 0 : index
    %c0_97 = arith.constant 0 : index
    %115 = vector.load %arg7[%c0_96, %c0_97] : memref<2x10xf32, #tpu.memory_space<vmem>>, vector<1x10xf32>
    tpu.vector_store %arg7[%c0_96, %c0_97], %114 {strides = array<i32>} : memref<2x10xf32, #tpu.memory_space<vmem>>, vector<1x10xf32>,
    %cst_98 = arith.constant 0.000000e+00 : f32
    %116 = vector.broadcast %cst_98 : f32 to vector<9x144xf32>
    %c1_99 = arith.constant 1 : index
    %c0_100 = arith.constant 0 : index
    %c0_101 = arith.constant 0 : index
    %117 = vector.load %arg0[%c1_99, %c0_100, %c0_101] : memref<2x16x16xf32, #tpu.memory_space<vmem>>, vector<1x9x16xf32>
    %118 = vector.shape_cast %117 : vector<1x9x16xf32> to vector<9x16xf32>
    %c0_102 = arith.constant 0 : index
    %c0_103 = arith.constant 0 : index
    %c0_104 = arith.constant 0 : index
    %119 = vector.load %arg1[%c0_102, %c0_103, %c0_104] : memref<8x16x144xf32, #tpu.memory_space<vmem>>, vector<1x16x144xf32>
    %120 = vector.shape_cast %119 : vector<1x16x144xf32> to vector<16x144xf32>
    %cst_105 = arith.constant dense<0.000000e+00> : vector<9x144xf32>
    %121 = tpu.matmul %118, %120, %cst_105 {dimension_numbers = #tpu.dot_dimension_numbers<[1], [0], [0], [1], [0, 0, 1, 1], [], []>} : vector<9x16xf32>, vector<16x144xf32>, vector<9x144xf32> -> vector<9x144xf32>
    %122 = arith.addf %116, %121 : vector<9x144xf32>
    %c1_106 = arith.constant 1 : index
    %c1_107 = arith.constant 1 : index
    %c0_108 = arith.constant 0 : index
    %123 = vector.load %arg0[%c1_106, %c1_107, %c0_108] : memref<2x16x16xf32, #tpu.memory_space<vmem>>, vector<1x9x16xf32>
    %124 = vector.shape_cast %123 : vector<1x9x16xf32> to vector<9x16xf32>
    %c1_109 = arith.constant 1 : index
    %c0_110 = arith.constant 0 : index
    %c0_111 = arith.constant 0 : index
    %125 = vector.load %arg1[%c1_109, %c0_110, %c0_111] : memref<8x16x144xf32, #tpu.memory_space<vmem>>, vector<1x16x144xf32>
    %126 = vector.shape_cast %125 : vector<1x16x144xf32> to vector<16x144xf32>
    %cst_112 = arith.constant dense<0.000000e+00> : vector<9x144xf32>
    %127 = tpu.matmul %124, %126, %cst_112 {dimension_numbers = #tpu.dot_dimension_numbers<[1], [0], [0], [1], [0, 0, 1, 1], [], []>} : vector<9x16xf32>, vector<16x144xf32>, vector<9x144xf32> -> vector<9x144xf32>
    %128 = arith.addf %122, %127 : vector<9x144xf32>
    %c1_113 = arith.constant 1 : index
    %c2_114 = arith.constant 2 : index
    %c0_115 = arith.constant 0 : index
    %129 = vector.load %arg0[%c1_113, %c2_114, %c0_115] : memref<2x16x16xf32, #tpu.memory_space<vmem>>, vector<1x9x16xf32>
    %130 = vector.shape_cast %129 : vector<1x9x16xf32> to vector<9x16xf32>
    %c2_116 = arith.constant 2 : index
    %c0_117 = arith.constant 0 : index
    %c0_118 = arith.constant 0 : index
    %131 = vector.load %arg1[%c2_116, %c0_117, %c0_118] : memref<8x16x144xf32, #tpu.memory_space<vmem>>, vector<1x16x144xf32>
    %132 = vector.shape_cast %131 : vector<1x16x144xf32> to vector<16x144xf32>
    %cst_119 = arith.constant dense<0.000000e+00> : vector<9x144xf32>
    %133 = tpu.matmul %130, %132, %cst_119 {dimension_numbers = #tpu.dot_dimension_numbers<[1], [0], [0], [1], [0, 0, 1, 1], [], []>} : vector<9x16xf32>, vector<16x144xf32>, vector<9x144xf32> -> vector<9x144xf32>
    %134 = arith.addf %128, %133 : vector<9x144xf32>
    %c1_120 = arith.constant 1 : index
    %c3_121 = arith.constant 3 : index
    %c0_122 = arith.constant 0 : index
    %135 = vector.load %arg0[%c1_120, %c3_121, %c0_122] : memref<2x16x16xf32, #tpu.memory_space<vmem>>, vector<1x9x16xf32>
    %136 = vector.shape_cast %135 : vector<1x9x16xf32> to vector<9x16xf32>
    %c3_123 = arith.constant 3 : index
    %c0_124 = arith.constant 0 : index
    %c0_125 = arith.constant 0 : index
    %137 = vector.load %arg1[%c3_123, %c0_124, %c0_125] : memref<8x16x144xf32, #tpu.memory_space<vmem>>, vector<1x16x144xf32>
    %138 = vector.shape_cast %137 : vector<1x16x144xf32> to vector<16x144xf32>
    %cst_126 = arith.constant dense<0.000000e+00> : vector<9x144xf32>
    %139 = tpu.matmul %136, %138, %cst_126 {dimension_numbers = #tpu.dot_dimension_numbers<[1], [0], [0], [1], [0, 0, 1, 1], [], []>} : vector<9x16xf32>, vector<16x144xf32>, vector<9x144xf32> -> vector<9x144xf32>
    %140 = arith.addf %134, %139 : vector<9x144xf32>
    %c1_127 = arith.constant 1 : index
    %c4_128 = arith.constant 4 : index
    %c0_129 = arith.constant 0 : index
    %141 = vector.load %arg0[%c1_127, %c4_128, %c0_129] : memref<2x16x16xf32, #tpu.memory_space<vmem>>, vector<1x9x16xf32>
    %142 = vector.shape_cast %141 : vector<1x9x16xf32> to vector<9x16xf32>
    %c4_130 = arith.constant 4 : index
    %c0_131 = arith.constant 0 : index
    %c0_132 = arith.constant 0 : index
    %143 = vector.load %arg1[%c4_130, %c0_131, %c0_132] : memref<8x16x144xf32, #tpu.memory_space<vmem>>, vector<1x16x144xf32>
    %144 = vector.shape_cast %143 : vector<1x16x144xf32> to vector<16x144xf32>
    %cst_133 = arith.constant dense<0.000000e+00> : vector<9x144xf32>
    %145 = tpu.matmul %142, %144, %cst_133 {dimension_numbers = #tpu.dot_dimension_numbers<[1], [0], [0], [1], [0, 0, 1, 1], [], []>} : vector<9x16xf32>, vector<16x144xf32>, vector<9x144xf32> -> vector<9x144xf32>
    %146 = arith.addf %140, %145 : vector<9x144xf32>
    %c1_134 = arith.constant 1 : index
    %c5_135 = arith.constant 5 : index
    %c0_136 = arith.constant 0 : index
    %147 = vector.load %arg0[%c1_134, %c5_135, %c0_136] : memref<2x16x16xf32, #tpu.memory_space<vmem>>, vector<1x9x16xf32>
    %148 = vector.shape_cast %147 : vector<1x9x16xf32> to vector<9x16xf32>
    %c5_137 = arith.constant 5 : index
    %c0_138 = arith.constant 0 : index
    %c0_139 = arith.constant 0 : index
    %149 = vector.load %arg1[%c5_137, %c0_138, %c0_139] : memref<8x16x144xf32, #tpu.memory_space<vmem>>, vector<1x16x144xf32>
    %150 = vector.shape_cast %149 : vector<1x16x144xf32> to vector<16x144xf32>
    %cst_140 = arith.constant dense<0.000000e+00> : vector<9x144xf32>
    %151 = tpu.matmul %148, %150, %cst_140 {dimension_numbers = #tpu.dot_dimension_numbers<[1], [0], [0], [1], [0, 0, 1, 1], [], []>} : vector<9x16xf32>, vector<16x144xf32>, vector<9x144xf32> -> vector<9x144xf32>
    %152 = arith.addf %146, %151 : vector<9x144xf32>
    %c1_141 = arith.constant 1 : index
    %c6_142 = arith.constant 6 : index
    %c0_143 = arith.constant 0 : index
    %153 = vector.load %arg0[%c1_141, %c6_142, %c0_143] : memref<2x16x16xf32, #tpu.memory_space<vmem>>, vector<1x9x16xf32>
    %154 = vector.shape_cast %153 : vector<1x9x16xf32> to vector<9x16xf32>
    %c6_144 = arith.constant 6 : index
    %c0_145 = arith.constant 0 : index
    %c0_146 = arith.constant 0 : index
    %155 = vector.load %arg1[%c6_144, %c0_145, %c0_146] : memref<8x16x144xf32, #tpu.memory_space<vmem>>, vector<1x16x144xf32>
    %156 = vector.shape_cast %155 : vector<1x16x144xf32> to vector<16x144xf32>
    %cst_147 = arith.constant dense<0.000000e+00> : vector<9x144xf32>
    %157 = tpu.matmul %154, %156, %cst_147 {dimension_numbers = #tpu.dot_dimension_numbers<[1], [0], [0], [1], [0, 0, 1, 1], [], []>} : vector<9x16xf32>, vector<16x144xf32>, vector<9x144xf32> -> vector<9x144xf32>
    %158 = arith.addf %152, %157 : vector<9x144xf32>
    %c1_148 = arith.constant 1 : index
    %c7_149 = arith.constant 7 : index
    %c0_150 = arith.constant 0 : index
    %159 = vector.load %arg0[%c1_148, %c7_149, %c0_150] : memref<2x16x16xf32, #tpu.memory_space<vmem>>, vector<1x9x16xf32>
    %160 = vector.shape_cast %159 : vector<1x9x16xf32> to vector<9x16xf32>
    %c7_151 = arith.constant 7 : index
    %c0_152 = arith.constant 0 : index
    %c0_153 = arith.constant 0 : index
    %161 = vector.load %arg1[%c7_151, %c0_152, %c0_153] : memref<8x16x144xf32, #tpu.memory_space<vmem>>, vector<1x16x144xf32>
    %162 = vector.shape_cast %161 : vector<1x16x144xf32> to vector<16x144xf32>
    %cst_154 = arith.constant dense<0.000000e+00> : vector<9x144xf32>
    %163 = tpu.matmul %160, %162, %cst_154 {dimension_numbers = #tpu.dot_dimension_numbers<[1], [0], [0], [1], [0, 0, 1, 1], [], []>} : vector<9x16xf32>, vector<16x144xf32>, vector<9x144xf32> -> vector<9x144xf32>
    %164 = arith.addf %158, %163 : vector<9x144xf32>
    %c0_155 = arith.constant 0 : index
    %c0_156 = arith.constant 0 : index
    %165 = vector.load %arg2[%c0_155, %c0_156] : memref<1x144xf32, #tpu.memory_space<vmem>>, vector<1x144xf32>
    %166 = vector.broadcast %165 : vector<1x144xf32> to vector<9x144xf32>
    %167 = arith.addf %164, %166 : vector<9x144xf32>
    %cst_157 = arith.constant 0.000000e+00 : f32
    %168 = vector.broadcast %cst_157 : f32 to vector<9x144xf32>
    %169 = arith.maximumf %167, %168 : vector<9x144xf32>
    %cst_158 = arith.constant 0.000000e+00 : f32
    %170 = vector.broadcast %cst_158 : f32 to vector<6x48xf32>
    %171 = vector.extract_strided_slice %169 {offsets = [0, 0], sizes = [6, 144], strides = [1, 1]} : vector<9x144xf32> to vector<6x144xf32>
    %c0_159 = arith.constant 0 : index
    %c0_160 = arith.constant 0 : index
    %c0_161 = arith.constant 0 : index
    %172 = vector.load %arg3[%c0_159, %c0_160, %c0_161] : memref<4x144x48xf32, #tpu.memory_space<vmem>>, vector<1x144x48xf32>
    %173 = vector.shape_cast %172 : vector<1x144x48xf32> to vector<144x48xf32>
    %cst_162 = arith.constant dense<0.000000e+00> : vector<6x48xf32>
    %174 = tpu.matmul %171, %173, %cst_162 {dimension_numbers = #tpu.dot_dimension_numbers<[1], [0], [0], [1], [0, 0, 1, 1], [], []>} : vector<6x144xf32>, vector<144x48xf32>, vector<6x48xf32> -> vector<6x48xf32>
    %175 = arith.addf %170, %174 : vector<6x48xf32>
    %176 = vector.extract_strided_slice %169 {offsets = [1, 0], sizes = [6, 144], strides = [1, 1]} : vector<9x144xf32> to vector<6x144xf32>
    %c1_163 = arith.constant 1 : index
    %c0_164 = arith.constant 0 : index
    %c0_165 = arith.constant 0 : index
    %177 = vector.load %arg3[%c1_163, %c0_164, %c0_165] : memref<4x144x48xf32, #tpu.memory_space<vmem>>, vector<1x144x48xf32>
    %178 = vector.shape_cast %177 : vector<1x144x48xf32> to vector<144x48xf32>
    %cst_166 = arith.constant dense<0.000000e+00> : vector<6x48xf32>
    %179 = tpu.matmul %176, %178, %cst_166 {dimension_numbers = #tpu.dot_dimension_numbers<[1], [0], [0], [1], [0, 0, 1, 1], [], []>} : vector<6x144xf32>, vector<144x48xf32>, vector<6x48xf32> -> vector<6x48xf32>
    %180 = arith.addf %175, %179 : vector<6x48xf32>
    %181 = vector.extract_strided_slice %169 {offsets = [2, 0], sizes = [6, 144], strides = [1, 1]} : vector<9x144xf32> to vector<6x144xf32>
    %c2_167 = arith.constant 2 : index
    %c0_168 = arith.constant 0 : index
    %c0_169 = arith.constant 0 : index
    %182 = vector.load %arg3[%c2_167, %c0_168, %c0_169] : memref<4x144x48xf32, #tpu.memory_space<vmem>>, vector<1x144x48xf32>
    %183 = vector.shape_cast %182 : vector<1x144x48xf32> to vector<144x48xf32>
    %cst_170 = arith.constant dense<0.000000e+00> : vector<6x48xf32>
    %184 = tpu.matmul %181, %183, %cst_170 {dimension_numbers = #tpu.dot_dimension_numbers<[1], [0], [0], [1], [0, 0, 1, 1], [], []>} : vector<6x144xf32>, vector<144x48xf32>, vector<6x48xf32> -> vector<6x48xf32>
    %185 = arith.addf %180, %184 : vector<6x48xf32>
    %186 = vector.extract_strided_slice %169 {offsets = [3, 0], sizes = [6, 144], strides = [1, 1]} : vector<9x144xf32> to vector<6x144xf32>
    %c3_171 = arith.constant 3 : index
    %c0_172 = arith.constant 0 : index
    %c0_173 = arith.constant 0 : index
    %187 = vector.load %arg3[%c3_171, %c0_172, %c0_173] : memref<4x144x48xf32, #tpu.memory_space<vmem>>, vector<1x144x48xf32>
    %188 = vector.shape_cast %187 : vector<1x144x48xf32> to vector<144x48xf32>
    %cst_174 = arith.constant dense<0.000000e+00> : vector<6x48xf32>
    %189 = tpu.matmul %186, %188, %cst_174 {dimension_numbers = #tpu.dot_dimension_numbers<[1], [0], [0], [1], [0, 0, 1, 1], [], []>} : vector<6x144xf32>, vector<144x48xf32>, vector<6x48xf32> -> vector<6x48xf32>
    %190 = arith.addf %185, %189 : vector<6x48xf32>
    %c0_175 = arith.constant 0 : index
    %c0_176 = arith.constant 0 : index
    %191 = vector.load %arg4[%c0_175, %c0_176] : memref<1x48xf32, #tpu.memory_space<vmem>>, vector<1x48xf32>
    %192 = vector.broadcast %191 : vector<1x48xf32> to vector<6x48xf32>
    %193 = arith.addf %190, %192 : vector<6x48xf32>
    %cst_177 = arith.constant 0.000000e+00 : f32
    %194 = vector.broadcast %cst_177 : f32 to vector<6x48xf32>
    %195 = arith.maximumf %193, %194 : vector<6x48xf32>
    %196 = vector.extract_strided_slice %195 {offsets = [0, 0], sizes = [5, 48], strides = [1, 1]} : vector<6x48xf32> to vector<5x48xf32>
    %197 = vector.extract_strided_slice %195 {offsets = [1, 0], sizes = [5, 48], strides = [1, 1]} : vector<6x48xf32> to vector<5x48xf32>
    %198 = arith.maximumf %196, %197 : vector<5x48xf32>
    %199 = vector.extract_strided_slice %198 {offsets = [0, 0], sizes = [5, 40], strides = [1, 1]} : vector<5x48xf32> to vector<5x40xf32>
    %200 = vector.extract_strided_slice %198 {offsets = [0, 8], sizes = [5, 40], strides = [1, 1]} : vector<5x48xf32> to vector<5x40xf32>
    %201 = arith.maximumf %199, %200 : vector<5x40xf32>
    %c1_178 = arith.constant 1 : index
    %c0_179 = arith.constant 0 : index
    %c0_180 = arith.constant 0 : index
    %202 = vector.load %arg8[%c1_178, %c0_179, %c0_180] : memref<2x5x40xf32, #tpu.memory_space<vmem>>, vector<1x5x40xf32>
    %203 = vector.shape_cast %202 : vector<1x5x40xf32> to vector<5x40xf32>
    %204 = vector.shape_cast %201 : vector<5x40xf32> to vector<1x5x40xf32>
    tpu.vector_store %arg8[%c1_178, %c0_179, %c0_180], %204 {strides = array<i32>} : memref<2x5x40xf32, #tpu.memory_space<vmem>>, vector<1x5x40xf32>,
    %c0_181 = arith.constant 0 : index
    %c0_182 = arith.constant 0 : index
    %205 = vector.load %arg6[%c0_181, %c0_182] : memref<1x10xf32, #tpu.memory_space<vmem>>, vector<1x10xf32>
    %206 = vector.extract_strided_slice %201 {offsets = [0, 0], sizes = [1, 40], strides = [1, 1]} : vector<5x40xf32> to vector<1x40xf32>
    %c0_183 = arith.constant 0 : index
    %c0_184 = arith.constant 0 : index
    %c0_185 = arith.constant 0 : index
    %207 = vector.load %arg5[%c0_183, %c0_184, %c0_185] : memref<5x40x10xf32, #tpu.memory_space<vmem>>, vector<1x40x10xf32>
    %208 = vector.shape_cast %207 : vector<1x40x10xf32> to vector<40x10xf32>
    %cst_186 = arith.constant dense<0.000000e+00> : vector<1x10xf32>
    %209 = tpu.matmul %206, %208, %cst_186 {dimension_numbers = #tpu.dot_dimension_numbers<[1], [0], [0], [1], [0, 0, 1, 1], [], []>} : vector<1x40xf32>, vector<40x10xf32>, vector<1x10xf32> -> vector<1x10xf32>
    %210 = arith.addf %205, %209 : vector<1x10xf32>
    %211 = vector.extract_strided_slice %201 {offsets = [1, 0], sizes = [1, 40], strides = [1, 1]} : vector<5x40xf32> to vector<1x40xf32>
    %c1_187 = arith.constant 1 : index
    %c0_188 = arith.constant 0 : index
    %c0_189 = arith.constant 0 : index
    %212 = vector.load %arg5[%c1_187, %c0_188, %c0_189] : memref<5x40x10xf32, #tpu.memory_space<vmem>>, vector<1x40x10xf32>
    %213 = vector.shape_cast %212 : vector<1x40x10xf32> to vector<40x10xf32>
    %cst_190 = arith.constant dense<0.000000e+00> : vector<1x10xf32>
    %214 = tpu.matmul %211, %213, %cst_190 {dimension_numbers = #tpu.dot_dimension_numbers<[1], [0], [0], [1], [0, 0, 1, 1], [], []>} : vector<1x40xf32>, vector<40x10xf32>, vector<1x10xf32> -> vector<1x10xf32>
    %215 = arith.addf %210, %214 : vector<1x10xf32>
    %216 = vector.extract_strided_slice %201 {offsets = [2, 0], sizes = [1, 40], strides = [1, 1]} : vector<5x40xf32> to vector<1x40xf32>
    %c2_191 = arith.constant 2 : index
    %c0_192 = arith.constant 0 : index
    %c0_193 = arith.constant 0 : index
    %217 = vector.load %arg5[%c2_191, %c0_192, %c0_193] : memref<5x40x10xf32, #tpu.memory_space<vmem>>, vector<1x40x10xf32>
    %218 = vector.shape_cast %217 : vector<1x40x10xf32> to vector<40x10xf32>
    %cst_194 = arith.constant dense<0.000000e+00> : vector<1x10xf32>
    %219 = tpu.matmul %216, %218, %cst_194 {dimension_numbers = #tpu.dot_dimension_numbers<[1], [0], [0], [1], [0, 0, 1, 1], [], []>} : vector<1x40xf32>, vector<40x10xf32>, vector<1x10xf32> -> vector<1x10xf32>
    %220 = arith.addf %215, %219 : vector<1x10xf32>
    %221 = vector.extract_strided_slice %201 {offsets = [3, 0], sizes = [1, 40], strides = [1, 1]} : vector<5x40xf32> to vector<1x40xf32>
    %c3_195 = arith.constant 3 : index
    %c0_196 = arith.constant 0 : index
    %c0_197 = arith.constant 0 : index
    %222 = vector.load %arg5[%c3_195, %c0_196, %c0_197] : memref<5x40x10xf32, #tpu.memory_space<vmem>>, vector<1x40x10xf32>
    %223 = vector.shape_cast %222 : vector<1x40x10xf32> to vector<40x10xf32>
    %cst_198 = arith.constant dense<0.000000e+00> : vector<1x10xf32>
    %224 = tpu.matmul %221, %223, %cst_198 {dimension_numbers = #tpu.dot_dimension_numbers<[1], [0], [0], [1], [0, 0, 1, 1], [], []>} : vector<1x40xf32>, vector<40x10xf32>, vector<1x10xf32> -> vector<1x10xf32>
    %225 = arith.addf %220, %224 : vector<1x10xf32>
    %226 = vector.extract_strided_slice %201 {offsets = [4, 0], sizes = [1, 40], strides = [1, 1]} : vector<5x40xf32> to vector<1x40xf32>
    %c4_199 = arith.constant 4 : index
    %c0_200 = arith.constant 0 : index
    %c0_201 = arith.constant 0 : index
    %227 = vector.load %arg5[%c4_199, %c0_200, %c0_201] : memref<5x40x10xf32, #tpu.memory_space<vmem>>, vector<1x40x10xf32>
    %228 = vector.shape_cast %227 : vector<1x40x10xf32> to vector<40x10xf32>
    %cst_202 = arith.constant dense<0.000000e+00> : vector<1x10xf32>
    %229 = tpu.matmul %226, %228, %cst_202 {dimension_numbers = #tpu.dot_dimension_numbers<[1], [0], [0], [1], [0, 0, 1, 1], [], []>} : vector<1x40xf32>, vector<40x10xf32>, vector<1x10xf32> -> vector<1x10xf32>
    %230 = arith.addf %225, %229 : vector<1x10xf32>
    %c1_203 = arith.constant 1 : index
    %c0_204 = arith.constant 0 : index
    %231 = vector.load %arg7[%c1_203, %c0_204] : memref<2x10xf32, #tpu.memory_space<vmem>>, vector<1x10xf32>
    tpu.vector_store %arg7[%c1_203, %c0_204], %230 {strides = array<i32>} : memref<2x10xf32, #tpu.memory_space<vmem>>, vector<1x10xf32>,
    return
  }
}

</mosaic_0001>

<llo_original>
// kernel: convnet_forward.1
$region0: #{convnet_forward.1}
  #allocation0 [shape = 'u32[]', space=smem, size = 0x4, offset = 0x4, fixed_abs, tag = 'smem constant byte address 0x4 - core index']
  #allocation1 [shape = 'u32[144,128]{1,0:T(1,128)}', space=vmem, size = 0x12000, scoped, tag = 'internal scratch']
  %s0 = inlined_call_operand.vmem [shape: f32[2,16,16], index: 0, kind: input, shape index: {}]
  %s1 = inlined_call_operand.vmem [shape: f32[8,16,144], index: 1, kind: input, shape index: {}]
  %s2 = inlined_call_operand.vmem [shape: f32[1,144], index: 2, kind: input, shape index: {}]
  %s3 = inlined_call_operand.vmem [shape: f32[4,144,48], index: 3, kind: input, shape index: {}]
  %s4 = inlined_call_operand.vmem [shape: f32[1,48], index: 4, kind: input, shape index: {}]
  %s5 = inlined_call_operand.vmem [shape: f32[5,40,10], index: 5, kind: input, shape index: {}]
  %s6 = inlined_call_operand.vmem [shape: f32[1,10], index: 6, kind: input, shape index: {}]
  %s7 = inlined_call_operand.hbm [shape: f32[2,10], index: 7, kind: output, shape index: {0}]
  %s8 = inlined_call_operand.vmem [shape: f32[2,5,40], index: 8, kind: output, shape index: {1}]
  %9 = xla_tuple %s7, %s8
  %s10 = sld [smem:[#allocation0]]
  $region46: #{convnet_forward.1} parent=0
    _
  %s12 = ssub.s32 1, %s10
  %s13 = scalar_select 0, %s12, %s10
  $region1: #{convnet_forward.1} parent=0
    #allocation2 [shape = 'u8[1024]{0}', space=vmem, size = 0x400, scoped, tag = 'output window, operand 0, single buffered']
    #allocation3 [shape = 's32[1]{0}', space=sflag, size = 0x4, scoped, tag = 'scoped memory for convnet_forward.1']
    %14 = vsyncpa [#allocation3], 0
    // Predicated region
    $region2: #{convnet_forward.1} parent=1 // pred_check
      _
    $region3: #{convnet_forward.1} parent=1 // pred_check_branch
      %16 = sbr.rel (0) target = $region5
    $region4: #{convnet_forward.1} parent=1 // pred_region
      _
    $region5: #{convnet_forward.1} parent=1 // pred_fallthru
      _
    // Predicated region
    $region6: #{convnet_forward.1} parent=1 // pred_check
      _
    $region7: #{convnet_forward.1} parent=1 // pred_check_branch
      %18 = sbr.rel (0) target = $region9
    $region8: #{convnet_forward.1} parent=1 // pred_region
      _
    $region9: #{convnet_forward.1} parent=1 // pred_fallthru
      _
    // Predicated region
    $region10: #{convnet_forward.1} parent=1 // pred_check
      _
    $region11: #{convnet_forward.1} parent=1 // pred_check_branch
      %20 = sbr.rel (0) target = $region13
    $region12: #{convnet_forward.1} parent=1 // pred_region
      _
    $region13: #{convnet_forward.1} parent=1 // pred_fallthru
      _
    // Predicated region
    $region14: #{convnet_forward.1} parent=1 // pred_check
      _
    $region15: #{convnet_forward.1} parent=1 // pred_check_branch
      %22 = sbr.rel (0) target = $region17
    $region16: #{convnet_forward.1} parent=1 // pred_region
      _
    $region17: #{convnet_forward.1} parent=1 // pred_fallthru
      _
    // Predicated region
    $region18: #{convnet_forward.1} parent=1 // pred_check
      _
    $region19: #{convnet_forward.1} parent=1 // pred_check_branch
      %24 = sbr.rel (0) target = $region21
    $region20: #{convnet_forward.1} parent=1 // pred_region
      _
    $region21: #{convnet_forward.1} parent=1 // pred_fallthru
      _
    // Predicated region
    $region22: #{convnet_forward.1} parent=1 // pred_check
      _
    $region23: #{convnet_forward.1} parent=1 // pred_check_branch
      %26 = sbr.rel (0) target = $region25
    $region24: #{convnet_forward.1} parent=1 // pred_region
      _
    $region25: #{convnet_forward.1} parent=1 // pred_fallthru
      _
    // Predicated region
    $region26: #{convnet_forward.1} parent=1 // pred_check
      _
    $region27: #{convnet_forward.1} parent=1 // pred_check_branch
      %28 = sbr.rel (0) target = $region29
    $region28: #{convnet_forward.1} parent=1 // pred_region
      _
    $region29: #{convnet_forward.1} parent=1 // pred_fallthru
      _
    %v29 = vld [vmem:[%s0] sm:$0xff]
    %v30 = vld [vmem:[%s0 + $0x8] sm:$0x1]
    %v31 = vld [vmem:[%s1] sm:$0xff]
    %v32 = vld [vmem:[%s1 + $0x8] sm:$0xff]
    %v33 = vld [vmem:[%s1 + $0x10] sm:$0xff]
    %v34 = vld [vmem:[%s1 + $0x18] sm:$0xff]
    %v35 = vld [vmem:[%s0 + $0x1] sm:$0xff]
    %v36 = vld [vmem:[%s0 + $0x9] sm:$0x1]
    %s37 = scalar_lea.vmem %s1, 32
    %v38 = vld [vmem:[%s37] sm:$0xff]
    %v39 = vld [vmem:[%s37 + $0x8] sm:$0xff]
    %v40 = vld [vmem:[%s37 + $0x10] sm:$0xff]
    %v41 = vld [vmem:[%s37 + $0x18] sm:$0xff]
    %vm42 = vcmask 130048
    %v44 = vsel %vm42, %v35, 0
    %v47 = vsel %vm42, %v36, 0
    %49 = vmatprep.subr.mxu0 %v39
    %50 = vmatpush1.msra.mxu0 %v38
    %51 = vmatprep.subr.mxu0 %v41
    %52 = vmatpush1.msra.mxu0 %v40
    %53 = vmatprep.subr.mxu0 0.0
    %54 = vmatpush1.msra.mxu0 0.0
    %55 = vmatprep.subr.mxu0 0.0
    %56 = vmatpush1.msra.mxu0 0.0
    %57 = vmatprep.subr.mxu0 0.0
    %58 = vmatpush1.msra.mxu0 0.0
    %59 = vmatprep.subr.mxu0 0.0
    %60 = vmatpush1.msra.mxu0 0.0
    %61 = vmatprep.subr.mxu0 0.0
    %62 = vmatpush1.msra.mxu0 0.0
    %63 = vmatprep.subr.mxu0 0.0
    %64 = vmatpush1.msra.mxu0 0.0
    %65 = vmatprep.subr.mxu0 0.0
    %66 = vmatpush1.msra.mxu0 0.0
    %67 = vmatprep.subr.mxu0 0.0
    %68 = vmatpush1.msra.mxu0 0.0
    %69 = vmatprep.subr.mxu0 0.0
    %70 = vmatpush1.msra.mxu0 0.0
    %71 = vmatprep.subr.mxu0 0.0
    %72 = vmatpush1.msra.mxu0 0.0
    %73 = vmatprep.subr.mxu0 0.0
    %74 = vmatpush1.msra.mxu0 0.0
    %75 = vmatprep.subr.mxu0 0.0
    %76 = vmatpush1.msra.mxu0 0.0
    %77 = vmatprep.subr.mxu0 0.0
    %78 = vmatpush1.msra.mxu0 0.0
    %79 = vmatprep.subr.mxu0 0.0
    %80 = vmatpush1.msra.mxu0 0.0
    %81 = vmatprep.subr.mxu0 0.0
    %82 = vmatpush1.msra.mxu0 0.0
    %83 = vmatprep.subr.mxu0 0.0
    %84 = vmatpush1.msra.mxu0 0.0
    %85 = vmatprep.subr.mxu0 0.0
    %86 = vmatpush1.msra.mxu0 0.0
    %87 = vmatprep.subr.mxu0 0.0
    %88 = vmatpush1.msra.mxu0 0.0
    %89 = vmatprep.subr.mxu0 0.0
    %90 = vmatpush1.msra.mxu0 0.0
    %91 = vmatprep.subr.mxu0 0.0
    %92 = vmatpush1.msra.mxu0 0.0
    %93 = vmatprep.subr.mxu0 0.0
    %94 = vmatpush1.msra.mxu0 0.0
    %95 = vmatprep.subr.mxu0 0.0
    %96 = vmatpush1.msra.mxu0 0.0
    %97 = vmatprep.subr.mxu0 0.0
    %98 = vmatpush1.msra.mxu0 0.0
    %99 = vmatprep.subr.mxu0 0.0
    %100 = vmatpush1.msra.mxu0 0.0
    %101 = vmatprep.subr.mxu0 0.0
    %102 = vmatpush1.msra.mxu0 0.0
    %103 = vmatprep.subr.mxu0 0.0
    %104 = vmatpush1.msra.mxu0 0.0
    %105 = vmatprep.subr.mxu0 0.0
    %106 = vmatpush1.msra.mxu0 0.0
    %107 = vmatprep.subr.mxu0 0.0
    %108 = vmatpush1.msra.mxu0 0.0
    %109 = vmatprep.subr.mxu0 0.0
    %110 = vmatpush1.msra.mxu0 0.0
    %111 = vmatprep.subr.mxu0 0.0
    %112 = vmatpush1.msra.mxu0 0.0
    %113 = vmatprep.mubr.f32.mxu0 0.0
    %114 = vmatmul.mubr.f32.gmra.mrb[0].mxu0 %v44
    %v115 = vpop.f32.mrb[0].mxu0
    %v116 = vadd.f32 0.0, %v115
    %v117 = vpop.f32.mrb[0].mxu0
    %v118 = vadd.f32 0.0, %v117
    %119 = vmatprep.mubr.f32.mxu0 0.0
    %120 = vmatmul.mubr.f32.gmra.mrb[0].mxu0 %v47
    %v121 = vpop.f32.mrb[0].mxu0
    %v122 = vadd.f32 0.0, %v121
    %v123 = vpop.f32.mrb[0].mxu0
    %v124 = vadd.f32 0.0, %v123
    %125 = vdwg.mxu0
    %v127 = vsel %vm42, %v29, 0
    %v130 = vsel %vm42, %v30, 0
    %132 = vmatprep.subr.mxu0 %v32
    %133 = vmatpush1.msra.mxu0 %v31
    %134 = vmatprep.subr.mxu0 %v34
    %135 = vmatpush1.msra.mxu0 %v33
    %136 = vmatprep.subr.mxu0 0.0
    %137 = vmatpush1.msra.mxu0 0.0
    %138 = vmatprep.subr.mxu0 0.0
    %139 = vmatpush1.msra.mxu0 0.0
    %140 = vmatprep.subr.mxu0 0.0
    %141 = vmatpush1.msra.mxu0 0.0
    %142 = vmatprep.subr.mxu0 0.0
    %143 = vmatpush1.msra.mxu0 0.0
    %144 = vmatprep.subr.mxu0 0.0
    %145 = vmatpush1.msra.mxu0 0.0
    %146 = vmatprep.subr.mxu0 0.0
    %147 = vmatpush1.msra.mxu0 0.0
    %148 = vmatprep.subr.mxu0 0.0
    %149 = vmatpush1.msra.mxu0 0.0
    %150 = vmatprep.subr.mxu0 0.0
    %151 = vmatpush1.msra.mxu0 0.0
    %152 = vmatprep.subr.mxu0 0.0
    %153 = vmatpush1.msra.mxu0 0.0
    %154 = vmatprep.subr.mxu0 0.0
    %155 = vmatpush1.msra.mxu0 0.0
    %156 = vmatprep.subr.mxu0 0.0
    %157 = vmatpush1.msra.mxu0 0.0
    %158 = vmatprep.subr.mxu0 0.0
    %159 = vmatpush1.msra.mxu0 0.0
    %160 = vmatprep.subr.mxu0 0.0
    %161 = vmatpush1.msra.mxu0 0.0
    %162 = vmatprep.subr.mxu0 0.0
    %163 = vmatpush1.msra.mxu0 0.0
    %164 = vmatprep.subr.mxu0 0.0
    %165 = vmatpush1.msra.mxu0 0.0
    %166 = vmatprep.subr.mxu0 0.0
    %167 = vmatpush1.msra.mxu0 0.0
    %168 = vmatprep.subr.mxu0 0.0
    %169 = vmatpush1.msra.mxu0 0.0
    %170 = vmatprep.subr.mxu0 0.0
    %171 = vmatpush1.msra.mxu0 0.0
    %172 = vmatprep.subr.mxu0 0.0
    %173 = vmatpush1.msra.mxu0 0.0
    %174 = vmatprep.subr.mxu0 0.0
    %175 = vmatpush1.msra.mxu0 0.0
    %176 = vmatprep.subr.mxu0 0.0
    %177 = vmatpush1.msra.mxu0 0.0
    %178 = vmatprep.subr.mxu0 0.0
    %179 = vmatpush1.msra.mxu0 0.0
    %180 = vmatprep.subr.mxu0 0.0
    %181 = vmatpush1.msra.mxu0 0.0
    %182 = vmatprep.subr.mxu0 0.0
    %183 = vmatpush1.msra.mxu0 0.0
    %184 = vmatprep.subr.mxu0 0.0
    %185 = vmatpush1.msra.mxu0 0.0
    %186 = vmatprep.subr.mxu0 0.0
    %187 = vmatpush1.msra.mxu0 0.0
    %188 = vmatprep.subr.mxu0 0.0
    %189 = vmatpush1.msra.mxu0 0.0
    %190 = vmatprep.subr.mxu0 0.0
    %191 = vmatpush1.msra.mxu0 0.0
    %192 = vmatprep.subr.mxu0 0.0
    %193 = vmatpush1.msra.mxu0 0.0
    %194 = vmatprep.subr.mxu0 0.0
    %195 = vmatpush1.msra.mxu0 0.0
    %196 = vmatprep.mubr.f32.mxu0 0.0
    %197 = vmatmul.mubr.f32.gmra.mrb[0].mxu0 %v127
    %v198 = vpop.f32.mrb[0].mxu0
    %v199 = vadd.f32 %v116, %v198
    %v200 = vpop.f32.mrb[0].mxu0
    %v201 = vadd.f32 %v118, %v200
    %202 = vmatprep.mubr.f32.mxu0 0.0
    %203 = vmatmul.mubr.f32.gmra.mrb[0].mxu0 %v130
    %v204 = vpop.f32.mrb[0].mxu0
    %v205 = vadd.f32 %v122, %v204
    %v206 = vpop.f32.mrb[0].mxu0
    %v207 = vadd.f32 %v124, %v206
    %208 = vdwg.mxu0
    %v209 = vld [vmem:[%s0 + $0x2] sm:$0xff]
    %v210 = vld [vmem:[%s0 + $0xa] sm:$0x1]
    %s211 = scalar_lea.vmem %s1, 64
    %v212 = vld [vmem:[%s211] sm:$0xff]
    %v213 = vld [vmem:[%s211 + $0x8] sm:$0xff]
    %v214 = vld [vmem:[%s211 + $0x10] sm:$0xff]
    %v215 = vld [vmem:[%s211 + $0x18] sm:$0xff]
    %v217 = vsel %vm42, %v209, 0
    %v220 = vsel %vm42, %v210, 0
    %222 = vmatprep.subr.mxu0 %v213
    %223 = vmatpush1.msra.mxu0 %v212
    %224 = vmatprep.subr.mxu0 %v215
    %225 = vmatpush1.msra.mxu0 %v214
    %226 = vmatprep.subr.mxu0 0.0
    %227 = vmatpush1.msra.mxu0 0.0
    %228 = vmatprep.subr.mxu0 0.0
    %229 = vmatpush1.msra.mxu0 0.0
    %230 = vmatprep.subr.mxu0 0.0
    %231 = vmatpush1.msra.mxu0 0.0
    %232 = vmatprep.subr.mxu0 0.0
    %233 = vmatpush1.msra.mxu0 0.0
    %234 = vmatprep.subr.mxu0 0.0
    %235 = vmatpush1.msra.mxu0 0.0
    %236 = vmatprep.subr.mxu0 0.0
    %237 = vmatpush1.msra.mxu0 0.0
    %238 = vmatprep.subr.mxu0 0.0
    %239 = vmatpush1.msra.mxu0 0.0
    %240 = vmatprep.subr.mxu0 0.0
    %241 = vmatpush1.msra.mxu0 0.0
    %242 = vmatprep.subr.mxu0 0.0
    %243 = vmatpush1.msra.mxu0 0.0
    %244 = vmatprep.subr.mxu0 0.0
    %245 = vmatpush1.msra.mxu0 0.0
    %246 = vmatprep.subr.mxu0 0.0
    %247 = vmatpush1.msra.mxu0 0.0
    %248 = vmatprep.subr.mxu0 0.0
    %249 = vmatpush1.msra.mxu0 0.0
    %250 = vmatprep.subr.mxu0 0.0
    %251 = vmatpush1.msra.mxu0 0.0
    %252 = vmatprep.subr.mxu0 0.0
    %253 = vmatpush1.msra.mxu0 0.0
    %254 = vmatprep.subr.mxu0 0.0
    %255 = vmatpush1.msra.mxu0 0.0
    %256 = vmatprep.subr.mxu0 0.0
    %257 = vmatpush1.msra.mxu0 0.0
    %258 = vmatprep.subr.mxu0 0.0
    %259 = vmatpush1.msra.mxu0 0.0
    %260 = vmatprep.subr.mxu0 0.0
    %261 = vmatpush1.msra.mxu0 0.0
    %262 = vmatprep.subr.mxu0 0.0
    %263 = vmatpush1.msra.mxu0 0.0
    %264 = vmatprep.subr.mxu0 0.0
    %265 = vmatpush1.msra.mxu0 0.0
    %266 = vmatprep.subr.mxu0 0.0
    %267 = vmatpush1.msra.mxu0 0.0
    %268 = vmatprep.subr.mxu0 0.0
    %269 = vmatpush1.msra.mxu0 0.0
    %270 = vmatprep.subr.mxu0 0.0
    %271 = vmatpush1.msra.mxu0 0.0
    %272 = vmatprep.subr.mxu0 0.0
    %273 = vmatpush1.msra.mxu0 0.0
    %274 = vmatprep.subr.mxu0 0.0
    %275 = vmatpush1.msra.mxu0 0.0
    %276 = vmatprep.subr.mxu0 0.0
    %277 = vmatpush1.msra.mxu0 0.0
    %278 = vmatprep.subr.mxu0 0.0
    %279 = vmatpush1.msra.mxu0 0.0
    %280 = vmatprep.subr.mxu0 0.0
    %281 = vmatpush1.msra.mxu0 0.0
    %282 = vmatprep.subr.mxu0 0.0
    %283 = vmatpush1.msra.mxu0 0.0
    %284 = vmatprep.subr.mxu0 0.0
    %285 = vmatpush1.msra.mxu0 0.0
    %286 = vmatprep.mubr.f32.mxu0 0.0
    %287 = vmatmul.mubr.f32.gmra.mrb[0].mxu0 %v217
    %v288 = vpop.f32.mrb[0].mxu0
    %v289 = vadd.f32 0.0, %v288
    %v290 = vpop.f32.mrb[0].mxu0
    %v291 = vadd.f32 0.0, %v290
    %292 = vmatprep.mubr.f32.mxu0 0.0
    %293 = vmatmul.mubr.f32.gmra.mrb[0].mxu0 %v220
    %v294 = vpop.f32.mrb[0].mxu0
    %v295 = vadd.f32 0.0, %v294
    %v296 = vpop.f32.mrb[0].mxu0
    %v297 = vadd.f32 0.0, %v296
    %298 = vdwg.mxu0
    %v299 = vadd.f32 %v199, %v289
    %v300 = vadd.f32 %v201, %v291
    %v301 = vadd.f32 %v205, %v295
    %v302 = vadd.f32 %v207, %v297
    %v303 = vld [vmem:[%s0 + $0x3] sm:$0xff]
    %v304 = vld [vmem:[%s0 + $0xb] sm:$0x1]
    %s305 = scalar_lea.vmem %s1, 96
    %v306 = vld [vmem:[%s305] sm:$0xff]
    %v307 = vld [vmem:[%s305 + $0x8] sm:$0xff]
    %v308 = vld [vmem:[%s305 + $0x10] sm:$0xff]
    %v309 = vld [vmem:[%s305 + $0x18] sm:$0xff]
    %v311 = vsel %vm42, %v303, 0
    %v314 = vsel %vm42, %v304, 0
    %316 = vmatprep.subr.mxu0 %v307
    %317 = vmatpush1.msra.mxu0 %v306
    %318 = vmatprep.subr.mxu0 %v309
    %319 = vmatpush1.msra.mxu0 %v308
    %320 = vmatprep.subr.mxu0 0.0
    %321 = vmatpush1.msra.mxu0 0.0
    %322 = vmatprep.subr.mxu0 0.0
    %323 = vmatpush1.msra.mxu0 0.0
    %324 = vmatprep.subr.mxu0 0.0
    %325 = vmatpush1.msra.mxu0 0.0
    %326 = vmatprep.subr.mxu0 0.0
    %327 = vmatpush1.msra.mxu0 0.0
    %328 = vmatprep.subr.mxu0 0.0
    %329 = vmatpush1.msra.mxu0 0.0
    %330 = vmatprep.subr.mxu0 0.0
    %331 = vmatpush1.msra.mxu0 0.0
    %332 = vmatprep.subr.mxu0 0.0
    %333 = vmatpush1.msra.mxu0 0.0
    %334 = vmatprep.subr.mxu0 0.0
    %335 = vmatpush1.msra.mxu0 0.0
    %336 = vmatprep.subr.mxu0 0.0
    %337 = vmatpush1.msra.mxu0 0.0
    %338 = vmatprep.subr.mxu0 0.0
    %339 = vmatpush1.msra.mxu0 0.0
    %340 = vmatprep.subr.mxu0 0.0
    %341 = vmatpush1.msra.mxu0 0.0
    %342 = vmatprep.subr.mxu0 0.0
    %343 = vmatpush1.msra.mxu0 0.0
    %344 = vmatprep.subr.mxu0 0.0
    %345 = vmatpush1.msra.mxu0 0.0
    %346 = vmatprep.subr.mxu0 0.0
    %347 = vmatpush1.msra.mxu0 0.0
    %348 = vmatprep.subr.mxu0 0.0
    %349 = vmatpush1.msra.mxu0 0.0
    %350 = vmatprep.subr.mxu0 0.0
    %351 = vmatpush1.msra.mxu0 0.0
    %352 = vmatprep.subr.mxu0 0.0
    %353 = vmatpush1.msra.mxu0 0.0
    %354 = vmatprep.subr.mxu0 0.0
    %355 = vmatpush1.msra.mxu0 0.0
    %356 = vmatprep.subr.mxu0 0.0
    %357 = vmatpush1.msra.mxu0 0.0
    %358 = vmatprep.subr.mxu0 0.0
    %359 = vmatpush1.msra.mxu0 0.0
    %360 = vmatprep.subr.mxu0 0.0
    %361 = vmatpush1.msra.mxu0 0.0
    %362 = vmatprep.subr.mxu0 0.0
    %363 = vmatpush1.msra.mxu0 0.0
    %364 = vmatprep.subr.mxu0 0.0
    %365 = vmatpush1.msra.mxu0 0.0
    %366 = vmatprep.subr.mxu0 0.0
    %367 = vmatpush1.msra.mxu0 0.0
    %368 = vmatprep.subr.mxu0 0.0
    %369 = vmatpush1.msra.mxu0 0.0
    %370 = vmatprep.subr.mxu0 0.0
    %371 = vmatpush1.msra.mxu0 0.0
    %372 = vmatprep.subr.mxu0 0.0
    %373 = vmatpush1.msra.mxu0 0.0
    %374 = vmatprep.subr.mxu0 0.0
    %375 = vmatpush1.msra.mxu0 0.0
    %376 = vmatprep.subr.mxu0 0.0
    %377 = vmatpush1.msra.mxu0 0.0
    %378 = vmatprep.subr.mxu0 0.0
    %379 = vmatpush1.msra.mxu0 0.0
    %380 = vmatprep.mubr.f32.mxu0 0.0
    %381 = vmatmul.mubr.f32.gmra.mrb[0].mxu0 %v311
    %v382 = vpop.f32.mrb[0].mxu0
    %v383 = vadd.f32 0.0, %v382
    %v384 = vpop.f32.mrb[0].mxu0
    %v385 = vadd.f32 0.0, %v384
    %386 = vmatprep.mubr.f32.mxu0 0.0
    %387 = vmatmul.mubr.f32.gmra.mrb[0].mxu0 %v314
    %v388 = vpop.f32.mrb[0].mxu0
    %v389 = vadd.f32 0.0, %v388
    %v390 = vpop.f32.mrb[0].mxu0
    %v391 = vadd.f32 0.0, %v390
    %392 = vdwg.mxu0
    %v393 = vadd.f32 %v299, %v383
    %v394 = vadd.f32 %v300, %v385
    %v395 = vadd.f32 %v301, %v389
    %v396 = vadd.f32 %v302, %v391
    %v397 = vld [vmem:[%s0 + $0x4] sm:$0xff]
    %v398 = vld [vmem:[%s0 + $0xc] sm:$0x1]
    %s399 = scalar_lea.vmem %s1, 128
    %v400 = vld [vmem:[%s399] sm:$0xff]
    %v401 = vld [vmem:[%s399 + $0x8] sm:$0xff]
    %v402 = vld [vmem:[%s399 + $0x10] sm:$0xff]
    %v403 = vld [vmem:[%s399 + $0x18] sm:$0xff]
    %v405 = vsel %vm42, %v397, 0
    %v408 = vsel %vm42, %v398, 0
    %410 = vmatprep.subr.mxu0 %v401
    %411 = vmatpush1.msra.mxu0 %v400
    %412 = vmatprep.subr.mxu0 %v403
    %413 = vmatpush1.msra.mxu0 %v402
    %414 = vmatprep.subr.mxu0 0.0
    %415 = vmatpush1.msra.mxu0 0.0
    %416 = vmatprep.subr.mxu0 0.0
    %417 = vmatpush1.msra.mxu0 0.0
    %418 = vmatprep.subr.mxu0 0.0
    %419 = vmatpush1.msra.mxu0 0.0
    %420 = vmatprep.subr.mxu0 0.0
    %421 = vmatpush1.msra.mxu0 0.0
    %422 = vmatprep.subr.mxu0 0.0
    %423 = vmatpush1.msra.mxu0 0.0
    %424 = vmatprep.subr.mxu0 0.0
    %425 = vmatpush1.msra.mxu0 0.0
    %426 = vmatprep.subr.mxu0 0.0
    %427 = vmatpush1.msra.mxu0 0.0
    %428 = vmatprep.subr.mxu0 0.0
    %429 = vmatpush1.msra.mxu0 0.0
    %430 = vmatprep.subr.mxu0 0.0
    %431 = vmatpush1.msra.mxu0 0.0
    %432 = vmatprep.subr.mxu0 0.0
    %433 = vmatpush1.msra.mxu0 0.0
    %434 = vmatprep.subr.mxu0 0.0
    %435 = vmatpush1.msra.mxu0 0.0
    %436 = vmatprep.subr.mxu0 0.0
    %437 = vmatpush1.msra.mxu0 0.0
    %438 = vmatprep.subr.mxu0 0.0
    %439 = vmatpush1.msra.mxu0 0.0
    %440 = vmatprep.subr.mxu0 0.0
    %441 = vmatpush1.msra.mxu0 0.0
    %442 = vmatprep.subr.mxu0 0.0
    %443 = vmatpush1.msra.mxu0 0.0
    %444 = vmatprep.subr.mxu0 0.0
    %445 = vmatpush1.msra.mxu0 0.0
    %446 = vmatprep.subr.mxu0 0.0
    %447 = vmatpush1.msra.mxu0 0.0
    %448 = vmatprep.subr.mxu0 0.0
    %449 = vmatpush1.msra.mxu0 0.0
    %450 = vmatprep.subr.mxu0 0.0
    %451 = vmatpush1.msra.mxu0 0.0
    %452 = vmatprep.subr.mxu0 0.0
    %453 = vmatpush1.msra.mxu0 0.0
    %454 = vmatprep.subr.mxu0 0.0
    %455 = vmatpush1.msra.mxu0 0.0
    %456 = vmatprep.subr.mxu0 0.0
    %457 = vmatpush1.msra.mxu0 0.0
    %458 = vmatprep.subr.mxu0 0.0
    %459 = vmatpush1.msra.mxu0 0.0
    %460 = vmatprep.subr.mxu0 0.0
    %461 = vmatpush1.msra.mxu0 0.0
    %462 = vmatprep.subr.mxu0 0.0
    %463 = vmatpush1.msra.mxu0 0.0
    %464 = vmatprep.subr.mxu0 0.0
    %465 = vmatpush1.msra.mxu0 0.0
    %466 = vmatprep.subr.mxu0 0.0
    %467 = vmatpush1.msra.mxu0 0.0
    %468 = vmatprep.subr.mxu0 0.0
    %469 = vmatpush1.msra.mxu0 0.0
    %470 = vmatprep.subr.mxu0 0.0
    %471 = vmatpush1.msra.mxu0 0.0
    %472 = vmatprep.subr.mxu0 0.0
    %473 = vmatpush1.msra.mxu0 0.0
    %474 = vmatprep.mubr.f32.mxu0 0.0
    %475 = vmatmul.mubr.f32.gmra.mrb[0].mxu0 %v405
    %v476 = vpop.f32.mrb[0].mxu0
    %v477 = vadd.f32 0.0, %v476
    %v478 = vpop.f32.mrb[0].mxu0
    %v479 = vadd.f32 0.0, %v478
    %480 = vmatprep.mubr.f32.mxu0 0.0
    %481 = vmatmul.mubr.f32.gmra.mrb[0].mxu0 %v408
    %v482 = vpop.f32.mrb[0].mxu0
    %v483 = vadd.f32 0.0, %v482
    %v484 = vpop.f32.mrb[0].mxu0
    %v485 = vadd.f32 0.0, %v484
    %486 = vdwg.mxu0
    %v487 = vadd.f32 %v393, %v477
    %v488 = vadd.f32 %v394, %v479
    %v489 = vadd.f32 %v395, %v483
    %v490 = vadd.f32 %v396, %v485
    %v491 = vld [vmem:[%s0 + $0x5] sm:$0xff]
    %v492 = vld [vmem:[%s0 + $0xd] sm:$0x1]
    %s493 = scalar_lea.vmem %s1, 160
    %v494 = vld [vmem:[%s493] sm:$0xff]
    %v495 = vld [vmem:[%s493 + $0x8] sm:$0xff]
    %v496 = vld [vmem:[%s493 + $0x10] sm:$0xff]
    %v497 = vld [vmem:[%s493 + $0x18] sm:$0xff]
    %v499 = vsel %vm42, %v491, 0
    %v502 = vsel %vm42, %v492, 0
    %504 = vmatprep.subr.mxu0 %v495
    %505 = vmatpush1.msra.mxu0 %v494
    %506 = vmatprep.subr.mxu0 %v497
    %507 = vmatpush1.msra.mxu0 %v496
    %508 = vmatprep.subr.mxu0 0.0
    %509 = vmatpush1.msra.mxu0 0.0
    %510 = vmatprep.subr.mxu0 0.0
    %511 = vmatpush1.msra.mxu0 0.0
    %512 = vmatprep.subr.mxu0 0.0
    %513 = vmatpush1.msra.mxu0 0.0
    %514 = vmatprep.subr.mxu0 0.0
    %515 = vmatpush1.msra.mxu0 0.0
    %516 = vmatprep.subr.mxu0 0.0
    %517 = vmatpush1.msra.mxu0 0.0
    %518 = vmatprep.subr.mxu0 0.0
    %519 = vmatpush1.msra.mxu0 0.0
    %520 = vmatprep.subr.mxu0 0.0
    %521 = vmatpush1.msra.mxu0 0.0
    %522 = vmatprep.subr.mxu0 0.0
    %523 = vmatpush1.msra.mxu0 0.0
    %524 = vmatprep.subr.mxu0 0.0
    %525 = vmatpush1.msra.mxu0 0.0
    %526 = vmatprep.subr.mxu0 0.0
    %527 = vmatpush1.msra.mxu0 0.0
    %528 = vmatprep.subr.mxu0 0.0
    %529 = vmatpush1.msra.mxu0 0.0
    %530 = vmatprep.subr.mxu0 0.0
    %531 = vmatpush1.msra.mxu0 0.0
    %532 = vmatprep.subr.mxu0 0.0
    %533 = vmatpush1.msra.mxu0 0.0
    %534 = vmatprep.subr.mxu0 0.0
    %535 = vmatpush1.msra.mxu0 0.0
    %536 = vmatprep.subr.mxu0 0.0
    %537 = vmatpush1.msra.mxu0 0.0
    %538 = vmatprep.subr.mxu0 0.0
    %539 = vmatpush1.msra.mxu0 0.0
    %540 = vmatprep.subr.mxu0 0.0
    %541 = vmatpush1.msra.mxu0 0.0
    %542 = vmatprep.subr.mxu0 0.0
    %543 = vmatpush1.msra.mxu0 0.0
    %544 = vmatprep.subr.mxu0 0.0
    %545 = vmatpush1.msra.mxu0 0.0
    %546 = vmatprep.subr.mxu0 0.0
    %547 = vmatpush1.msra.mxu0 0.0
    %548 = vmatprep.subr.mxu0 0.0
    %549 = vmatpush1.msra.mxu0 0.0
    %550 = vmatprep.subr.mxu0 0.0
    %551 = vmatpush1.msra.mxu0 0.0
    %552 = vmatprep.subr.mxu0 0.0
    %553 = vmatpush1.msra.mxu0 0.0
    %554 = vmatprep.subr.mxu0 0.0
    %555 = vmatpush1.msra.mxu0 0.0
    %556 = vmatprep.subr.mxu0 0.0
    %557 = vmatpush1.msra.mxu0 0.0
    %558 = vmatprep.subr.mxu0 0.0
    %559 = vmatpush1.msra.mxu0 0.0
    %560 = vmatprep.subr.mxu0 0.0
    %561 = vmatpush1.msra.mxu0 0.0
    %562 = vmatprep.subr.mxu0 0.0
    %563 = vmatpush1.msra.mxu0 0.0
    %564 = vmatprep.subr.mxu0 0.0
    %565 = vmatpush1.msra.mxu0 0.0
    %566 = vmatprep.subr.mxu0 0.0
    %567 = vmatpush1.msra.mxu0 0.0
    %568 = vmatprep.mubr.f32.mxu0 0.0
    %569 = vmatmul.mubr.f32.gmra.mrb[0].mxu0 %v499
    %v570 = vpop.f32.mrb[0].mxu0
    %v571 = vadd.f32 0.0, %v570
    %v572 = vpop.f32.mrb[0].mxu0
    %v573 = vadd.f32 0.0, %v572
    %574 = vmatprep.mubr.f32.mxu0 0.0
    %575 = vmatmul.mubr.f32.gmra.mrb[0].mxu0 %v502
    %v576 = vpop.f32.mrb[0].mxu0
    %v577 = vadd.f32 0.0, %v576
    %v578 = vpop.f32.mrb[0].mxu0
    %v579 = vadd.f32 0.0, %v578
    %580 = vdwg.mxu0
    %v581 = vadd.f32 %v487, %v571
    %v582 = vadd.f32 %v488, %v573
    %v583 = vadd.f32 %v489, %v577
    %v584 = vadd.f32 %v490, %v579
    %v585 = vld [vmem:[%s0 + $0x6] sm:$0xff]
    %v586 = vld [vmem:[%s0 + $0xe] sm:$0x1]
    %s587 = scalar_lea.vmem %s1, 192
    %v588 = vld [vmem:[%s587] sm:$0xff]
    %v589 = vld [vmem:[%s587 + $0x8] sm:$0xff]
    %v590 = vld [vmem:[%s587 + $0x10] sm:$0xff]
    %v591 = vld [vmem:[%s587 + $0x18] sm:$0xff]
    %v593 = vsel %vm42, %v585, 0
    %v596 = vsel %vm42, %v586, 0
    %598 = vmatprep.subr.mxu0 %v589
    %599 = vmatpush1.msra.mxu0 %v588
    %600 = vmatprep.subr.mxu0 %v591
    %601 = vmatpush1.msra.mxu0 %v590
    %602 = vmatprep.subr.mxu0 0.0
    %603 = vmatpush1.msra.mxu0 0.0
    %604 = vmatprep.subr.mxu0 0.0
    %605 = vmatpush1.msra.mxu0 0.0
    %606 = vmatprep.subr.mxu0 0.0
    %607 = vmatpush1.msra.mxu0 0.0
    %608 = vmatprep.subr.mxu0 0.0
    %609 = vmatpush1.msra.mxu0 0.0
    %610 = vmatprep.subr.mxu0 0.0
    %611 = vmatpush1.msra.mxu0 0.0
    %612 = vmatprep.subr.mxu0 0.0
    %613 = vmatpush1.msra.mxu0 0.0
    %614 = vmatprep.subr.mxu0 0.0
    %615 = vmatpush1.msra.mxu0 0.0
    %616 = vmatprep.subr.mxu0 0.0
    %617 = vmatpush1.msra.mxu0 0.0
    %618 = vmatprep.subr.mxu0 0.0
    %619 = vmatpush1.msra.mxu0 0.0
    %620 = vmatprep.subr.mxu0 0.0
    %621 = vmatpush1.msra.mxu0 0.0
    %622 = vmatprep.subr.mxu0 0.0
    %623 = vmatpush1.msra.mxu0 0.0
    %624 = vmatprep.subr.mxu0 0.0
    %625 = vmatpush1.msra.mxu0 0.0
    %626 = vmatprep.subr.mxu0 0.0
    %627 = vmatpush1.msra.mxu0 0.0
    %628 = vmatprep.subr.mxu0 0.0
    %629 = vmatpush1.msra.mxu0 0.0
    %630 = vmatprep.subr.mxu0 0.0
    %631 = vmatpush1.msra.mxu0 0.0
    %632 = vmatprep.subr.mxu0 0.0
    %633 = vmatpush1.msra.mxu0 0.0
    %634 = vmatprep.subr.mxu0 0.0
    %635 = vmatpush1.msra.mxu0 0.0
    %636 = vmatprep.subr.mxu0 0.0
    %637 = vmatpush1.msra.mxu0 0.0
    %638 = vmatprep.subr.mxu0 0.0
    %639 = vmatpush1.msra.mxu0 0.0
    %640 = vmatprep.subr.mxu0 0.0
    %641 = vmatpush1.msra.mxu0 0.0
    %642 = vmatprep.subr.mxu0 0.0
    %643 = vmatpush1.msra.mxu0 0.0
    %644 = vmatprep.subr.mxu0 0.0
    %645 = vmatpush1.msra.mxu0 0.0
    %646 = vmatprep.subr.mxu0 0.0
    %647 = vmatpush1.msra.mxu0 0.0
    %648 = vmatprep.subr.mxu0 0.0
    %649 = vmatpush1.msra.mxu0 0.0
    %650 = vmatprep.subr.mxu0 0.0
    %651 = vmatpush1.msra.mxu0 0.0
    %652 = vmatprep.subr.mxu0 0.0
    %653 = vmatpush1.msra.mxu0 0.0
    %654 = vmatprep.subr.mxu0 0.0
    %655 = vmatpush1.msra.mxu0 0.0
    %656 = vmatprep.subr.mxu0 0.0
    %657 = vmatpush1.msra.mxu0 0.0
    %658 = vmatprep.subr.mxu0 0.0
    %659 = vmatpush1.msra.mxu0 0.0
    %660 = vmatprep.subr.mxu0 0.0
    %661 = vmatpush1.msra.mxu0 0.0
    %662 = vmatprep.mubr.f32.mxu0 0.0
    %663 = vmatmul.mubr.f32.gmra.mrb[0].mxu0 %v593
    %v664 = vpop.f32.mrb[0].mxu0
    %v665 = vadd.f32 0.0, %v664
    %v666 = vpop.f32.mrb[0].mxu0
    %v667 = vadd.f32 0.0, %v666
    %668 = vmatprep.mubr.f32.mxu0 0.0
    %669 = vmatmul.mubr.f32.gmra.mrb[0].mxu0 %v596
    %v670 = vpop.f32.mrb[0].mxu0
    %v671 = vadd.f32 0.0, %v670
    %v672 = vpop.f32.mrb[0].mxu0
    %v673 = vadd.f32 0.0, %v672
    %674 = vdwg.mxu0
    %v675 = vadd.f32 %v581, %v665
    %v676 = vadd.f32 %v582, %v667
    %v677 = vadd.f32 %v583, %v671
    %v678 = vadd.f32 %v584, %v673
    %v679 = vld [vmem:[%s0 + $0x7] sm:$0xff]
    %v680 = vld [vmem:[%s0 + $0xf] sm:$0x1]
    %s681 = scalar_lea.vmem %s1, 224
    %v682 = vld [vmem:[%s681] sm:$0xff]
    %v683 = vld [vmem:[%s681 + $0x8] sm:$0xff]
    %v684 = vld [vmem:[%s681 + $0x10] sm:$0xff]
    %v685 = vld [vmem:[%s681 + $0x18] sm:$0xff]
    %v687 = vsel %vm42, %v679, 0
    %v690 = vsel %vm42, %v680, 0
    %692 = vmatprep.subr.mxu0 %v683
    %693 = vmatpush1.msra.mxu0 %v682
    %694 = vmatprep.subr.mxu0 %v685
    %695 = vmatpush1.msra.mxu0 %v684
    %696 = vmatprep.subr.mxu0 0.0
    %697 = vmatpush1.msra.mxu0 0.0
    %698 = vmatprep.subr.mxu0 0.0
    %699 = vmatpush1.msra.mxu0 0.0
    %700 = vmatprep.subr.mxu0 0.0
    %701 = vmatpush1.msra.mxu0 0.0
    %702 = vmatprep.subr.mxu0 0.0
    %703 = vmatpush1.msra.mxu0 0.0
    %704 = vmatprep.subr.mxu0 0.0
    %705 = vmatpush1.msra.mxu0 0.0
    %706 = vmatprep.subr.mxu0 0.0
    %707 = vmatpush1.msra.mxu0 0.0
    %708 = vmatprep.subr.mxu0 0.0
    %709 = vmatpush1.msra.mxu0 0.0
    %710 = vmatprep.subr.mxu0 0.0
    %711 = vmatpush1.msra.mxu0 0.0
    %712 = vmatprep.subr.mxu0 0.0
    %713 = vmatpush1.msra.mxu0 0.0
    %714 = vmatprep.subr.mxu0 0.0
    %715 = vmatpush1.msra.mxu0 0.0
    %716 = vmatprep.subr.mxu0 0.0
    %717 = vmatpush1.msra.mxu0 0.0
    %718 = vmatprep.subr.mxu0 0.0
    %719 = vmatpush1.msra.mxu0 0.0
    %720 = vmatprep.subr.mxu0 0.0
    %721 = vmatpush1.msra.mxu0 0.0
    %722 = vmatprep.subr.mxu0 0.0
    %723 = vmatpush1.msra.mxu0 0.0
    %724 = vmatprep.subr.mxu0 0.0
    %725 = vmatpush1.msra.mxu0 0.0
    %726 = vmatprep.subr.mxu0 0.0
    %727 = vmatpush1.msra.mxu0 0.0
    %728 = vmatprep.subr.mxu0 0.0
    %729 = vmatpush1.msra.mxu0 0.0
    %730 = vmatprep.subr.mxu0 0.0
    %731 = vmatpush1.msra.mxu0 0.0
    %732 = vmatprep.subr.mxu0 0.0
    %733 = vmatpush1.msra.mxu0 0.0
    %734 = vmatprep.subr.mxu0 0.0
    %735 = vmatpush1.msra.mxu0 0.0
    %736 = vmatprep.subr.mxu0 0.0
    %737 = vmatpush1.msra.mxu0 0.0
    %738 = vmatprep.subr.mxu0 0.0
    %739 = vmatpush1.msra.mxu0 0.0
    %740 = vmatprep.subr.mxu0 0.0
    %741 = vmatpush1.msra.mxu0 0.0
    %742 = vmatprep.subr.mxu0 0.0
    %743 = vmatpush1.msra.mxu0 0.0
    %744 = vmatprep.subr.mxu0 0.0
    %745 = vmatpush1.msra.mxu0 0.0
    %746 = vmatprep.subr.mxu0 0.0
    %747 = vmatpush1.msra.mxu0 0.0
    %748 = vmatprep.subr.mxu0 0.0
    %749 = vmatpush1.msra.mxu0 0.0
    %750 = vmatprep.subr.mxu0 0.0
    %751 = vmatpush1.msra.mxu0 0.0
    %752 = vmatprep.subr.mxu0 0.0
    %753 = vmatpush1.msra.mxu0 0.0
    %754 = vmatprep.subr.mxu0 0.0
    %755 = vmatpush1.msra.mxu0 0.0
    %756 = vmatprep.mubr.f32.mxu0 0.0
    %757 = vmatmul.mubr.f32.gmra.mrb[0].mxu0 %v687
    %v758 = vpop.f32.mrb[0].mxu0
    %v759 = vadd.f32 0.0, %v758
    %v760 = vpop.f32.mrb[0].mxu0
    %v761 = vadd.f32 0.0, %v760
    %762 = vmatprep.mubr.f32.mxu0 0.0
    %763 = vmatmul.mubr.f32.gmra.mrb[0].mxu0 %v690
    %v764 = vpop.f32.mrb[0].mxu0
    %v765 = vadd.f32 0.0, %v764
    %v766 = vpop.f32.mrb[0].mxu0
    %v767 = vadd.f32 0.0, %v766
    %768 = vdwg.mxu0
    %v769 = vadd.f32 %v675, %v759
    %v770 = vadd.f32 %v676, %v761
    %v771 = vadd.f32 %v677, %v765
    %v772 = vadd.f32 %v678, %v767
    %v773 = vld [vmem:[%s2] sm:$0x3]
    %v775 = vlaneseq
    %v776 = vshrl.u32 %v775, 7
    %v777 = vsub.s32 0, %v776
    %v778 = vrot.slane %v773, %v777
    %v779 = vlaneseq
    %v780 = vshrl.u32 %v779, 7
    %v781 = vsub.s32 1, %v780
    %v782 = vrot.slane %v773, %v781
    %v785 = vadd.f32 %v769, %v778
    %v786 = vadd.f32 %v770, %v782
    %v787 = vadd.f32 %v771, %v778
    %v788 = vadd.f32 %v772, %v782
    %v789 = vmax.f32 %v785, 0.0
    %v790 = vmax.f32 %v786, 0.0
    %v791 = vmax.f32 %v787, 0.0
    %v792 = vmax.f32 %v788, 0.0
    %v793 = vld [vmem:[%s3] sm:$0xff]
    %v794 = vld [vmem:[%s3 + $0x8] sm:$0xff]
    %v795 = vld [vmem:[%s3 + $0x10] sm:$0xff]
    %v796 = vld [vmem:[%s3 + $0x18] sm:$0xff]
    %v797 = vld [vmem:[%s3 + $0x20] sm:$0xff]
    %v798 = vld [vmem:[%s3 + $0x28] sm:$0xff]
    %v799 = vld [vmem:[%s3 + $0x30] sm:$0xff]
    %v800 = vld [vmem:[%s3 + $0x38] sm:$0xff]
    %v801 = vld [vmem:[%s3 + $0x40] sm:$0xff]
    %v802 = vld [vmem:[%s3 + $0x48] sm:$0xff]
    %v803 = vld [vmem:[%s3 + $0x50] sm:$0xff]
    %v804 = vld [vmem:[%s3 + $0x58] sm:$0xff]
    %v805 = vld [vmem:[%s3 + $0x60] sm:$0xff]
    %v806 = vld [vmem:[%s3 + $0x68] sm:$0xff]
    %v807 = vld [vmem:[%s3 + $0x70] sm:$0xff]
    %v808 = vld [vmem:[%s3 + $0x78] sm:$0xff]
    %v809 = vld [vmem:[%s3 + $0x80] sm:$0xff]
    %v810 = vld [vmem:[%s3 + $0x88] sm:$0xff]
    %s811 = scalar_lea.vmem %s3, 144
    %v812 = vld [vmem:[%s811] sm:$0xff]
    %v813 = vld [vmem:[%s811 + $0x8] sm:$0xff]
    %v814 = vld [vmem:[%s811 + $0x10] sm:$0xff]
    %v815 = vld [vmem:[%s811 + $0x18] sm:$0xff]
    %v816 = vld [vmem:[%s811 + $0x20] sm:$0xff]
    %v817 = vld [vmem:[%s811 + $0x28] sm:$0xff]
    %v818 = vld [vmem:[%s811 + $0x30] sm:$0xff]
    %v819 = vld [vmem:[%s811 + $0x38] sm:$0xff]
    %v820 = vld [vmem:[%s811 + $0x40] sm:$0xff]
    %v821 = vld [vmem:[%s811 + $0x48] sm:$0xff]
    %v822 = vld [vmem:[%s811 + $0x50] sm:$0xff]
    %v823 = vld [vmem:[%s811 + $0x58] sm:$0xff]
    %v824 = vld [vmem:[%s811 + $0x60] sm:$0xff]
    %v825 = vld [vmem:[%s811 + $0x68] sm:$0xff]
    %v826 = vld [vmem:[%s811 + $0x70] sm:$0xff]
    %v827 = vld [vmem:[%s811 + $0x78] sm:$0xff]
    %v828 = vld [vmem:[%s811 + $0x80] sm:$0xff]
    %v829 = vld [vmem:[%s811 + $0x88] sm:$0xff]
    %v832 = vrot.slane %v789, 1
    %v833 = vrot.slane %v790, 1
    %v835 = vsel %vm42, %v833, 0
    %837 = vmatprep.subr.mxu0 0.0
    %838 = vmatpush1.msra.mxu0 %v812
    %839 = vmatprep.subr.mxu0 0.0
    %840 = vmatpush1.msra.mxu0 %v813
    %841 = vmatprep.subr.mxu0 0.0
    %842 = vmatpush1.msra.mxu0 %v814
    %843 = vmatprep.subr.mxu0 0.0
    %844 = vmatpush1.msra.mxu0 %v815
    %845 = vmatprep.subr.mxu0 0.0
    %846 = vmatpush1.msra.mxu0 %v816
    %847 = vmatprep.subr.mxu0 0.0
    %848 = vmatpush1.msra.mxu0 %v817
    %849 = vmatprep.subr.mxu0 0.0
    %850 = vmatpush1.msra.mxu0 %v818
    %851 = vmatprep.subr.mxu0 0.0
    %852 = vmatpush1.msra.mxu0 %v819
    %853 = vmatprep.subr.mxu0 0.0
    %854 = vmatpush1.msra.mxu0 %v820
    %855 = vmatprep.subr.mxu0 0.0
    %856 = vmatpush1.msra.mxu0 %v821
    %857 = vmatprep.subr.mxu0 0.0
    %858 = vmatpush1.msra.mxu0 %v822
    %859 = vmatprep.subr.mxu0 0.0
    %860 = vmatpush1.msra.mxu0 %v823
    %861 = vmatprep.subr.mxu0 0.0
    %862 = vmatpush1.msra.mxu0 %v824
    %863 = vmatprep.subr.mxu0 0.0
    %864 = vmatpush1.msra.mxu0 %v825
    %865 = vmatprep.subr.mxu0 0.0
    %866 = vmatpush1.msra.mxu0 %v826
    %867 = vmatprep.subr.mxu0 0.0
    %868 = vmatpush1.msra.mxu0 %v827
    %869 = vmatprep.subr.mxu0 0.0
    %870 = vmatpush1.msra.mxu0 %v828
    %871 = vmatprep.subr.mxu0 0.0
    %872 = vmatpush1.msra.mxu0 %v829
    %873 = vmatprep.subr.mxu0 0.0
    %874 = vmatpush1.msra.mxu0 0.0
    %875 = vmatprep.subr.mxu0 0.0
    %876 = vmatpush1.msra.mxu0 0.0
    %877 = vmatprep.subr.mxu0 0.0
    %878 = vmatpush1.msra.mxu0 0.0
    %879 = vmatprep.subr.mxu0 0.0
    %880 = vmatpush1.msra.mxu0 0.0
    %881 = vmatprep.subr.mxu0 0.0
    %882 = vmatpush1.msra.mxu0 0.0
    %883 = vmatprep.subr.mxu0 0.0
    %884 = vmatpush1.msra.mxu0 0.0
    %885 = vmatprep.subr.mxu0 0.0
    %886 = vmatpush1.msra.mxu0 0.0
    %887 = vmatprep.subr.mxu0 0.0
    %888 = vmatpush1.msra.mxu0 0.0
    %889 = vmatprep.subr.mxu0 0.0
    %890 = vmatpush1.msra.mxu0 0.0
    %891 = vmatprep.subr.mxu0 0.0
    %892 = vmatpush1.msra.mxu0 0.0
    %893 = vmatprep.subr.mxu0 0.0
    %894 = vmatpush1.msra.mxu0 0.0
    %895 = vmatprep.subr.mxu0 0.0
    %896 = vmatpush1.msra.mxu0 0.0
    %897 = vmatprep.subr.mxu0 0.0
    %898 = vmatpush1.msra.mxu0 0.0
    %899 = vmatprep.subr.mxu0 0.0
    %900 = vmatpush1.msra.mxu0 0.0
    %901 = vmatprep.mubr.f32.mxu0 %v835
    %902 = vmatmul.mubr.f32.gmra.mrb[0].mxu0 %v832
    %v903 = vpop.f32.mrb[0].mxu0
    %v904 = vadd.f32 0.0, %v903
    %v905 = vpop.f32.mrb[0].mxu0
    %906 = vdwg.mxu0
    %v907 = vsel %vm42, %v790, 0
    %909 = vmatprep.subr.mxu0 0.0
    %910 = vmatpush1.msra.mxu0 %v793
    %911 = vmatprep.subr.mxu0 0.0
    %912 = vmatpush1.msra.mxu0 %v794
    %913 = vmatprep.subr.mxu0 0.0
    %914 = vmatpush1.msra.mxu0 %v795
    %915 = vmatprep.subr.mxu0 0.0
    %916 = vmatpush1.msra.mxu0 %v796
    %917 = vmatprep.subr.mxu0 0.0
    %918 = vmatpush1.msra.mxu0 %v797
    %919 = vmatprep.subr.mxu0 0.0
    %920 = vmatpush1.msra.mxu0 %v798
    %921 = vmatprep.subr.mxu0 0.0
    %922 = vmatpush1.msra.mxu0 %v799
    %923 = vmatprep.subr.mxu0 0.0
    %924 = vmatpush1.msra.mxu0 %v800
    %925 = vmatprep.subr.mxu0 0.0
    %926 = vmatpush1.msra.mxu0 %v801
    %927 = vmatprep.subr.mxu0 0.0
    %928 = vmatpush1.msra.mxu0 %v802
    %929 = vmatprep.subr.mxu0 0.0
    %930 = vmatpush1.msra.mxu0 %v803
    %931 = vmatprep.subr.mxu0 0.0
    %932 = vmatpush1.msra.mxu0 %v804
    %933 = vmatprep.subr.mxu0 0.0
    %934 = vmatpush1.msra.mxu0 %v805
    %935 = vmatprep.subr.mxu0 0.0
    %936 = vmatpush1.msra.mxu0 %v806
    %937 = vmatprep.subr.mxu0 0.0
    %938 = vmatpush1.msra.mxu0 %v807
    %939 = vmatprep.subr.mxu0 0.0
    %940 = vmatpush1.msra.mxu0 %v808
    %941 = vmatprep.subr.mxu0 0.0
    %942 = vmatpush1.msra.mxu0 %v809
    %943 = vmatprep.subr.mxu0 0.0
    %944 = vmatpush1.msra.mxu0 %v810
    %945 = vmatprep.subr.mxu0 0.0
    %946 = vmatpush1.msra.mxu0 0.0
    %947 = vmatprep.subr.mxu0 0.0
    %948 = vmatpush1.msra.mxu0 0.0
    %949 = vmatprep.subr.mxu0 0.0
    %950 = vmatpush1.msra.mxu0 0.0
    %951 = vmatprep.subr.mxu0 0.0
    %952 = vmatpush1.msra.mxu0 0.0
    %953 = vmatprep.subr.mxu0 0.0
    %954 = vmatpush1.msra.mxu0 0.0
    %955 = vmatprep.subr.mxu0 0.0
    %956 = vmatpush1.msra.mxu0 0.0
    %957 = vmatprep.subr.mxu0 0.0
    %958 = vmatpush1.msra.mxu0 0.0
    %959 = vmatprep.subr.mxu0 0.0
    %960 = vmatpush1.msra.mxu0 0.0
    %961 = vmatprep.subr.mxu0 0.0
    %962 = vmatpush1.msra.mxu0 0.0
    %963 = vmatprep.subr.mxu0 0.0
    %964 = vmatpush1.msra.mxu0 0.0
    %965 = vmatprep.subr.mxu0 0.0
    %966 = vmatpush1.msra.mxu0 0.0
    %967 = vmatprep.subr.mxu0 0.0
    %968 = vmatpush1.msra.mxu0 0.0
    %969 = vmatprep.subr.mxu0 0.0
    %970 = vmatpush1.msra.mxu0 0.0
    %971 = vmatprep.subr.mxu0 0.0
    %972 = vmatpush1.msra.mxu0 0.0
    %973 = vmatprep.mubr.f32.mxu0 %v907
    %974 = vmatmul.mubr.f32.gmra.mrb[0].mxu0 %v789
    %v975 = vpop.f32.mrb[0].mxu0
    %v976 = vadd.f32 %v904, %v975
    %v977 = vpop.f32.mrb[0].mxu0
    %978 = vdwg.mxu0
    %s979 = scalar_lea.vmem %s3, 288
    %v980 = vld [vmem:[%s979] sm:$0xff]
    %v981 = vld [vmem:[%s979 + $0x8] sm:$0xff]
    %v982 = vld [vmem:[%s979 + $0x10] sm:$0xff]
    %v983 = vld [vmem:[%s979 + $0x18] sm:$0xff]
    %v984 = vld [vmem:[%s979 + $0x20] sm:$0xff]
    %v985 = vld [vmem:[%s979 + $0x28] sm:$0xff]
    %v986 = vld [vmem:[%s979 + $0x30] sm:$0xff]
    %v987 = vld [vmem:[%s979 + $0x38] sm:$0xff]
    %v988 = vld [vmem:[%s979 + $0x40] sm:$0xff]
    %v989 = vld [vmem:[%s979 + $0x48] sm:$0xff]
    %v990 = vld [vmem:[%s979 + $0x50] sm:$0xff]
    %v991 = vld [vmem:[%s979 + $0x58] sm:$0xff]
    %v992 = vld [vmem:[%s979 + $0x60] sm:$0xff]
    %v993 = vld [vmem:[%s979 + $0x68] sm:$0xff]
    %v994 = vld [vmem:[%s979 + $0x70] sm:$0xff]
    %v995 = vld [vmem:[%s979 + $0x78] sm:$0xff]
    %v996 = vld [vmem:[%s979 + $0x80] sm:$0xff]
    %v997 = vld [vmem:[%s979 + $0x88] sm:$0xff]
    %v998 = vrot.slane %v789, 2
    %v999 = vrot.slane %v790, 2
    %v1001 = vsel %vm42, %v999, 0
    %1003 = vmatprep.subr.mxu0 0.0
    %1004 = vmatpush1.msra.mxu0 %v980
    %1005 = vmatprep.subr.mxu0 0.0
    %1006 = vmatpush1.msra.mxu0 %v981
    %1007 = vmatprep.subr.mxu0 0.0
    %1008 = vmatpush1.msra.mxu0 %v982
    %1009 = vmatprep.subr.mxu0 0.0
    %1010 = vmatpush1.msra.mxu0 %v983
    %1011 = vmatprep.subr.mxu0 0.0
    %1012 = vmatpush1.msra.mxu0 %v984
    %1013 = vmatprep.subr.mxu0 0.0
    %1014 = vmatpush1.msra.mxu0 %v985
    %1015 = vmatprep.subr.mxu0 0.0
    %1016 = vmatpush1.msra.mxu0 %v986
    %1017 = vmatprep.subr.mxu0 0.0
    %1018 = vmatpush1.msra.mxu0 %v987
    %1019 = vmatprep.subr.mxu0 0.0
    %1020 = vmatpush1.msra.mxu0 %v988
    %1021 = vmatprep.subr.mxu0 0.0
    %1022 = vmatpush1.msra.mxu0 %v989
    %1023 = vmatprep.subr.mxu0 0.0
    %1024 = vmatpush1.msra.mxu0 %v990
    %1025 = vmatprep.subr.mxu0 0.0
    %1026 = vmatpush1.msra.mxu0 %v991
    %1027 = vmatprep.subr.mxu0 0.0
    %1028 = vmatpush1.msra.mxu0 %v992
    %1029 = vmatprep.subr.mxu0 0.0
    %1030 = vmatpush1.msra.mxu0 %v993
    %1031 = vmatprep.subr.mxu0 0.0
    %1032 = vmatpush1.msra.mxu0 %v994
    %1033 = vmatprep.subr.mxu0 0.0
    %1034 = vmatpush1.msra.mxu0 %v995
    %1035 = vmatprep.subr.mxu0 0.0
    %1036 = vmatpush1.msra.mxu0 %v996
    %1037 = vmatprep.subr.mxu0 0.0
    %1038 = vmatpush1.msra.mxu0 %v997
    %1039 = vmatprep.subr.mxu0 0.0
    %1040 = vmatpush1.msra.mxu0 0.0
    %1041 = vmatprep.subr.mxu0 0.0
    %1042 = vmatpush1.msra.mxu0 0.0
    %1043 = vmatprep.subr.mxu0 0.0
    %1044 = vmatpush1.msra.mxu0 0.0
    %1045 = vmatprep.subr.mxu0 0.0
    %1046 = vmatpush1.msra.mxu0 0.0
    %1047 = vmatprep.subr.mxu0 0.0
    %1048 = vmatpush1.msra.mxu0 0.0
    %1049 = vmatprep.subr.mxu0 0.0
    %1050 = vmatpush1.msra.mxu0 0.0
    %1051 = vmatprep.subr.mxu0 0.0
    %1052 = vmatpush1.msra.mxu0 0.0
    %1053 = vmatprep.subr.mxu0 0.0
    %1054 = vmatpush1.msra.mxu0 0.0
    %1055 = vmatprep.subr.mxu0 0.0
    %1056 = vmatpush1.msra.mxu0 0.0
    %1057 = vmatprep.subr.mxu0 0.0
    %1058 = vmatpush1.msra.mxu0 0.0
    %1059 = vmatprep.subr.mxu0 0.0
    %1060 = vmatpush1.msra.mxu0 0.0
    %1061 = vmatprep.subr.mxu0 0.0
    %1062 = vmatpush1.msra.mxu0 0.0
    %1063 = vmatprep.subr.mxu0 0.0
    %1064 = vmatpush1.msra.mxu0 0.0
    %1065 = vmatprep.subr.mxu0 0.0
    %1066 = vmatpush1.msra.mxu0 0.0
    %1067 = vmatprep.mubr.f32.mxu0 %v1001
    %1068 = vmatmul.mubr.f32.gmra.mrb[0].mxu0 %v998
    %v1069 = vpop.f32.mrb[0].mxu0
    %v1070 = vadd.f32 0.0, %v1069
    %v1071 = vpop.f32.mrb[0].mxu0
    %1072 = vdwg.mxu0
    %v1073 = vadd.f32 %v976, %v1070
    %s1074 = scalar_lea.vmem %s3, 432
    %v1075 = vld [vmem:[%s1074] sm:$0xff]
    %v1076 = vld [vmem:[%s1074 + $0x8] sm:$0xff]
    %v1077 = vld [vmem:[%s1074 + $0x10] sm:$0xff]
    %v1078 = vld [vmem:[%s1074 + $0x18] sm:$0xff]
    %v1079 = vld [vmem:[%s1074 + $0x20] sm:$0xff]
    %v1080 = vld [vmem:[%s1074 + $0x28] sm:$0xff]
    %v1081 = vld [vmem:[%s1074 + $0x30] sm:$0xff]
    %v1082 = vld [vmem:[%s1074 + $0x38] sm:$0xff]
    %v1083 = vld [vmem:[%s1074 + $0x40] sm:$0xff]
    %v1084 = vld [vmem:[%s1074 + $0x48] sm:$0xff]
    %v1085 = vld [vmem:[%s1074 + $0x50] sm:$0xff]
    %v1086 = vld [vmem:[%s1074 + $0x58] sm:$0xff]
    %v1087 = vld [vmem:[%s1074 + $0x60] sm:$0xff]
    %v1088 = vld [vmem:[%s1074 + $0x68] sm:$0xff]
    %v1089 = vld [vmem:[%s1074 + $0x70] sm:$0xff]
    %v1090 = vld [vmem:[%s1074 + $0x78] sm:$0xff]
    %v1091 = vld [vmem:[%s1074 + $0x80] sm:$0xff]
    %v1092 = vld [vmem:[%s1074 + $0x88] sm:$0xff]
    %vm1095 = vcmask 1044480
    %v1096 = vrot.slane %v789, 3
    %v1097 = vrot.slane %v791, 3
    %v1098 = vsel %vm1095, %v1096, %v1097
    %v1099 = vrot.slane %v790, 3
    %v1100 = vrot.slane %v792, 3
    %v1101 = vsel %vm1095, %v1099, %v1100
    %v1103 = vsel %vm42, %v1101, 0
    %1105 = vmatprep.subr.mxu0 0.0
    %1106 = vmatpush1.msra.mxu0 %v1075
    %1107 = vmatprep.subr.mxu0 0.0
    %1108 = vmatpush1.msra.mxu0 %v1076
    %1109 = vmatprep.subr.mxu0 0.0
    %1110 = vmatpush1.msra.mxu0 %v1077
    %1111 = vmatprep.subr.mxu0 0.0
    %1112 = vmatpush1.msra.mxu0 %v1078
    %1113 = vmatprep.subr.mxu0 0.0
    %1114 = vmatpush1.msra.mxu0 %v1079
    %1115 = vmatprep.subr.mxu0 0.0
    %1116 = vmatpush1.msra.mxu0 %v1080
    %1117 = vmatprep.subr.mxu0 0.0
    %1118 = vmatpush1.msra.mxu0 %v1081
    %1119 = vmatprep.subr.mxu0 0.0
    %1120 = vmatpush1.msra.mxu0 %v1082
    %1121 = vmatprep.subr.mxu0 0.0
    %1122 = vmatpush1.msra.mxu0 %v1083
    %1123 = vmatprep.subr.mxu0 0.0
    %1124 = vmatpush1.msra.mxu0 %v1084
    %1125 = vmatprep.subr.mxu0 0.0
    %1126 = vmatpush1.msra.mxu0 %v1085
    %1127 = vmatprep.subr.mxu0 0.0
    %1128 = vmatpush1.msra.mxu0 %v1086
    %1129 = vmatprep.subr.mxu0 0.0
    %1130 = vmatpush1.msra.mxu0 %v1087
    %1131 = vmatprep.subr.mxu0 0.0
    %1132 = vmatpush1.msra.mxu0 %v1088
    %1133 = vmatprep.subr.mxu0 0.0
    %1134 = vmatpush1.msra.mxu0 %v1089
    %1135 = vmatprep.subr.mxu0 0.0
    %1136 = vmatpush1.msra.mxu0 %v1090
    %1137 = vmatprep.subr.mxu0 0.0
    %1138 = vmatpush1.msra.mxu0 %v1091
    %1139 = vmatprep.subr.mxu0 0.0
    %1140 = vmatpush1.msra.mxu0 %v1092
    %1141 = vmatprep.subr.mxu0 0.0
    %1142 = vmatpush1.msra.mxu0 0.0
    %1143 = vmatprep.subr.mxu0 0.0
    %1144 = vmatpush1.msra.mxu0 0.0
    %1145 = vmatprep.subr.mxu0 0.0
    %1146 = vmatpush1.msra.mxu0 0.0
    %1147 = vmatprep.subr.mxu0 0.0
    %1148 = vmatpush1.msra.mxu0 0.0
    %1149 = vmatprep.subr.mxu0 0.0
    %1150 = vmatpush1.msra.mxu0 0.0
    %1151 = vmatprep.subr.mxu0 0.0
    %1152 = vmatpush1.msra.mxu0 0.0
    %1153 = vmatprep.subr.mxu0 0.0
    %1154 = vmatpush1.msra.mxu0 0.0
    %1155 = vmatprep.subr.mxu0 0.0
    %1156 = vmatpush1.msra.mxu0 0.0
    %1157 = vmatprep.subr.mxu0 0.0
    %1158 = vmatpush1.msra.mxu0 0.0
    %1159 = vmatprep.subr.mxu0 0.0
    %1160 = vmatpush1.msra.mxu0 0.0
    %1161 = vmatprep.subr.mxu0 0.0
    %1162 = vmatpush1.msra.mxu0 0.0
    %1163 = vmatprep.subr.mxu0 0.0
    %1164 = vmatpush1.msra.mxu0 0.0
    %1165 = vmatprep.subr.mxu0 0.0
    %1166 = vmatpush1.msra.mxu0 0.0
    %1167 = vmatprep.subr.mxu0 0.0
    %1168 = vmatpush1.msra.mxu0 0.0
    %1169 = vmatprep.mubr.f32.mxu0 %v1103
    %1170 = vmatmul.mubr.f32.gmra.mrb[0].mxu0 %v1098
    %v1171 = vpop.f32.mrb[0].mxu0
    %v1172 = vadd.f32 0.0, %v1171
    %v1173 = vpop.f32.mrb[0].mxu0
    %1174 = vdwg.mxu0
    %v1175 = vadd.f32 %v1073, %v1172
    %v1176 = vld [vmem:[%s4] sm:$0x1]
    %v1178 = vlaneseq
    %v1179 = vshrl.u32 %v1178, 7
    %v1180 = vsub.s32 0, %v1179
    %v1181 = vrot.slane %v1176, %v1180
    %v1183 = vadd.f32 %v1175, %v1181
    %v1184 = vmax.f32 %v1183, 0.0
    %v1186 = vrot.slane %v1184, 1
    %v1188 = vmax.f32 %v1184, %v1186
    %1190 = vrot.lane.b32.xlu0 %v1188, 120
    %v1191 = vpop.permute.xlu0 %1190
    %v1193 = vmax.f32 %v1188, %v1191
    %vm1194 = vcmask 323584
    %1195 = vst.msk [vmem:[%s8] sm:$0x1f] %vm1194, %v1193
    %v1196 = vld [vmem:[%s6] sm:$0x1]
    %v1197 = vld [vmem:[%s5] sm:$0xff]
    %v1198 = vld [vmem:[%s5 + $0x8] sm:$0xff]
    %v1199 = vld [vmem:[%s5 + $0x10] sm:$0xff]
    %v1200 = vld [vmem:[%s5 + $0x18] sm:$0xff]
    %v1201 = vld [vmem:[%s5 + $0x20] sm:$0xff]
    %vm1202 = vcmask 326656
    %v1204 = vsel %vm1202, %v1193, 0
    %1206 = vmatprep.subr.mxu0 0.0
    %1207 = vmatpush1.msra.mxu0 %v1197
    %1208 = vmatprep.subr.mxu0 0.0
    %1209 = vmatpush1.msra.mxu0 %v1198
    %1210 = vmatprep.subr.mxu0 0.0
    %1211 = vmatpush1.msra.mxu0 %v1199
    %1212 = vmatprep.subr.mxu0 0.0
    %1213 = vmatpush1.msra.mxu0 %v1200
    %1214 = vmatprep.subr.mxu0 0.0
    %1215 = vmatpush1.msra.mxu0 %v1201
    %1216 = vmatprep.subr.mxu0 0.0
    %1217 = vmatpush1.msra.mxu0 0.0
    %1218 = vmatprep.subr.mxu0 0.0
    %1219 = vmatpush1.msra.mxu0 0.0
    %1220 = vmatprep.subr.mxu0 0.0
    %1221 = vmatpush1.msra.mxu0 0.0
    %1222 = vmatprep.subr.mxu0 0.0
    %1223 = vmatpush1.msra.mxu0 0.0
    %1224 = vmatprep.subr.mxu0 0.0
    %1225 = vmatpush1.msra.mxu0 0.0
    %1226 = vmatprep.subr.mxu0 0.0
    %1227 = vmatpush1.msra.mxu0 0.0
    %1228 = vmatprep.subr.mxu0 0.0
    %1229 = vmatpush1.msra.mxu0 0.0
    %1230 = vmatprep.subr.mxu0 0.0
    %1231 = vmatpush1.msra.mxu0 0.0
    %1232 = vmatprep.subr.mxu0 0.0
    %1233 = vmatpush1.msra.mxu0 0.0
    %1234 = vmatprep.subr.mxu0 0.0
    %1235 = vmatpush1.msra.mxu0 0.0
    %1236 = vmatprep.subr.mxu0 0.0
    %1237 = vmatpush1.msra.mxu0 0.0
    %1238 = vmatprep.subr.mxu0 0.0
    %1239 = vmatpush1.msra.mxu0 0.0
    %1240 = vmatprep.subr.mxu0 0.0
    %1241 = vmatpush1.msra.mxu0 0.0
    %1242 = vmatprep.subr.mxu0 0.0
    %1243 = vmatpush1.msra.mxu0 0.0
    %1244 = vmatprep.subr.mxu0 0.0
    %1245 = vmatpush1.msra.mxu0 0.0
    %1246 = vmatprep.subr.mxu0 0.0
    %1247 = vmatpush1.msra.mxu0 0.0
    %1248 = vmatprep.subr.mxu0 0.0
    %1249 = vmatpush1.msra.mxu0 0.0
    %1250 = vmatprep.subr.mxu0 0.0
    %1251 = vmatpush1.msra.mxu0 0.0
    %1252 = vmatprep.subr.mxu0 0.0
    %1253 = vmatpush1.msra.mxu0 0.0
    %1254 = vmatprep.subr.mxu0 0.0
    %1255 = vmatpush1.msra.mxu0 0.0
    %1256 = vmatprep.subr.mxu0 0.0
    %1257 = vmatpush1.msra.mxu0 0.0
    %1258 = vmatprep.subr.mxu0 0.0
    %1259 = vmatpush1.msra.mxu0 0.0
    %1260 = vmatprep.subr.mxu0 0.0
    %1261 = vmatpush1.msra.mxu0 0.0
    %1262 = vmatprep.subr.mxu0 0.0
    %1263 = vmatpush1.msra.mxu0 0.0
    %1264 = vmatprep.subr.mxu0 0.0
    %1265 = vmatpush1.msra.mxu0 0.0
    %1266 = vmatprep.subr.mxu0 0.0
    %1267 = vmatpush1.msra.mxu0 0.0
    %1268 = vmatprep.subr.mxu0 0.0
    %1269 = vmatpush1.msra.mxu0 0.0
    %1270 = vmatprep.mubr.f32.mxu0 0.0
    %1271 = vmatmul.mubr.f32.gmra.mrb[0].mxu0 %v1204
    %v1272 = vpop.f32.mrb[0].mxu0
    %v1273 = vadd.f32 0.0, %v1272
    %v1274 = vpop.f32.mrb[0].mxu0
    %1275 = vdwg.mxu0
    %v1276 = vadd.f32 %v1196, %v1273
    %s1277 = scalar_lea.vmem %s5, 40
    %v1278 = vld [vmem:[%s1277] sm:$0xff]
    %v1279 = vld [vmem:[%s1277 + $0x8] sm:$0xff]
    %v1280 = vld [vmem:[%s1277 + $0x10] sm:$0xff]
    %v1281 = vld [vmem:[%s1277 + $0x18] sm:$0xff]
    %v1282 = vld [vmem:[%s1277 + $0x20] sm:$0xff]
    %v1283 = vrot.slane %v1193, 1
    %v1284 = vsel %vm1202, %v1283, 0
    %1286 = vmatprep.subr.mxu0 0.0
    %1287 = vmatpush1.msra.mxu0 %v1278
    %1288 = vmatprep.subr.mxu0 0.0
    %1289 = vmatpush1.msra.mxu0 %v1279
    %1290 = vmatprep.subr.mxu0 0.0
    %1291 = vmatpush1.msra.mxu0 %v1280
    %1292 = vmatprep.subr.mxu0 0.0
    %1293 = vmatpush1.msra.mxu0 %v1281
    %1294 = vmatprep.subr.mxu0 0.0
    %1295 = vmatpush1.msra.mxu0 %v1282
    %1296 = vmatprep.subr.mxu0 0.0
    %1297 = vmatpush1.msra.mxu0 0.0
    %1298 = vmatprep.subr.mxu0 0.0
    %1299 = vmatpush1.msra.mxu0 0.0
    %1300 = vmatprep.subr.mxu0 0.0
    %1301 = vmatpush1.msra.mxu0 0.0
    %1302 = vmatprep.subr.mxu0 0.0
    %1303 = vmatpush1.msra.mxu0 0.0
    %1304 = vmatprep.subr.mxu0 0.0
    %1305 = vmatpush1.msra.mxu0 0.0
    %1306 = vmatprep.subr.mxu0 0.0
    %1307 = vmatpush1.msra.mxu0 0.0
    %1308 = vmatprep.subr.mxu0 0.0
    %1309 = vmatpush1.msra.mxu0 0.0
    %1310 = vmatprep.subr.mxu0 0.0
    %1311 = vmatpush1.msra.mxu0 0.0
    %1312 = vmatprep.subr.mxu0 0.0
    %1313 = vmatpush1.msra.mxu0 0.0
    %1314 = vmatprep.subr.mxu0 0.0
    %1315 = vmatpush1.msra.mxu0 0.0
    %1316 = vmatprep.subr.mxu0 0.0
    %1317 = vmatpush1.msra.mxu0 0.0
    %1318 = vmatprep.subr.mxu0 0.0
    %1319 = vmatpush1.msra.mxu0 0.0
    %1320 = vmatprep.subr.mxu0 0.0
    %1321 = vmatpush1.msra.mxu0 0.0
    %1322 = vmatprep.subr.mxu0 0.0
    %1323 = vmatpush1.msra.mxu0 0.0
    %1324 = vmatprep.subr.mxu0 0.0
    %1325 = vmatpush1.msra.mxu0 0.0
    %1326 = vmatprep.subr.mxu0 0.0
    %1327 = vmatpush1.msra.mxu0 0.0
    %1328 = vmatprep.subr.mxu0 0.0
    %1329 = vmatpush1.msra.mxu0 0.0
    %1330 = vmatprep.subr.mxu0 0.0
    %1331 = vmatpush1.msra.mxu0 0.0
    %1332 = vmatprep.subr.mxu0 0.0
    %1333 = vmatpush1.msra.mxu0 0.0
    %1334 = vmatprep.subr.mxu0 0.0
    %1335 = vmatpush1.msra.mxu0 0.0
    %1336 = vmatprep.subr.mxu0 0.0
    %1337 = vmatpush1.msra.mxu0 0.0
    %1338 = vmatprep.subr.mxu0 0.0
    %1339 = vmatpush1.msra.mxu0 0.0
    %1340 = vmatprep.subr.mxu0 0.0
    %1341 = vmatpush1.msra.mxu0 0.0
    %1342 = vmatprep.subr.mxu0 0.0
    %1343 = vmatpush1.msra.mxu0 0.0
    %1344 = vmatprep.subr.mxu0 0.0
    %1345 = vmatpush1.msra.mxu0 0.0
    %1346 = vmatprep.subr.mxu0 0.0
    %1347 = vmatpush1.msra.mxu0 0.0
    %1348 = vmatprep.subr.mxu0 0.0
    %1349 = vmatpush1.msra.mxu0 0.0
    %1350 = vmatprep.mubr.f32.mxu0 0.0
    %1351 = vmatmul.mubr.f32.gmra.mrb[0].mxu0 %v1284
    %v1352 = vpop.f32.mrb[0].mxu0
    %v1353 = vadd.f32 0.0, %v1352
    %v1354 = vpop.f32.mrb[0].mxu0
    %1355 = vdwg.mxu0
    %v1356 = vadd.f32 %v1276, %v1353
    %s1357 = scalar_lea.vmem %s5, 80
    %v1358 = vld [vmem:[%s1357] sm:$0xff]
    %v1359 = vld [vmem:[%s1357 + $0x8] sm:$0xff]
    %v1360 = vld [vmem:[%s1357 + $0x10] sm:$0xff]
    %v1361 = vld [vmem:[%s1357 + $0x18] sm:$0xff]
    %v1362 = vld [vmem:[%s1357 + $0x20] sm:$0xff]
    %v1363 = vrot.slane %v1193, 2
    %v1364 = vsel %vm1202, %v1363, 0
    %1366 = vmatprep.subr.mxu0 0.0
    %1367 = vmatpush1.msra.mxu0 %v1358
    %1368 = vmatprep.subr.mxu0 0.0
    %1369 = vmatpush1.msra.mxu0 %v1359
    %1370 = vmatprep.subr.mxu0 0.0
    %1371 = vmatpush1.msra.mxu0 %v1360
    %1372 = vmatprep.subr.mxu0 0.0
    %1373 = vmatpush1.msra.mxu0 %v1361
    %1374 = vmatprep.subr.mxu0 0.0
    %1375 = vmatpush1.msra.mxu0 %v1362
    %1376 = vmatprep.subr.mxu0 0.0
    %1377 = vmatpush1.msra.mxu0 0.0
    %1378 = vmatprep.subr.mxu0 0.0
    %1379 = vmatpush1.msra.mxu0 0.0
    %1380 = vmatprep.subr.mxu0 0.0
    %1381 = vmatpush1.msra.mxu0 0.0
    %1382 = vmatprep.subr.mxu0 0.0
    %1383 = vmatpush1.msra.mxu0 0.0
    %1384 = vmatprep.subr.mxu0 0.0
    %1385 = vmatpush1.msra.mxu0 0.0
    %1386 = vmatprep.subr.mxu0 0.0
    %1387 = vmatpush1.msra.mxu0 0.0
    %1388 = vmatprep.subr.mxu0 0.0
    %1389 = vmatpush1.msra.mxu0 0.0
    %1390 = vmatprep.subr.mxu0 0.0
    %1391 = vmatpush1.msra.mxu0 0.0
    %1392 = vmatprep.subr.mxu0 0.0
    %1393 = vmatpush1.msra.mxu0 0.0
    %1394 = vmatprep.subr.mxu0 0.0
    %1395 = vmatpush1.msra.mxu0 0.0
    %1396 = vmatprep.subr.mxu0 0.0
    %1397 = vmatpush1.msra.mxu0 0.0
    %1398 = vmatprep.subr.mxu0 0.0
    %1399 = vmatpush1.msra.mxu0 0.0
    %1400 = vmatprep.subr.mxu0 0.0
    %1401 = vmatpush1.msra.mxu0 0.0
    %1402 = vmatprep.subr.mxu0 0.0
    %1403 = vmatpush1.msra.mxu0 0.0
    %1404 = vmatprep.subr.mxu0 0.0
    %1405 = vmatpush1.msra.mxu0 0.0
    %1406 = vmatprep.subr.mxu0 0.0
    %1407 = vmatpush1.msra.mxu0 0.0
    %1408 = vmatprep.subr.mxu0 0.0
    %1409 = vmatpush1.msra.mxu0 0.0
    %1410 = vmatprep.subr.mxu0 0.0
    %1411 = vmatpush1.msra.mxu0 0.0
    %1412 = vmatprep.subr.mxu0 0.0
    %1413 = vmatpush1.msra.mxu0 0.0
    %1414 = vmatprep.subr.mxu0 0.0
    %1415 = vmatpush1.msra.mxu0 0.0
    %1416 = vmatprep.subr.mxu0 0.0
    %1417 = vmatpush1.msra.mxu0 0.0
    %1418 = vmatprep.subr.mxu0 0.0
    %1419 = vmatpush1.msra.mxu0 0.0
    %1420 = vmatprep.subr.mxu0 0.0
    %1421 = vmatpush1.msra.mxu0 0.0
    %1422 = vmatprep.subr.mxu0 0.0
    %1423 = vmatpush1.msra.mxu0 0.0
    %1424 = vmatprep.subr.mxu0 0.0
    %1425 = vmatpush1.msra.mxu0 0.0
    %1426 = vmatprep.subr.mxu0 0.0
    %1427 = vmatpush1.msra.mxu0 0.0
    %1428 = vmatprep.subr.mxu0 0.0
    %1429 = vmatpush1.msra.mxu0 0.0
    %1430 = vmatprep.mubr.f32.mxu0 0.0
    %1431 = vmatmul.mubr.f32.gmra.mrb[0].mxu0 %v1364
    %v1432 = vpop.f32.mrb[0].mxu0
    %v1433 = vadd.f32 0.0, %v1432
    %v1434 = vpop.f32.mrb[0].mxu0
    %1435 = vdwg.mxu0
    %v1436 = vadd.f32 %v1356, %v1433
    %s1437 = scalar_lea.vmem %s5, 120
    %v1438 = vld [vmem:[%s1437] sm:$0xff]
    %v1439 = vld [vmem:[%s1437 + $0x8] sm:$0xff]
    %v1440 = vld [vmem:[%s1437 + $0x10] sm:$0xff]
    %v1441 = vld [vmem:[%s1437 + $0x18] sm:$0xff]
    %v1442 = vld [vmem:[%s1437 + $0x20] sm:$0xff]
    %v1443 = vrot.slane %v1193, 3
    %v1444 = vsel %vm1202, %v1443, 0
    %1446 = vmatprep.subr.mxu0 0.0
    %1447 = vmatpush1.msra.mxu0 %v1438
    %1448 = vmatprep.subr.mxu0 0.0
    %1449 = vmatpush1.msra.mxu0 %v1439
    %1450 = vmatprep.subr.mxu0 0.0
    %1451 = vmatpush1.msra.mxu0 %v1440
    %1452 = vmatprep.subr.mxu0 0.0
    %1453 = vmatpush1.msra.mxu0 %v1441
    %1454 = vmatprep.subr.mxu0 0.0
    %1455 = vmatpush1.msra.mxu0 %v1442
    %1456 = vmatprep.subr.mxu0 0.0
    %1457 = vmatpush1.msra.mxu0 0.0
    %1458 = vmatprep.subr.mxu0 0.0
    %1459 = vmatpush1.msra.mxu0 0.0
    %1460 = vmatprep.subr.mxu0 0.0
    %1461 = vmatpush1.msra.mxu0 0.0
    %1462 = vmatprep.subr.mxu0 0.0
    %1463 = vmatpush1.msra.mxu0 0.0
    %1464 = vmatprep.subr.mxu0 0.0
    %1465 = vmatpush1.msra.mxu0 0.0
    %1466 = vmatprep.subr.mxu0 0.0
    %1467 = vmatpush1.msra.mxu0 0.0
    %1468 = vmatprep.subr.mxu0 0.0
    %1469 = vmatpush1.msra.mxu0 0.0
    %1470 = vmatprep.subr.mxu0 0.0
    %1471 = vmatpush1.msra.mxu0 0.0
    %1472 = vmatprep.subr.mxu0 0.0
    %1473 = vmatpush1.msra.mxu0 0.0
    %1474 = vmatprep.subr.mxu0 0.0
    %1475 = vmatpush1.msra.mxu0 0.0
    %1476 = vmatprep.subr.mxu0 0.0
    %1477 = vmatpush1.msra.mxu0 0.0
    %1478 = vmatprep.subr.mxu0 0.0
    %1479 = vmatpush1.msra.mxu0 0.0
    %1480 = vmatprep.subr.mxu0 0.0
    %1481 = vmatpush1.msra.mxu0 0.0
    %1482 = vmatprep.subr.mxu0 0.0
    %1483 = vmatpush1.msra.mxu0 0.0
    %1484 = vmatprep.subr.mxu0 0.0
    %1485 = vmatpush1.msra.mxu0 0.0
    %1486 = vmatprep.subr.mxu0 0.0
    %1487 = vmatpush1.msra.mxu0 0.0
    %1488 = vmatprep.subr.mxu0 0.0
    %1489 = vmatpush1.msra.mxu0 0.0
    %1490 = vmatprep.subr.mxu0 0.0
    %1491 = vmatpush1.msra.mxu0 0.0
    %1492 = vmatprep.subr.mxu0 0.0
    %1493 = vmatpush1.msra.mxu0 0.0
    %1494 = vmatprep.subr.mxu0 0.0
    %1495 = vmatpush1.msra.mxu0 0.0
    %1496 = vmatprep.subr.mxu0 0.0
    %1497 = vmatpush1.msra.mxu0 0.0
    %1498 = vmatprep.subr.mxu0 0.0
    %1499 = vmatpush1.msra.mxu0 0.0
    %1500 = vmatprep.subr.mxu0 0.0
    %1501 = vmatpush1.msra.mxu0 0.0
    %1502 = vmatprep.subr.mxu0 0.0
    %1503 = vmatpush1.msra.mxu0 0.0
    %1504 = vmatprep.subr.mxu0 0.0
    %1505 = vmatpush1.msra.mxu0 0.0
    %1506 = vmatprep.subr.mxu0 0.0
    %1507 = vmatpush1.msra.mxu0 0.0
    %1508 = vmatprep.subr.mxu0 0.0
    %1509 = vmatpush1.msra.mxu0 0.0
    %1510 = vmatprep.mubr.f32.mxu0 0.0
    %1511 = vmatmul.mubr.f32.gmra.mrb[0].mxu0 %v1444
    %v1512 = vpop.f32.mrb[0].mxu0
    %v1513 = vadd.f32 0.0, %v1512
    %v1514 = vpop.f32.mrb[0].mxu0
    %1515 = vdwg.mxu0
    %v1516 = vadd.f32 %v1436, %v1513
    %s1517 = scalar_lea.vmem %s5, 160
    %v1518 = vld [vmem:[%s1517] sm:$0xff]
    %v1519 = vld [vmem:[%s1517 + $0x8] sm:$0xff]
    %v1520 = vld [vmem:[%s1517 + $0x10] sm:$0xff]
    %v1521 = vld [vmem:[%s1517 + $0x18] sm:$0xff]
    %v1522 = vld [vmem:[%s1517 + $0x20] sm:$0xff]
    %v1523 = vrot.slane %v1193, 4
    %v1524 = vsel %vm1202, %v1523, 0
    %1526 = vmatprep.subr.mxu0 0.0
    %1527 = vmatpush1.msra.mxu0 %v1518
    %1528 = vmatprep.subr.mxu0 0.0
    %1529 = vmatpush1.msra.mxu0 %v1519
    %1530 = vmatprep.subr.mxu0 0.0
    %1531 = vmatpush1.msra.mxu0 %v1520
    %1532 = vmatprep.subr.mxu0 0.0
    %1533 = vmatpush1.msra.mxu0 %v1521
    %1534 = vmatprep.subr.mxu0 0.0
    %1535 = vmatpush1.msra.mxu0 %v1522
    %1536 = vmatprep.subr.mxu0 0.0
    %1537 = vmatpush1.msra.mxu0 0.0
    %1538 = vmatprep.subr.mxu0 0.0
    %1539 = vmatpush1.msra.mxu0 0.0
    %1540 = vmatprep.subr.mxu0 0.0
    %1541 = vmatpush1.msra.mxu0 0.0
    %1542 = vmatprep.subr.mxu0 0.0
    %1543 = vmatpush1.msra.mxu0 0.0
    %1544 = vmatprep.subr.mxu0 0.0
    %1545 = vmatpush1.msra.mxu0 0.0
    %1546 = vmatprep.subr.mxu0 0.0
    %1547 = vmatpush1.msra.mxu0 0.0
    %1548 = vmatprep.subr.mxu0 0.0
    %1549 = vmatpush1.msra.mxu0 0.0
    %1550 = vmatprep.subr.mxu0 0.0
    %1551 = vmatpush1.msra.mxu0 0.0
    %1552 = vmatprep.subr.mxu0 0.0
    %1553 = vmatpush1.msra.mxu0 0.0
    %1554 = vmatprep.subr.mxu0 0.0
    %1555 = vmatpush1.msra.mxu0 0.0
    %1556 = vmatprep.subr.mxu0 0.0
    %1557 = vmatpush1.msra.mxu0 0.0
    %1558 = vmatprep.subr.mxu0 0.0
    %1559 = vmatpush1.msra.mxu0 0.0
    %1560 = vmatprep.subr.mxu0 0.0
    %1561 = vmatpush1.msra.mxu0 0.0
    %1562 = vmatprep.subr.mxu0 0.0
    %1563 = vmatpush1.msra.mxu0 0.0
    %1564 = vmatprep.subr.mxu0 0.0
    %1565 = vmatpush1.msra.mxu0 0.0
    %1566 = vmatprep.subr.mxu0 0.0
    %1567 = vmatpush1.msra.mxu0 0.0
    %1568 = vmatprep.subr.mxu0 0.0
    %1569 = vmatpush1.msra.mxu0 0.0
    %1570 = vmatprep.subr.mxu0 0.0
    %1571 = vmatpush1.msra.mxu0 0.0
    %1572 = vmatprep.subr.mxu0 0.0
    %1573 = vmatpush1.msra.mxu0 0.0
    %1574 = vmatprep.subr.mxu0 0.0
    %1575 = vmatpush1.msra.mxu0 0.0
    %1576 = vmatprep.subr.mxu0 0.0
    %1577 = vmatpush1.msra.mxu0 0.0
    %1578 = vmatprep.subr.mxu0 0.0
    %1579 = vmatpush1.msra.mxu0 0.0
    %1580 = vmatprep.subr.mxu0 0.0
    %1581 = vmatpush1.msra.mxu0 0.0
    %1582 = vmatprep.subr.mxu0 0.0
    %1583 = vmatpush1.msra.mxu0 0.0
    %1584 = vmatprep.subr.mxu0 0.0
    %1585 = vmatpush1.msra.mxu0 0.0
    %1586 = vmatprep.subr.mxu0 0.0
    %1587 = vmatpush1.msra.mxu0 0.0
    %1588 = vmatprep.subr.mxu0 0.0
    %1589 = vmatpush1.msra.mxu0 0.0
    %1590 = vmatprep.mubr.f32.mxu0 0.0
    %1591 = vmatmul.mubr.f32.gmra.mrb[0].mxu0 %v1524
    %v1592 = vpop.f32.mrb[0].mxu0
    %v1593 = vadd.f32 0.0, %v1592
    %v1594 = vpop.f32.mrb[0].mxu0
    %1595 = vdwg.mxu0
    %v1596 = vadd.f32 %v1516, %v1593
    %vm1597 = vcmask 73728
    %1598 = vst.msk [vmem:[#allocation2] sm:$0x1] %vm1597, %v1596
    %s1599 = scalar_lea.vmem %s0, 16
    %v1600 = vld [vmem:[%s1599] sm:$0xff]
    %v1601 = vld [vmem:[%s1599 + $0x8] sm:$0x1]
    %v1602 = vld [vmem:[%s1] sm:$0xff]
    %v1603 = vld [vmem:[%s1 + $0x8] sm:$0xff]
    %v1604 = vld [vmem:[%s1 + $0x10] sm:$0xff]
    %v1605 = vld [vmem:[%s1 + $0x18] sm:$0xff]
    %v1606 = vld [vmem:[%s1599 + $0x1] sm:$0xff]
    %v1607 = vld [vmem:[%s1599 + $0x9] sm:$0x1]
    %v1608 = vld [vmem:[%s37] sm:$0xff]
    %v1609 = vld [vmem:[%s37 + $0x8] sm:$0xff]
    %v1610 = vld [vmem:[%s37 + $0x10] sm:$0xff]
    %v1611 = vld [vmem:[%s37 + $0x18] sm:$0xff]
    %v1613 = vsel %vm42, %v1606, 0
    %v1616 = vsel %vm42, %v1607, 0
    %1618 = vmatprep.subr.mxu0 %v1609
    %1619 = vmatpush1.msra.mxu0 %v1608
    %1620 = vmatprep.subr.mxu0 %v1611
    %1621 = vmatpush1.msra.mxu0 %v1610
    %1622 = vmatprep.subr.mxu0 0.0
    %1623 = vmatpush1.msra.mxu0 0.0
    %1624 = vmatprep.subr.mxu0 0.0
    %1625 = vmatpush1.msra.mxu0 0.0
    %1626 = vmatprep.subr.mxu0 0.0
    %1627 = vmatpush1.msra.mxu0 0.0
    %1628 = vmatprep.subr.mxu0 0.0
    %1629 = vmatpush1.msra.mxu0 0.0
    %1630 = vmatprep.subr.mxu0 0.0
    %1631 = vmatpush1.msra.mxu0 0.0
    %1632 = vmatprep.subr.mxu0 0.0
    %1633 = vmatpush1.msra.mxu0 0.0
    %1634 = vmatprep.subr.mxu0 0.0
    %1635 = vmatpush1.msra.mxu0 0.0
    %1636 = vmatprep.subr.mxu0 0.0
    %1637 = vmatpush1.msra.mxu0 0.0
    %1638 = vmatprep.subr.mxu0 0.0
    %1639 = vmatpush1.msra.mxu0 0.0
    %1640 = vmatprep.subr.mxu0 0.0
    %1641 = vmatpush1.msra.mxu0 0.0
    %1642 = vmatprep.subr.mxu0 0.0
    %1643 = vmatpush1.msra.mxu0 0.0
    %1644 = vmatprep.subr.mxu0 0.0
    %1645 = vmatpush1.msra.mxu0 0.0
    %1646 = vmatprep.subr.mxu0 0.0
    %1647 = vmatpush1.msra.mxu0 0.0
    %1648 = vmatprep.subr.mxu0 0.0
    %1649 = vmatpush1.msra.mxu0 0.0
    %1650 = vmatprep.subr.mxu0 0.0
    %1651 = vmatpush1.msra.mxu0 0.0
    %1652 = vmatprep.subr.mxu0 0.0
    %1653 = vmatpush1.msra.mxu0 0.0
    %1654 = vmatprep.subr.mxu0 0.0
    %1655 = vmatpush1.msra.mxu0 0.0
    %1656 = vmatprep.subr.mxu0 0.0
    %1657 = vmatpush1.msra.mxu0 0.0
    %1658 = vmatprep.subr.mxu0 0.0
    %1659 = vmatpush1.msra.mxu0 0.0
    %1660 = vmatprep.subr.mxu0 0.0
    %1661 = vmatpush1.msra.mxu0 0.0
    %1662 = vmatprep.subr.mxu0 0.0
    %1663 = vmatpush1.msra.mxu0 0.0
    %1664 = vmatprep.subr.mxu0 0.0
    %1665 = vmatpush1.msra.mxu0 0.0
    %1666 = vmatprep.subr.mxu0 0.0
    %1667 = vmatpush1.msra.mxu0 0.0
    %1668 = vmatprep.subr.mxu0 0.0
    %1669 = vmatpush1.msra.mxu0 0.0
    %1670 = vmatprep.subr.mxu0 0.0
    %1671 = vmatpush1.msra.mxu0 0.0
    %1672 = vmatprep.subr.mxu0 0.0
    %1673 = vmatpush1.msra.mxu0 0.0
    %1674 = vmatprep.subr.mxu0 0.0
    %1675 = vmatpush1.msra.mxu0 0.0
    %1676 = vmatprep.subr.mxu0 0.0
    %1677 = vmatpush1.msra.mxu0 0.0
    %1678 = vmatprep.subr.mxu0 0.0
    %1679 = vmatpush1.msra.mxu0 0.0
    %1680 = vmatprep.subr.mxu0 0.0
    %1681 = vmatpush1.msra.mxu0 0.0
    %1682 = vmatprep.mubr.f32.mxu0 0.0
    %1683 = vmatmul.mubr.f32.gmra.mrb[0].mxu0 %v1613
    %v1684 = vpop.f32.mrb[0].mxu0
    %v1685 = vadd.f32 0.0, %v1684
    %v1686 = vpop.f32.mrb[0].mxu0
    %v1687 = vadd.f32 0.0, %v1686
    %1688 = vmatprep.mubr.f32.mxu0 0.0
    %1689 = vmatmul.mubr.f32.gmra.mrb[0].mxu0 %v1616
    %v1690 = vpop.f32.mrb[0].mxu0
    %v1691 = vadd.f32 0.0, %v1690
    %v1692 = vpop.f32.mrb[0].mxu0
    %v1693 = vadd.f32 0.0, %v1692
    %1694 = vdwg.mxu0
    %v1696 = vsel %vm42, %v1600, 0
    %v1699 = vsel %vm42, %v1601, 0
    %1701 = vmatprep.subr.mxu0 %v1603
    %1702 = vmatpush1.msra.mxu0 %v1602
    %1703 = vmatprep.subr.mxu0 %v1605
    %1704 = vmatpush1.msra.mxu0 %v1604
    %1705 = vmatprep.subr.mxu0 0.0
    %1706 = vmatpush1.msra.mxu0 0.0
    %1707 = vmatprep.subr.mxu0 0.0
    %1708 = vmatpush1.msra.mxu0 0.0
    %1709 = vmatprep.subr.mxu0 0.0
    %1710 = vmatpush1.msra.mxu0 0.0
    %1711 = vmatprep.subr.mxu0 0.0
    %1712 = vmatpush1.msra.mxu0 0.0
    %1713 = vmatprep.subr.mxu0 0.0
    %1714 = vmatpush1.msra.mxu0 0.0
    %1715 = vmatprep.subr.mxu0 0.0
    %1716 = vmatpush1.msra.mxu0 0.0
    %1717 = vmatprep.subr.mxu0 0.0
    %1718 = vmatpush1.msra.mxu0 0.0
    %1719 = vmatprep.subr.mxu0 0.0
    %1720 = vmatpush1.msra.mxu0 0.0
    %1721 = vmatprep.subr.mxu0 0.0
    %1722 = vmatpush1.msra.mxu0 0.0
    %1723 = vmatprep.subr.mxu0 0.0
    %1724 = vmatpush1.msra.mxu0 0.0
    %1725 = vmatprep.subr.mxu0 0.0
    %1726 = vmatpush1.msra.mxu0 0.0
    %1727 = vmatprep.subr.mxu0 0.0
    %1728 = vmatpush1.msra.mxu0 0.0
    %1729 = vmatprep.subr.mxu0 0.0
    %1730 = vmatpush1.msra.mxu0 0.0
    %1731 = vmatprep.subr.mxu0 0.0
    %1732 = vmatpush1.msra.mxu0 0.0
    %1733 = vmatprep.subr.mxu0 0.0
    %1734 = vmatpush1.msra.mxu0 0.0
    %1735 = vmatprep.subr.mxu0 0.0
    %1736 = vmatpush1.msra.mxu0 0.0
    %1737 = vmatprep.subr.mxu0 0.0
    %1738 = vmatpush1.msra.mxu0 0.0
    %1739 = vmatprep.subr.mxu0 0.0
    %1740 = vmatpush1.msra.mxu0 0.0
    %1741 = vmatprep.subr.mxu0 0.0
    %1742 = vmatpush1.msra.mxu0 0.0
    %1743 = vmatprep.subr.mxu0 0.0
    %1744 = vmatpush1.msra.mxu0 0.0
    %1745 = vmatprep.subr.mxu0 0.0
    %1746 = vmatpush1.msra.mxu0 0.0
    %1747 = vmatprep.subr.mxu0 0.0
    %1748 = vmatpush1.msra.mxu0 0.0
    %1749 = vmatprep.subr.mxu0 0.0
    %1750 = vmatpush1.msra.mxu0 0.0
    %1751 = vmatprep.subr.mxu0 0.0
    %1752 = vmatpush1.msra.mxu0 0.0
    %1753 = vmatprep.subr.mxu0 0.0
    %1754 = vmatpush1.msra.mxu0 0.0
    %1755 = vmatprep.subr.mxu0 0.0
    %1756 = vmatpush1.msra.mxu0 0.0
    %1757 = vmatprep.subr.mxu0 0.0
    %1758 = vmatpush1.msra.mxu0 0.0
    %1759 = vmatprep.subr.mxu0 0.0
    %1760 = vmatpush1.msra.mxu0 0.0
    %1761 = vmatprep.subr.mxu0 0.0
    %1762 = vmatpush1.msra.mxu0 0.0
    %1763 = vmatprep.subr.mxu0 0.0
    %1764 = vmatpush1.msra.mxu0 0.0
    %1765 = vmatprep.mubr.f32.mxu0 0.0
    %1766 = vmatmul.mubr.f32.gmra.mrb[0].mxu0 %v1696
    %v1767 = vpop.f32.mrb[0].mxu0
    %v1768 = vadd.f32 %v1685, %v1767
    %v1769 = vpop.f32.mrb[0].mxu0
    %v1770 = vadd.f32 %v1687, %v1769
    %1771 = vmatprep.mubr.f32.mxu0 0.0
    %1772 = vmatmul.mubr.f32.gmra.mrb[0].mxu0 %v1699
    %v1773 = vpop.f32.mrb[0].mxu0
    %v1774 = vadd.f32 %v1691, %v1773
    %v1775 = vpop.f32.mrb[0].mxu0
    %v1776 = vadd.f32 %v1693, %v1775
    %1777 = vdwg.mxu0
    %v1778 = vld [vmem:[%s1599 + $0x2] sm:$0xff]
    %v1779 = vld [vmem:[%s1599 + $0xa] sm:$0x1]
    %v1780 = vld [vmem:[%s211] sm:$0xff]
    %v1781 = vld [vmem:[%s211 + $0x8] sm:$0xff]
    %v1782 = vld [vmem:[%s211 + $0x10] sm:$0xff]
    %v1783 = vld [vmem:[%s211 + $0x18] sm:$0xff]
    %v1785 = vsel %vm42, %v1778, 0
    %v1788 = vsel %vm42, %v1779, 0
    %1790 = vmatprep.subr.mxu0 %v1781
    %1791 = vmatpush1.msra.mxu0 %v1780
    %1792 = vmatprep.subr.mxu0 %v1783
    %1793 = vmatpush1.msra.mxu0 %v1782
    %1794 = vmatprep.subr.mxu0 0.0
    %1795 = vmatpush1.msra.mxu0 0.0
    %1796 = vmatprep.subr.mxu0 0.0
    %1797 = vmatpush1.msra.mxu0 0.0
    %1798 = vmatprep.subr.mxu0 0.0
    %1799 = vmatpush1.msra.mxu0 0.0
    %1800 = vmatprep.subr.mxu0 0.0
    %1801 = vmatpush1.msra.mxu0 0.0
    %1802 = vmatprep.subr.mxu0 0.0
    %1803 = vmatpush1.msra.mxu0 0.0
    %1804 = vmatprep.subr.mxu0 0.0
    %1805 = vmatpush1.msra.mxu0 0.0
    %1806 = vmatprep.subr.mxu0 0.0
    %1807 = vmatpush1.msra.mxu0 0.0
    %1808 = vmatprep.subr.mxu0 0.0
    %1809 = vmatpush1.msra.mxu0 0.0
    %1810 = vmatprep.subr.mxu0 0.0
    %1811 = vmatpush1.msra.mxu0 0.0
    %1812 = vmatprep.subr.mxu0 0.0
    %1813 = vmatpush1.msra.mxu0 0.0
    %1814 = vmatprep.subr.mxu0 0.0
    %1815 = vmatpush1.msra.mxu0 0.0
    %1816 = vmatprep.subr.mxu0 0.0
    %1817 = vmatpush1.msra.mxu0 0.0
    %1818 = vmatprep.subr.mxu0 0.0
    %1819 = vmatpush1.msra.mxu0 0.0
    %1820 = vmatprep.subr.mxu0 0.0
    %1821 = vmatpush1.msra.mxu0 0.0
    %1822 = vmatprep.subr.mxu0 0.0
    %1823 = vmatpush1.msra.mxu0 0.0
    %1824 = vmatprep.subr.mxu0 0.0
    %1825 = vmatpush1.msra.mxu0 0.0
    %1826 = vmatprep.subr.mxu0 0.0
    %1827 = vmatpush1.msra.mxu0 0.0
    %1828 = vmatprep.subr.mxu0 0.0
    %1829 = vmatpush1.msra.mxu0 0.0
    %1830 = vmatprep.subr.mxu0 0.0
    %1831 = vmatpush1.msra.mxu0 0.0
    %1832 = vmatprep.subr.mxu0 0.0
    %1833 = vmatpush1.msra.mxu0 0.0
    %1834 = vmatprep.subr.mxu0 0.0
    %1835 = vmatpush1.msra.mxu0 0.0
    %1836 = vmatprep.subr.mxu0 0.0
    %1837 = vmatpush1.msra.mxu0 0.0
    %1838 = vmatprep.subr.mxu0 0.0
    %1839 = vmatpush1.msra.mxu0 0.0
    %1840 = vmatprep.subr.mxu0 0.0
    %1841 = vmatpush1.msra.mxu0 0.0
    %1842 = vmatprep.subr.mxu0 0.0
    %1843 = vmatpush1.msra.mxu0 0.0
    %1844 = vmatprep.subr.mxu0 0.0
    %1845 = vmatpush1.msra.mxu0 0.0
    %1846 = vmatprep.subr.mxu0 0.0
    %1847 = vmatpush1.msra.mxu0 0.0
    %1848 = vmatprep.subr.mxu0 0.0
    %1849 = vmatpush1.msra.mxu0 0.0
    %1850 = vmatprep.subr.mxu0 0.0
    %1851 = vmatpush1.msra.mxu0 0.0
    %1852 = vmatprep.subr.mxu0 0.0
    %1853 = vmatpush1.msra.mxu0 0.0
    %1854 = vmatprep.mubr.f32.mxu0 0.0
    %1855 = vmatmul.mubr.f32.gmra.mrb[0].mxu0 %v1785
    %v1856 = vpop.f32.mrb[0].mxu0
    %v1857 = vadd.f32 0.0, %v1856
    %v1858 = vpop.f32.mrb[0].mxu0
    %v1859 = vadd.f32 0.0, %v1858
    %1860 = vmatprep.mubr.f32.mxu0 0.0
    %1861 = vmatmul.mubr.f32.gmra.mrb[0].mxu0 %v1788
    %v1862 = vpop.f32.mrb[0].mxu0
    %v1863 = vadd.f32 0.0, %v1862
    %v1864 = vpop.f32.mrb[0].mxu0
    %v1865 = vadd.f32 0.0, %v1864
    %1866 = vdwg.mxu0
    %v1867 = vadd.f32 %v1768, %v1857
    %v1868 = vadd.f32 %v1770, %v1859
    %v1869 = vadd.f32 %v1774, %v1863
    %v1870 = vadd.f32 %v1776, %v1865
    %v1871 = vld [vmem:[%s1599 + $0x3] sm:$0xff]
    %v1872 = vld [vmem:[%s1599 + $0xb] sm:$0x1]
    %v1873 = vld [vmem:[%s305] sm:$0xff]
    %v1874 = vld [vmem:[%s305 + $0x8] sm:$0xff]
    %v1875 = vld [vmem:[%s305 + $0x10] sm:$0xff]
    %v1876 = vld [vmem:[%s305 + $0x18] sm:$0xff]
    %v1878 = vsel %vm42, %v1871, 0
    %v1881 = vsel %vm42, %v1872, 0
    %1883 = vmatprep.subr.mxu0 %v1874
    %1884 = vmatpush1.msra.mxu0 %v1873
    %1885 = vmatprep.subr.mxu0 %v1876
    %1886 = vmatpush1.msra.mxu0 %v1875
    %1887 = vmatprep.subr.mxu0 0.0
    %1888 = vmatpush1.msra.mxu0 0.0
    %1889 = vmatprep.subr.mxu0 0.0
    %1890 = vmatpush1.msra.mxu0 0.0
    %1891 = vmatprep.subr.mxu0 0.0
    %1892 = vmatpush1.msra.mxu0 0.0
    %1893 = vmatprep.subr.mxu0 0.0
    %1894 = vmatpush1.msra.mxu0 0.0
    %1895 = vmatprep.subr.mxu0 0.0
    %1896 = vmatpush1.msra.mxu0 0.0
    %1897 = vmatprep.subr.mxu0 0.0
    %1898 = vmatpush1.msra.mxu0 0.0
    %1899 = vmatprep.subr.mxu0 0.0
    %1900 = vmatpush1.msra.mxu0 0.0
    %1901 = vmatprep.subr.mxu0 0.0
    %1902 = vmatpush1.msra.mxu0 0.0
    %1903 = vmatprep.subr.mxu0 0.0
    %1904 = vmatpush1.msra.mxu0 0.0
    %1905 = vmatprep.subr.mxu0 0.0
    %1906 = vmatpush1.msra.mxu0 0.0
    %1907 = vmatprep.subr.mxu0 0.0
    %1908 = vmatpush1.msra.mxu0 0.0
    %1909 = vmatprep.subr.mxu0 0.0
    %1910 = vmatpush1.msra.mxu0 0.0
    %1911 = vmatprep.subr.mxu0 0.0
    %1912 = vmatpush1.msra.mxu0 0.0
    %1913 = vmatprep.subr.mxu0 0.0
    %1914 = vmatpush1.msra.mxu0 0.0
    %1915 = vmatprep.subr.mxu0 0.0
    %1916 = vmatpush1.msra.mxu0 0.0
    %1917 = vmatprep.subr.mxu0 0.0
    %1918 = vmatpush1.msra.mxu0 0.0
    %1919 = vmatprep.subr.mxu0 0.0
    %1920 = vmatpush1.msra.mxu0 0.0
    %1921 = vmatprep.subr.mxu0 0.0
    %1922 = vmatpush1.msra.mxu0 0.0
    %1923 = vmatprep.subr.mxu0 0.0
    %1924 = vmatpush1.msra.mxu0 0.0
    %1925 = vmatprep.subr.mxu0 0.0
    %1926 = vmatpush1.msra.mxu0 0.0
    %1927 = vmatprep.subr.mxu0 0.0
    %1928 = vmatpush1.msra.mxu0 0.0
    %1929 = vmatprep.subr.mxu0 0.0
    %1930 = vmatpush1.msra.mxu0 0.0
    %1931 = vmatprep.subr.mxu0 0.0
    %1932 = vmatpush1.msra.mxu0 0.0
    %1933 = vmatprep.subr.mxu0 0.0
    %1934 = vmatpush1.msra.mxu0 0.0
    %1935 = vmatprep.subr.mxu0 0.0
    %1936 = vmatpush1.msra.mxu0 0.0
    %1937 = vmatprep.subr.mxu0 0.0
    %1938 = vmatpush1.msra.mxu0 0.0
    %1939 = vmatprep.subr.mxu0 0.0
    %1940 = vmatpush1.msra.mxu0 0.0
    %1941 = vmatprep.subr.mxu0 0.0
    %1942 = vmatpush1.msra.mxu0 0.0
    %1943 = vmatprep.subr.mxu0 0.0
    %1944 = vmatpush1.msra.mxu0 0.0
    %1945 = vmatprep.subr.mxu0 0.0
    %1946 = vmatpush1.msra.mxu0 0.0
    %1947 = vmatprep.mubr.f32.mxu0 0.0
    %1948 = vmatmul.mubr.f32.gmra.mrb[0].mxu0 %v1878
    %v1949 = vpop.f32.mrb[0].mxu0
    %v1950 = vadd.f32 0.0, %v1949
    %v1951 = vpop.f32.mrb[0].mxu0
    %v1952 = vadd.f32 0.0, %v1951
    %1953 = vmatprep.mubr.f32.mxu0 0.0
    %1954 = vmatmul.mubr.f32.gmra.mrb[0].mxu0 %v1881
    %v1955 = vpop.f32.mrb[0].mxu0
    %v1956 = vadd.f32 0.0, %v1955
    %v1957 = vpop.f32.mrb[0].mxu0
    %v1958 = vadd.f32 0.0, %v1957
    %1959 = vdwg.mxu0
    %v1960 = vadd.f32 %v1867, %v1950
    %v1961 = vadd.f32 %v1868, %v1952
    %v1962 = vadd.f32 %v1869, %v1956
    %v1963 = vadd.f32 %v1870, %v1958
    %v1964 = vld [vmem:[%s1599 + $0x4] sm:$0xff]
    %v1965 = vld [vmem:[%s1599 + $0xc] sm:$0x1]
    %v1966 = vld [vmem:[%s399] sm:$0xff]
    %v1967 = vld [vmem:[%s399 + $0x8] sm:$0xff]
    %v1968 = vld [vmem:[%s399 + $0x10] sm:$0xff]
    %v1969 = vld [vmem:[%s399 + $0x18] sm:$0xff]
    %v1971 = vsel %vm42, %v1964, 0
    %v1974 = vsel %vm42, %v1965, 0
    %1976 = vmatprep.subr.mxu0 %v1967
    %1977 = vmatpush1.msra.mxu0 %v1966
    %1978 = vmatprep.subr.mxu0 %v1969
    %1979 = vmatpush1.msra.mxu0 %v1968
    %1980 = vmatprep.subr.mxu0 0.0
    %1981 = vmatpush1.msra.mxu0 0.0
    %1982 = vmatprep.subr.mxu0 0.0
    %1983 = vmatpush1.msra.mxu0 0.0
    %1984 = vmatprep.subr.mxu0 0.0
    %1985 = vmatpush1.msra.mxu0 0.0
    %1986 = vmatprep.subr.mxu0 0.0
    %1987 = vmatpush1.msra.mxu0 0.0
    %1988 = vmatprep.subr.mxu0 0.0
    %1989 = vmatpush1.msra.mxu0 0.0
    %1990 = vmatprep.subr.mxu0 0.0
    %1991 = vmatpush1.msra.mxu0 0.0
    %1992 = vmatprep.subr.mxu0 0.0
    %1993 = vmatpush1.msra.mxu0 0.0
    %1994 = vmatprep.subr.mxu0 0.0
    %1995 = vmatpush1.msra.mxu0 0.0
    %1996 = vmatprep.subr.mxu0 0.0
    %1997 = vmatpush1.msra.mxu0 0.0
    %1998 = vmatprep.subr.mxu0 0.0
    %1999 = vmatpush1.msra.mxu0 0.0
    %2000 = vmatprep.subr.mxu0 0.0
    %2001 = vmatpush1.msra.mxu0 0.0
    %2002 = vmatprep.subr.mxu0 0.0
    %2003 = vmatpush1.msra.mxu0 0.0
    %2004 = vmatprep.subr.mxu0 0.0
    %2005 = vmatpush1.msra.mxu0 0.0
    %2006 = vmatprep.subr.mxu0 0.0
    %2007 = vmatpush1.msra.mxu0 0.0
    %2008 = vmatprep.subr.mxu0 0.0
    %2009 = vmatpush1.msra.mxu0 0.0
    %2010 = vmatprep.subr.mxu0 0.0
    %2011 = vmatpush1.msra.mxu0 0.0
    %2012 = vmatprep.subr.mxu0 0.0
    %2013 = vmatpush1.msra.mxu0 0.0
    %2014 = vmatprep.subr.mxu0 0.0
    %2015 = vmatpush1.msra.mxu0 0.0
    %2016 = vmatprep.subr.mxu0 0.0
    %2017 = vmatpush1.msra.mxu0 0.0
    %2018 = vmatprep.subr.mxu0 0.0
    %2019 = vmatpush1.msra.mxu0 0.0
    %2020 = vmatprep.subr.mxu0 0.0
    %2021 = vmatpush1.msra.mxu0 0.0
    %2022 = vmatprep.subr.mxu0 0.0
    %2023 = vmatpush1.msra.mxu0 0.0
    %2024 = vmatprep.subr.mxu0 0.0
    %2025 = vmatpush1.msra.mxu0 0.0
    %2026 = vmatprep.subr.mxu0 0.0
    %2027 = vmatpush1.msra.mxu0 0.0
    %2028 = vmatprep.subr.mxu0 0.0
    %2029 = vmatpush1.msra.mxu0 0.0
    %2030 = vmatprep.subr.mxu0 0.0
    %2031 = vmatpush1.msra.mxu0 0.0
    %2032 = vmatprep.subr.mxu0 0.0
    %2033 = vmatpush1.msra.mxu0 0.0
    %2034 = vmatprep.subr.mxu0 0.0
    %2035 = vmatpush1.msra.mxu0 0.0
    %2036 = vmatprep.subr.mxu0 0.0
    %2037 = vmatpush1.msra.mxu0 0.0
    %2038 = vmatprep.subr.mxu0 0.0
    %2039 = vmatpush1.msra.mxu0 0.0
    %2040 = vmatprep.mubr.f32.mxu0 0.0
    %2041 = vmatmul.mubr.f32.gmra.mrb[0].mxu0 %v1971
    %v2042 = vpop.f32.mrb[0].mxu0
    %v2043 = vadd.f32 0.0, %v2042
    %v2044 = vpop.f32.mrb[0].mxu0
    %v2045 = vadd.f32 0.0, %v2044
    %2046 = vmatprep.mubr.f32.mxu0 0.0
    %2047 = vmatmul.mubr.f32.gmra.mrb[0].mxu0 %v1974
    %v2048 = vpop.f32.mrb[0].mxu0
    %v2049 = vadd.f32 0.0, %v2048
    %v2050 = vpop.f32.mrb[0].mxu0
    %v2051 = vadd.f32 0.0, %v2050
    %2052 = vdwg.mxu0
    %v2053 = vadd.f32 %v1960, %v2043
    %v2054 = vadd.f32 %v1961, %v2045
    %v2055 = vadd.f32 %v1962, %v2049
    %v2056 = vadd.f32 %v1963, %v2051
    %v2057 = vld [vmem:[%s1599 + $0x5] sm:$0xff]
    %v2058 = vld [vmem:[%s1599 + $0xd] sm:$0x1]
    %v2059 = vld [vmem:[%s493] sm:$0xff]
    %v2060 = vld [vmem:[%s493 + $0x8] sm:$0xff]
    %v2061 = vld [vmem:[%s493 + $0x10] sm:$0xff]
    %v2062 = vld [vmem:[%s493 + $0x18] sm:$0xff]
    %v2064 = vsel %vm42, %v2057, 0
    %v2067 = vsel %vm42, %v2058, 0
    %2069 = vmatprep.subr.mxu0 %v2060
    %2070 = vmatpush1.msra.mxu0 %v2059
    %2071 = vmatprep.subr.mxu0 %v2062
    %2072 = vmatpush1.msra.mxu0 %v2061
    %2073 = vmatprep.subr.mxu0 0.0
    %2074 = vmatpush1.msra.mxu0 0.0
    %2075 = vmatprep.subr.mxu0 0.0
    %2076 = vmatpush1.msra.mxu0 0.0
    %2077 = vmatprep.subr.mxu0 0.0
    %2078 = vmatpush1.msra.mxu0 0.0
    %2079 = vmatprep.subr.mxu0 0.0
    %2080 = vmatpush1.msra.mxu0 0.0
    %2081 = vmatprep.subr.mxu0 0.0
    %2082 = vmatpush1.msra.mxu0 0.0
    %2083 = vmatprep.subr.mxu0 0.0
    %2084 = vmatpush1.msra.mxu0 0.0
    %2085 = vmatprep.subr.mxu0 0.0
    %2086 = vmatpush1.msra.mxu0 0.0
    %2087 = vmatprep.subr.mxu0 0.0
    %2088 = vmatpush1.msra.mxu0 0.0
    %2089 = vmatprep.subr.mxu0 0.0
    %2090 = vmatpush1.msra.mxu0 0.0
    %2091 = vmatprep.subr.mxu0 0.0
    %2092 = vmatpush1.msra.mxu0 0.0
    %2093 = vmatprep.subr.mxu0 0.0
    %2094 = vmatpush1.msra.mxu0 0.0
    %2095 = vmatprep.subr.mxu0 0.0
    %2096 = vmatpush1.msra.mxu0 0.0
    %2097 = vmatprep.subr.mxu0 0.0
    %2098 = vmatpush1.msra.mxu0 0.0
    %2099 = vmatprep.subr.mxu0 0.0
    %2100 = vmatpush1.msra.mxu0 0.0
    %2101 = vmatprep.subr.mxu0 0.0
    %2102 = vmatpush1.msra.mxu0 0.0
    %2103 = vmatprep.subr.mxu0 0.0
    %2104 = vmatpush1.msra.mxu0 0.0
    %2105 = vmatprep.subr.mxu0 0.0
    %2106 = vmatpush1.msra.mxu0 0.0
    %2107 = vmatprep.subr.mxu0 0.0
    %2108 = vmatpush1.msra.mxu0 0.0
    %2109 = vmatprep.subr.mxu0 0.0
    %2110 = vmatpush1.msra.mxu0 0.0
    %2111 = vmatprep.subr.mxu0 0.0
    %2112 = vmatpush1.msra.mxu0 0.0
    %2113 = vmatprep.subr.mxu0 0.0
    %2114 = vmatpush1.msra.mxu0 0.0
    %2115 = vmatprep.subr.mxu0 0.0
    %2116 = vmatpush1.msra.mxu0 0.0
    %2117 = vmatprep.subr.mxu0 0.0
    %2118 = vmatpush1.msra.mxu0 0.0
    %2119 = vmatprep.subr.mxu0 0.0
    %2120 = vmatpush1.msra.mxu0 0.0
    %2121 = vmatprep.subr.mxu0 0.0
    %2122 = vmatpush1.msra.mxu0 0.0
    %2123 = vmatprep.subr.mxu0 0.0
    %2124 = vmatpush1.msra.mxu0 0.0
    %2125 = vmatprep.subr.mxu0 0.0
    %2126 = vmatpush1.msra.mxu0 0.0
    %2127 = vmatprep.subr.mxu0 0.0
    %2128 = vmatpush1.msra.mxu0 0.0
    %2129 = vmatprep.subr.mxu0 0.0
    %2130 = vmatpush1.msra.mxu0 0.0
    %2131 = vmatprep.subr.mxu0 0.0
    %2132 = vmatpush1.msra.mxu0 0.0
    %2133 = vmatprep.mubr.f32.mxu0 0.0
    %2134 = vmatmul.mubr.f32.gmra.mrb[0].mxu0 %v2064
    %v2135 = vpop.f32.mrb[0].mxu0
    %v2136 = vadd.f32 0.0, %v2135
    %v2137 = vpop.f32.mrb[0].mxu0
    %v2138 = vadd.f32 0.0, %v2137
    %2139 = vmatprep.mubr.f32.mxu0 0.0
    %2140 = vmatmul.mubr.f32.gmra.mrb[0].mxu0 %v2067
    %v2141 = vpop.f32.mrb[0].mxu0
    %v2142 = vadd.f32 0.0, %v2141
    %v2143 = vpop.f32.mrb[0].mxu0
    %v2144 = vadd.f32 0.0, %v2143
    %2145 = vdwg.mxu0
    %v2146 = vadd.f32 %v2053, %v2136
    %v2147 = vadd.f32 %v2054, %v2138
    %v2148 = vadd.f32 %v2055, %v2142
    %v2149 = vadd.f32 %v2056, %v2144
    %v2150 = vld [vmem:[%s1599 + $0x6] sm:$0xff]
    %v2151 = vld [vmem:[%s1599 + $0xe] sm:$0x1]
    %v2152 = vld [vmem:[%s587] sm:$0xff]
    %v2153 = vld [vmem:[%s587 + $0x8] sm:$0xff]
    %v2154 = vld [vmem:[%s587 + $0x10] sm:$0xff]
    %v2155 = vld [vmem:[%s587 + $0x18] sm:$0xff]
    %v2157 = vsel %vm42, %v2150, 0
    %v2160 = vsel %vm42, %v2151, 0
    %2162 = vmatprep.subr.mxu0 %v2153
    %2163 = vmatpush1.msra.mxu0 %v2152
    %2164 = vmatprep.subr.mxu0 %v2155
    %2165 = vmatpush1.msra.mxu0 %v2154
    %2166 = vmatprep.subr.mxu0 0.0
    %2167 = vmatpush1.msra.mxu0 0.0
    %2168 = vmatprep.subr.mxu0 0.0
    %2169 = vmatpush1.msra.mxu0 0.0
    %2170 = vmatprep.subr.mxu0 0.0
    %2171 = vmatpush1.msra.mxu0 0.0
    %2172 = vmatprep.subr.mxu0 0.0
    %2173 = vmatpush1.msra.mxu0 0.0
    %2174 = vmatprep.subr.mxu0 0.0
    %2175 = vmatpush1.msra.mxu0 0.0
    %2176 = vmatprep.subr.mxu0 0.0
    %2177 = vmatpush1.msra.mxu0 0.0
    %2178 = vmatprep.subr.mxu0 0.0
    %2179 = vmatpush1.msra.mxu0 0.0
    %2180 = vmatprep.subr.mxu0 0.0
    %2181 = vmatpush1.msra.mxu0 0.0
    %2182 = vmatprep.subr.mxu0 0.0
    %2183 = vmatpush1.msra.mxu0 0.0
    %2184 = vmatprep.subr.mxu0 0.0
    %2185 = vmatpush1.msra.mxu0 0.0
    %2186 = vmatprep.subr.mxu0 0.0
    %2187 = vmatpush1.msra.mxu0 0.0
    %2188 = vmatprep.subr.mxu0 0.0
    %2189 = vmatpush1.msra.mxu0 0.0
    %2190 = vmatprep.subr.mxu0 0.0
    %2191 = vmatpush1.msra.mxu0 0.0
    %2192 = vmatprep.subr.mxu0 0.0
    %2193 = vmatpush1.msra.mxu0 0.0
    %2194 = vmatprep.subr.mxu0 0.0
    %2195 = vmatpush1.msra.mxu0 0.0
    %2196 = vmatprep.subr.mxu0 0.0
    %2197 = vmatpush1.msra.mxu0 0.0
    %2198 = vmatprep.subr.mxu0 0.0
    %2199 = vmatpush1.msra.mxu0 0.0
    %2200 = vmatprep.subr.mxu0 0.0
    %2201 = vmatpush1.msra.mxu0 0.0
    %2202 = vmatprep.subr.mxu0 0.0
    %2203 = vmatpush1.msra.mxu0 0.0
    %2204 = vmatprep.subr.mxu0 0.0
    %2205 = vmatpush1.msra.mxu0 0.0
    %2206 = vmatprep.subr.mxu0 0.0
    %2207 = vmatpush1.msra.mxu0 0.0
    %2208 = vmatprep.subr.mxu0 0.0
    %2209 = vmatpush1.msra.mxu0 0.0
    %2210 = vmatprep.subr.mxu0 0.0
    %2211 = vmatpush1.msra.mxu0 0.0
    %2212 = vmatprep.subr.mxu0 0.0
    %2213 = vmatpush1.msra.mxu0 0.0
    %2214 = vmatprep.subr.mxu0 0.0
    %2215 = vmatpush1.msra.mxu0 0.0
    %2216 = vmatprep.subr.mxu0 0.0
    %2217 = vmatpush1.msra.mxu0 0.0
    %2218 = vmatprep.subr.mxu0 0.0
    %2219 = vmatpush1.msra.mxu0 0.0
    %2220 = vmatprep.subr.mxu0 0.0
    %2221 = vmatpush1.msra.mxu0 0.0
    %2222 = vmatprep.subr.mxu0 0.0
    %2223 = vmatpush1.msra.mxu0 0.0
    %2224 = vmatprep.subr.mxu0 0.0
    %2225 = vmatpush1.msra.mxu0 0.0
    %2226 = vmatprep.mubr.f32.mxu0 0.0
    %2227 = vmatmul.mubr.f32.gmra.mrb[0].mxu0 %v2157
    %v2228 = vpop.f32.mrb[0].mxu0
    %v2229 = vadd.f32 0.0, %v2228
    %v2230 = vpop.f32.mrb[0].mxu0
    %v2231 = vadd.f32 0.0, %v2230
    %2232 = vmatprep.mubr.f32.mxu0 0.0
    %2233 = vmatmul.mubr.f32.gmra.mrb[0].mxu0 %v2160
    %v2234 = vpop.f32.mrb[0].mxu0
    %v2235 = vadd.f32 0.0, %v2234
    %v2236 = vpop.f32.mrb[0].mxu0
    %v2237 = vadd.f32 0.0, %v2236
    %2238 = vdwg.mxu0
    %v2239 = vadd.f32 %v2146, %v2229
    %v2240 = vadd.f32 %v2147, %v2231
    %v2241 = vadd.f32 %v2148, %v2235
    %v2242 = vadd.f32 %v2149, %v2237
    %v2243 = vld [vmem:[%s1599 + $0x7] sm:$0xff]
    %v2244 = vld [vmem:[%s1599 + $0xf] sm:$0x1]
    %v2245 = vld [vmem:[%s681] sm:$0xff]
    %v2246 = vld [vmem:[%s681 + $0x8] sm:$0xff]
    %v2247 = vld [vmem:[%s681 + $0x10] sm:$0xff]
    %v2248 = vld [vmem:[%s681 + $0x18] sm:$0xff]
    %v2250 = vsel %vm42, %v2243, 0
    %v2253 = vsel %vm42, %v2244, 0
    %2255 = vmatprep.subr.mxu0 %v2246
    %2256 = vmatpush1.msra.mxu0 %v2245
    %2257 = vmatprep.subr.mxu0 %v2248
    %2258 = vmatpush1.msra.mxu0 %v2247
    %2259 = vmatprep.subr.mxu0 0.0
    %2260 = vmatpush1.msra.mxu0 0.0
    %2261 = vmatprep.subr.mxu0 0.0
    %2262 = vmatpush1.msra.mxu0 0.0
    %2263 = vmatprep.subr.mxu0 0.0
    %2264 = vmatpush1.msra.mxu0 0.0
    %2265 = vmatprep.subr.mxu0 0.0
    %2266 = vmatpush1.msra.mxu0 0.0
    %2267 = vmatprep.subr.mxu0 0.0
    %2268 = vmatpush1.msra.mxu0 0.0
    %2269 = vmatprep.subr.mxu0 0.0
    %2270 = vmatpush1.msra.mxu0 0.0
    %2271 = vmatprep.subr.mxu0 0.0
    %2272 = vmatpush1.msra.mxu0 0.0
    %2273 = vmatprep.subr.mxu0 0.0
    %2274 = vmatpush1.msra.mxu0 0.0
    %2275 = vmatprep.subr.mxu0 0.0
    %2276 = vmatpush1.msra.mxu0 0.0
    %2277 = vmatprep.subr.mxu0 0.0
    %2278 = vmatpush1.msra.mxu0 0.0
    %2279 = vmatprep.subr.mxu0 0.0
    %2280 = vmatpush1.msra.mxu0 0.0
    %2281 = vmatprep.subr.mxu0 0.0
    %2282 = vmatpush1.msra.mxu0 0.0
    %2283 = vmatprep.subr.mxu0 0.0
    %2284 = vmatpush1.msra.mxu0 0.0
    %2285 = vmatprep.subr.mxu0 0.0
    %2286 = vmatpush1.msra.mxu0 0.0
    %2287 = vmatprep.subr.mxu0 0.0
    %2288 = vmatpush1.msra.mxu0 0.0
    %2289 = vmatprep.subr.mxu0 0.0
    %2290 = vmatpush1.msra.mxu0 0.0
    %2291 = vmatprep.subr.mxu0 0.0
    %2292 = vmatpush1.msra.mxu0 0.0
    %2293 = vmatprep.subr.mxu0 0.0
    %2294 = vmatpush1.msra.mxu0 0.0
    %2295 = vmatprep.subr.mxu0 0.0
    %2296 = vmatpush1.msra.mxu0 0.0
    %2297 = vmatprep.subr.mxu0 0.0
    %2298 = vmatpush1.msra.mxu0 0.0
    %2299 = vmatprep.subr.mxu0 0.0
    %2300 = vmatpush1.msra.mxu0 0.0
    %2301 = vmatprep.subr.mxu0 0.0
    %2302 = vmatpush1.msra.mxu0 0.0
    %2303 = vmatprep.subr.mxu0 0.0
    %2304 = vmatpush1.msra.mxu0 0.0
    %2305 = vmatprep.subr.mxu0 0.0
    %2306 = vmatpush1.msra.mxu0 0.0
    %2307 = vmatprep.subr.mxu0 0.0
    %2308 = vmatpush1.msra.mxu0 0.0
    %2309 = vmatprep.subr.mxu0 0.0
    %2310 = vmatpush1.msra.mxu0 0.0
    %2311 = vmatprep.subr.mxu0 0.0
    %2312 = vmatpush1.msra.mxu0 0.0
    %2313 = vmatprep.subr.mxu0 0.0
    %2314 = vmatpush1.msra.mxu0 0.0
    %2315 = vmatprep.subr.mxu0 0.0
    %2316 = vmatpush1.msra.mxu0 0.0
    %2317 = vmatprep.subr.mxu0 0.0
    %2318 = vmatpush1.msra.mxu0 0.0
    %2319 = vmatprep.mubr.f32.mxu0 0.0
    %2320 = vmatmul.mubr.f32.gmra.mrb[0].mxu0 %v2250
    %v2321 = vpop.f32.mrb[0].mxu0
    %v2322 = vadd.f32 0.0, %v2321
    %v2323 = vpop.f32.mrb[0].mxu0
    %v2324 = vadd.f32 0.0, %v2323
    %2325 = vmatprep.mubr.f32.mxu0 0.0
    %2326 = vmatmul.mubr.f32.gmra.mrb[0].mxu0 %v2253
    %v2327 = vpop.f32.mrb[0].mxu0
    %v2328 = vadd.f32 0.0, %v2327
    %v2329 = vpop.f32.mrb[0].mxu0
    %v2330 = vadd.f32 0.0, %v2329
    %2331 = vdwg.mxu0
    %v2332 = vadd.f32 %v2239, %v2322
    %v2333 = vadd.f32 %v2240, %v2324
    %v2334 = vadd.f32 %v2241, %v2328
    %v2335 = vadd.f32 %v2242, %v2330
    %v2336 = vld [vmem:[%s2] sm:$0x3]
    %v2338 = vlaneseq
    %v2339 = vshrl.u32 %v2338, 7
    %v2340 = vsub.s32 0, %v2339
    %v2341 = vrot.slane %v2336, %v2340
    %v2342 = vlaneseq
    %v2343 = vshrl.u32 %v2342, 7
    %v2344 = vsub.s32 1, %v2343
    %v2345 = vrot.slane %v2336, %v2344
    %v2348 = vadd.f32 %v2332, %v2341
    %v2349 = vadd.f32 %v2333, %v2345
    %v2350 = vadd.f32 %v2334, %v2341
    %v2351 = vadd.f32 %v2335, %v2345
    %v2352 = vmax.f32 %v2348, 0.0
    %v2353 = vmax.f32 %v2349, 0.0
    %v2354 = vmax.f32 %v2350, 0.0
    %v2355 = vmax.f32 %v2351, 0.0
    %v2356 = vld [vmem:[%s3] sm:$0xff]
    %v2357 = vld [vmem:[%s3 + $0x8] sm:$0xff]
    %v2358 = vld [vmem:[%s3 + $0x10] sm:$0xff]
    %v2359 = vld [vmem:[%s3 + $0x18] sm:$0xff]
    %v2360 = vld [vmem:[%s3 + $0x20] sm:$0xff]
    %v2361 = vld [vmem:[%s3 + $0x28] sm:$0xff]
    %v2362 = vld [vmem:[%s3 + $0x30] sm:$0xff]
    %v2363 = vld [vmem:[%s3 + $0x38] sm:$0xff]
    %v2364 = vld [vmem:[%s3 + $0x40] sm:$0xff]
    %v2365 = vld [vmem:[%s3 + $0x48] sm:$0xff]
    %v2366 = vld [vmem:[%s3 + $0x50] sm:$0xff]
    %v2367 = vld [vmem:[%s3 + $0x58] sm:$0xff]
    %v2368 = vld [vmem:[%s3 + $0x60] sm:$0xff]
    %v2369 = vld [vmem:[%s3 + $0x68] sm:$0xff]
    %v2370 = vld [vmem:[%s3 + $0x70] sm:$0xff]
    %v2371 = vld [vmem:[%s3 + $0x78] sm:$0xff]
    %v2372 = vld [vmem:[%s3 + $0x80] sm:$0xff]
    %v2373 = vld [vmem:[%s3 + $0x88] sm:$0xff]
    %v2374 = vld [vmem:[%s811] sm:$0xff]
    %v2375 = vld [vmem:[%s811 + $0x8] sm:$0xff]
    %v2376 = vld [vmem:[%s811 + $0x10] sm:$0xff]
    %v2377 = vld [vmem:[%s811 + $0x18] sm:$0xff]
    %v2378 = vld [vmem:[%s811 + $0x20] sm:$0xff]
    %v2379 = vld [vmem:[%s811 + $0x28] sm:$0xff]
    %v2380 = vld [vmem:[%s811 + $0x30] sm:$0xff]
    %v2381 = vld [vmem:[%s811 + $0x38] sm:$0xff]
    %v2382 = vld [vmem:[%s811 + $0x40] sm:$0xff]
    %v2383 = vld [vmem:[%s811 + $0x48] sm:$0xff]
    %v2384 = vld [vmem:[%s811 + $0x50] sm:$0xff]
    %v2385 = vld [vmem:[%s811 + $0x58] sm:$0xff]
    %v2386 = vld [vmem:[%s811 + $0x60] sm:$0xff]
    %v2387 = vld [vmem:[%s811 + $0x68] sm:$0xff]
    %v2388 = vld [vmem:[%s811 + $0x70] sm:$0xff]
    %v2389 = vld [vmem:[%s811 + $0x78] sm:$0xff]
    %v2390 = vld [vmem:[%s811 + $0x80] sm:$0xff]
    %v2391 = vld [vmem:[%s811 + $0x88] sm:$0xff]
    %v2394 = vrot.slane %v2352, 1
    %v2395 = vrot.slane %v2353, 1
    %v2397 = vsel %vm42, %v2395, 0
    %2399 = vmatprep.subr.mxu0 0.0
    %2400 = vmatpush1.msra.mxu0 %v2374
    %2401 = vmatprep.subr.mxu0 0.0
    %2402 = vmatpush1.msra.mxu0 %v2375
    %2403 = vmatprep.subr.mxu0 0.0
    %2404 = vmatpush1.msra.mxu0 %v2376
    %2405 = vmatprep.subr.mxu0 0.0
    %2406 = vmatpush1.msra.mxu0 %v2377
    %2407 = vmatprep.subr.mxu0 0.0
    %2408 = vmatpush1.msra.mxu0 %v2378
    %2409 = vmatprep.subr.mxu0 0.0
    %2410 = vmatpush1.msra.mxu0 %v2379
    %2411 = vmatprep.subr.mxu0 0.0
    %2412 = vmatpush1.msra.mxu0 %v2380
    %2413 = vmatprep.subr.mxu0 0.0
    %2414 = vmatpush1.msra.mxu0 %v2381
    %2415 = vmatprep.subr.mxu0 0.0
    %2416 = vmatpush1.msra.mxu0 %v2382
    %2417 = vmatprep.subr.mxu0 0.0
    %2418 = vmatpush1.msra.mxu0 %v2383
    %2419 = vmatprep.subr.mxu0 0.0
    %2420 = vmatpush1.msra.mxu0 %v2384
    %2421 = vmatprep.subr.mxu0 0.0
    %2422 = vmatpush1.msra.mxu0 %v2385
    %2423 = vmatprep.subr.mxu0 0.0
    %2424 = vmatpush1.msra.mxu0 %v2386
    %2425 = vmatprep.subr.mxu0 0.0
    %2426 = vmatpush1.msra.mxu0 %v2387
    %2427 = vmatprep.subr.mxu0 0.0
    %2428 = vmatpush1.msra.mxu0 %v2388
    %2429 = vmatprep.subr.mxu0 0.0
    %2430 = vmatpush1.msra.mxu0 %v2389
    %2431 = vmatprep.subr.mxu0 0.0
    %2432 = vmatpush1.msra.mxu0 %v2390
    %2433 = vmatprep.subr.mxu0 0.0
    %2434 = vmatpush1.msra.mxu0 %v2391
    %2435 = vmatprep.subr.mxu0 0.0
    %2436 = vmatpush1.msra.mxu0 0.0
    %2437 = vmatprep.subr.mxu0 0.0
    %2438 = vmatpush1.msra.mxu0 0.0
    %2439 = vmatprep.subr.mxu0 0.0
    %2440 = vmatpush1.msra.mxu0 0.0
    %2441 = vmatprep.subr.mxu0 0.0
    %2442 = vmatpush1.msra.mxu0 0.0
    %2443 = vmatprep.subr.mxu0 0.0
    %2444 = vmatpush1.msra.mxu0 0.0
    %2445 = vmatprep.subr.mxu0 0.0
    %2446 = vmatpush1.msra.mxu0 0.0
    %2447 = vmatprep.subr.mxu0 0.0
    %2448 = vmatpush1.msra.mxu0 0.0
    %2449 = vmatprep.subr.mxu0 0.0
    %2450 = vmatpush1.msra.mxu0 0.0
    %2451 = vmatprep.subr.mxu0 0.0
    %2452 = vmatpush1.msra.mxu0 0.0
    %2453 = vmatprep.subr.mxu0 0.0
    %2454 = vmatpush1.msra.mxu0 0.0
    %2455 = vmatprep.subr.mxu0 0.0
    %2456 = vmatpush1.msra.mxu0 0.0
    %2457 = vmatprep.subr.mxu0 0.0
    %2458 = vmatpush1.msra.mxu0 0.0
    %2459 = vmatprep.subr.mxu0 0.0
    %2460 = vmatpush1.msra.mxu0 0.0
    %2461 = vmatprep.subr.mxu0 0.0
    %2462 = vmatpush1.msra.mxu0 0.0
    %2463 = vmatprep.mubr.f32.mxu0 %v2397
    %2464 = vmatmul.mubr.f32.gmra.mrb[0].mxu0 %v2394
    %v2465 = vpop.f32.mrb[0].mxu0
    %v2466 = vadd.f32 0.0, %v2465
    %v2467 = vpop.f32.mrb[0].mxu0
    %2468 = vdwg.mxu0
    %v2469 = vsel %vm42, %v2353, 0
    %2471 = vmatprep.subr.mxu0 0.0
    %2472 = vmatpush1.msra.mxu0 %v2356
    %2473 = vmatprep.subr.mxu0 0.0
    %2474 = vmatpush1.msra.mxu0 %v2357
    %2475 = vmatprep.subr.mxu0 0.0
    %2476 = vmatpush1.msra.mxu0 %v2358
    %2477 = vmatprep.subr.mxu0 0.0
    %2478 = vmatpush1.msra.mxu0 %v2359
    %2479 = vmatprep.subr.mxu0 0.0
    %2480 = vmatpush1.msra.mxu0 %v2360
    %2481 = vmatprep.subr.mxu0 0.0
    %2482 = vmatpush1.msra.mxu0 %v2361
    %2483 = vmatprep.subr.mxu0 0.0
    %2484 = vmatpush1.msra.mxu0 %v2362
    %2485 = vmatprep.subr.mxu0 0.0
    %2486 = vmatpush1.msra.mxu0 %v2363
    %2487 = vmatprep.subr.mxu0 0.0
    %2488 = vmatpush1.msra.mxu0 %v2364
    %2489 = vmatprep.subr.mxu0 0.0
    %2490 = vmatpush1.msra.mxu0 %v2365
    %2491 = vmatprep.subr.mxu0 0.0
    %2492 = vmatpush1.msra.mxu0 %v2366
    %2493 = vmatprep.subr.mxu0 0.0
    %2494 = vmatpush1.msra.mxu0 %v2367
    %2495 = vmatprep.subr.mxu0 0.0
    %2496 = vmatpush1.msra.mxu0 %v2368
    %2497 = vmatprep.subr.mxu0 0.0
    %2498 = vmatpush1.msra.mxu0 %v2369
    %2499 = vmatprep.subr.mxu0 0.0
    %2500 = vmatpush1.msra.mxu0 %v2370
    %2501 = vmatprep.subr.mxu0 0.0
    %2502 = vmatpush1.msra.mxu0 %v2371
    %2503 = vmatprep.subr.mxu0 0.0
    %2504 = vmatpush1.msra.mxu0 %v2372
    %2505 = vmatprep.subr.mxu0 0.0
    %2506 = vmatpush1.msra.mxu0 %v2373
    %2507 = vmatprep.subr.mxu0 0.0
    %2508 = vmatpush1.msra.mxu0 0.0
    %2509 = vmatprep.subr.mxu0 0.0
    %2510 = vmatpush1.msra.mxu0 0.0
    %2511 = vmatprep.subr.mxu0 0.0
    %2512 = vmatpush1.msra.mxu0 0.0
    %2513 = vmatprep.subr.mxu0 0.0
    %2514 = vmatpush1.msra.mxu0 0.0
    %2515 = vmatprep.subr.mxu0 0.0
    %2516 = vmatpush1.msra.mxu0 0.0
    %2517 = vmatprep.subr.mxu0 0.0
    %2518 = vmatpush1.msra.mxu0 0.0
    %2519 = vmatprep.subr.mxu0 0.0
    %2520 = vmatpush1.msra.mxu0 0.0
    %2521 = vmatprep.subr.mxu0 0.0
    %2522 = vmatpush1.msra.mxu0 0.0
    %2523 = vmatprep.subr.mxu0 0.0
    %2524 = vmatpush1.msra.mxu0 0.0
    %2525 = vmatprep.subr.mxu0 0.0
    %2526 = vmatpush1.msra.mxu0 0.0
    %2527 = vmatprep.subr.mxu0 0.0
    %2528 = vmatpush1.msra.mxu0 0.0
    %2529 = vmatprep.subr.mxu0 0.0
    %2530 = vmatpush1.msra.mxu0 0.0
    %2531 = vmatprep.subr.mxu0 0.0
    %2532 = vmatpush1.msra.mxu0 0.0
    %2533 = vmatprep.subr.mxu0 0.0
    %2534 = vmatpush1.msra.mxu0 0.0
    %2535 = vmatprep.mubr.f32.mxu0 %v2469
    %2536 = vmatmul.mubr.f32.gmra.mrb[0].mxu0 %v2352
    %v2537 = vpop.f32.mrb[0].mxu0
    %v2538 = vadd.f32 %v2466, %v2537
    %v2539 = vpop.f32.mrb[0].mxu0
    %2540 = vdwg.mxu0
    %v2541 = vld [vmem:[%s979] sm:$0xff]
    %v2542 = vld [vmem:[%s979 + $0x8] sm:$0xff]
    %v2543 = vld [vmem:[%s979 + $0x10] sm:$0xff]
    %v2544 = vld [vmem:[%s979 + $0x18] sm:$0xff]
    %v2545 = vld [vmem:[%s979 + $0x20] sm:$0xff]
    %v2546 = vld [vmem:[%s979 + $0x28] sm:$0xff]
    %v2547 = vld [vmem:[%s979 + $0x30] sm:$0xff]
    %v2548 = vld [vmem:[%s979 + $0x38] sm:$0xff]
    %v2549 = vld [vmem:[%s979 + $0x40] sm:$0xff]
    %v2550 = vld [vmem:[%s979 + $0x48] sm:$0xff]
    %v2551 = vld [vmem:[%s979 + $0x50] sm:$0xff]
    %v2552 = vld [vmem:[%s979 + $0x58] sm:$0xff]
    %v2553 = vld [vmem:[%s979 + $0x60] sm:$0xff]
    %v2554 = vld [vmem:[%s979 + $0x68] sm:$0xff]
    %v2555 = vld [vmem:[%s979 + $0x70] sm:$0xff]
    %v2556 = vld [vmem:[%s979 + $0x78] sm:$0xff]
    %v2557 = vld [vmem:[%s979 + $0x80] sm:$0xff]
    %v2558 = vld [vmem:[%s979 + $0x88] sm:$0xff]
    %v2559 = vrot.slane %v2352, 2
    %v2560 = vrot.slane %v2353, 2
    %v2562 = vsel %vm42, %v2560, 0
    %2564 = vmatprep.subr.mxu0 0.0
    %2565 = vmatpush1.msra.mxu0 %v2541
    %2566 = vmatprep.subr.mxu0 0.0
    %2567 = vmatpush1.msra.mxu0 %v2542
    %2568 = vmatprep.subr.mxu0 0.0
    %2569 = vmatpush1.msra.mxu0 %v2543
    %2570 = vmatprep.subr.mxu0 0.0
    %2571 = vmatpush1.msra.mxu0 %v2544
    %2572 = vmatprep.subr.mxu0 0.0
    %2573 = vmatpush1.msra.mxu0 %v2545
    %2574 = vmatprep.subr.mxu0 0.0
    %2575 = vmatpush1.msra.mxu0 %v2546
    %2576 = vmatprep.subr.mxu0 0.0
    %2577 = vmatpush1.msra.mxu0 %v2547
    %2578 = vmatprep.subr.mxu0 0.0
    %2579 = vmatpush1.msra.mxu0 %v2548
    %2580 = vmatprep.subr.mxu0 0.0
    %2581 = vmatpush1.msra.mxu0 %v2549
    %2582 = vmatprep.subr.mxu0 0.0
    %2583 = vmatpush1.msra.mxu0 %v2550
    %2584 = vmatprep.subr.mxu0 0.0
    %2585 = vmatpush1.msra.mxu0 %v2551
    %2586 = vmatprep.subr.mxu0 0.0
    %2587 = vmatpush1.msra.mxu0 %v2552
    %2588 = vmatprep.subr.mxu0 0.0
    %2589 = vmatpush1.msra.mxu0 %v2553
    %2590 = vmatprep.subr.mxu0 0.0
    %2591 = vmatpush1.msra.mxu0 %v2554
    %2592 = vmatprep.subr.mxu0 0.0
    %2593 = vmatpush1.msra.mxu0 %v2555
    %2594 = vmatprep.subr.mxu0 0.0
    %2595 = vmatpush1.msra.mxu0 %v2556
    %2596 = vmatprep.subr.mxu0 0.0
    %2597 = vmatpush1.msra.mxu0 %v2557
    %2598 = vmatprep.subr.mxu0 0.0
    %2599 = vmatpush1.msra.mxu0 %v2558
    %2600 = vmatprep.subr.mxu0 0.0
    %2601 = vmatpush1.msra.mxu0 0.0
    %2602 = vmatprep.subr.mxu0 0.0
    %2603 = vmatpush1.msra.mxu0 0.0
    %2604 = vmatprep.subr.mxu0 0.0
    %2605 = vmatpush1.msra.mxu0 0.0
    %2606 = vmatprep.subr.mxu0 0.0
    %2607 = vmatpush1.msra.mxu0 0.0
    %2608 = vmatprep.subr.mxu0 0.0
    %2609 = vmatpush1.msra.mxu0 0.0
    %2610 = vmatprep.subr.mxu0 0.0
    %2611 = vmatpush1.msra.mxu0 0.0
    %2612 = vmatprep.subr.mxu0 0.0
    %2613 = vmatpush1.msra.mxu0 0.0
    %2614 = vmatprep.subr.mxu0 0.0
    %2615 = vmatpush1.msra.mxu0 0.0
    %2616 = vmatprep.subr.mxu0 0.0
    %2617 = vmatpush1.msra.mxu0 0.0
    %2618 = vmatprep.subr.mxu0 0.0
    %2619 = vmatpush1.msra.mxu0 0.0
    %2620 = vmatprep.subr.mxu0 0.0
    %2621 = vmatpush1.msra.mxu0 0.0
    %2622 = vmatprep.subr.mxu0 0.0
    %2623 = vmatpush1.msra.mxu0 0.0
    %2624 = vmatprep.subr.mxu0 0.0
    %2625 = vmatpush1.msra.mxu0 0.0
    %2626 = vmatprep.subr.mxu0 0.0
    %2627 = vmatpush1.msra.mxu0 0.0
    %2628 = vmatprep.mubr.f32.mxu0 %v2562
    %2629 = vmatmul.mubr.f32.gmra.mrb[0].mxu0 %v2559
    %v2630 = vpop.f32.mrb[0].mxu0
    %v2631 = vadd.f32 0.0, %v2630
    %v2632 = vpop.f32.mrb[0].mxu0
    %2633 = vdwg.mxu0
    %v2634 = vadd.f32 %v2538, %v2631
    %v2635 = vld [vmem:[%s1074] sm:$0xff]
    %v2636 = vld [vmem:[%s1074 + $0x8] sm:$0xff]
    %v2637 = vld [vmem:[%s1074 + $0x10] sm:$0xff]
    %v2638 = vld [vmem:[%s1074 + $0x18] sm:$0xff]
    %v2639 = vld [vmem:[%s1074 + $0x20] sm:$0xff]
    %v2640 = vld [vmem:[%s1074 + $0x28] sm:$0xff]
    %v2641 = vld [vmem:[%s1074 + $0x30] sm:$0xff]
    %v2642 = vld [vmem:[%s1074 + $0x38] sm:$0xff]
    %v2643 = vld [vmem:[%s1074 + $0x40] sm:$0xff]
    %v2644 = vld [vmem:[%s1074 + $0x48] sm:$0xff]
    %v2645 = vld [vmem:[%s1074 + $0x50] sm:$0xff]
    %v2646 = vld [vmem:[%s1074 + $0x58] sm:$0xff]
    %v2647 = vld [vmem:[%s1074 + $0x60] sm:$0xff]
    %v2648 = vld [vmem:[%s1074 + $0x68] sm:$0xff]
    %v2649 = vld [vmem:[%s1074 + $0x70] sm:$0xff]
    %v2650 = vld [vmem:[%s1074 + $0x78] sm:$0xff]
    %v2651 = vld [vmem:[%s1074 + $0x80] sm:$0xff]
    %v2652 = vld [vmem:[%s1074 + $0x88] sm:$0xff]
    %v2655 = vrot.slane %v2352, 3
    %v2656 = vrot.slane %v2354, 3
    %v2657 = vsel %vm1095, %v2655, %v2656
    %v2658 = vrot.slane %v2353, 3
    %v2659 = vrot.slane %v2355, 3
    %v2660 = vsel %vm1095, %v2658, %v2659
    %v2662 = vsel %vm42, %v2660, 0
    %2664 = vmatprep.subr.mxu0 0.0
    %2665 = vmatpush1.msra.mxu0 %v2635
    %2666 = vmatprep.subr.mxu0 0.0
    %2667 = vmatpush1.msra.mxu0 %v2636
    %2668 = vmatprep.subr.mxu0 0.0
    %2669 = vmatpush1.msra.mxu0 %v2637
    %2670 = vmatprep.subr.mxu0 0.0
    %2671 = vmatpush1.msra.mxu0 %v2638
    %2672 = vmatprep.subr.mxu0 0.0
    %2673 = vmatpush1.msra.mxu0 %v2639
    %2674 = vmatprep.subr.mxu0 0.0
    %2675 = vmatpush1.msra.mxu0 %v2640
    %2676 = vmatprep.subr.mxu0 0.0
    %2677 = vmatpush1.msra.mxu0 %v2641
    %2678 = vmatprep.subr.mxu0 0.0
    %2679 = vmatpush1.msra.mxu0 %v2642
    %2680 = vmatprep.subr.mxu0 0.0
    %2681 = vmatpush1.msra.mxu0 %v2643
    %2682 = vmatprep.subr.mxu0 0.0
    %2683 = vmatpush1.msra.mxu0 %v2644
    %2684 = vmatprep.subr.mxu0 0.0
    %2685 = vmatpush1.msra.mxu0 %v2645
    %2686 = vmatprep.subr.mxu0 0.0
    %2687 = vmatpush1.msra.mxu0 %v2646
    %2688 = vmatprep.subr.mxu0 0.0
    %2689 = vmatpush1.msra.mxu0 %v2647
    %2690 = vmatprep.subr.mxu0 0.0
    %2691 = vmatpush1.msra.mxu0 %v2648
    %2692 = vmatprep.subr.mxu0 0.0
    %2693 = vmatpush1.msra.mxu0 %v2649
    %2694 = vmatprep.subr.mxu0 0.0
    %2695 = vmatpush1.msra.mxu0 %v2650
    %2696 = vmatprep.subr.mxu0 0.0
    %2697 = vmatpush1.msra.mxu0 %v2651
    %2698 = vmatprep.subr.mxu0 0.0
    %2699 = vmatpush1.msra.mxu0 %v2652
    %2700 = vmatprep.subr.mxu0 0.0
    %2701 = vmatpush1.msra.mxu0 0.0
    %2702 = vmatprep.subr.mxu0 0.0
    %2703 = vmatpush1.msra.mxu0 0.0
    %2704 = vmatprep.subr.mxu0 0.0
    %2705 = vmatpush1.msra.mxu0 0.0
    %2706 = vmatprep.subr.mxu0 0.0
    %2707 = vmatpush1.msra.mxu0 0.0
    %2708 = vmatprep.subr.mxu0 0.0
    %2709 = vmatpush1.msra.mxu0 0.0
    %2710 = vmatprep.subr.mxu0 0.0
    %2711 = vmatpush1.msra.mxu0 0.0
    %2712 = vmatprep.subr.mxu0 0.0
    %2713 = vmatpush1.msra.mxu0 0.0
    %2714 = vmatprep.subr.mxu0 0.0
    %2715 = vmatpush1.msra.mxu0 0.0
    %2716 = vmatprep.subr.mxu0 0.0
    %2717 = vmatpush1.msra.mxu0 0.0
    %2718 = vmatprep.subr.mxu0 0.0
    %2719 = vmatpush1.msra.mxu0 0.0
    %2720 = vmatprep.subr.mxu0 0.0
    %2721 = vmatpush1.msra.mxu0 0.0
    %2722 = vmatprep.subr.mxu0 0.0
    %2723 = vmatpush1.msra.mxu0 0.0
    %2724 = vmatprep.subr.mxu0 0.0
    %2725 = vmatpush1.msra.mxu0 0.0
    %2726 = vmatprep.subr.mxu0 0.0
    %2727 = vmatpush1.msra.mxu0 0.0
    %2728 = vmatprep.mubr.f32.mxu0 %v2662
    %2729 = vmatmul.mubr.f32.gmra.mrb[0].mxu0 %v2657
    %v2730 = vpop.f32.mrb[0].mxu0
    %v2731 = vadd.f32 0.0, %v2730
    %v2732 = vpop.f32.mrb[0].mxu0
    %2733 = vdwg.mxu0
    %v2734 = vadd.f32 %v2634, %v2731
    %v2735 = vld [vmem:[%s4] sm:$0x1]
    %v2737 = vlaneseq
    %v2738 = vshrl.u32 %v2737, 7
    %v2739 = vsub.s32 0, %v2738
    %v2740 = vrot.slane %v2735, %v2739
    %v2742 = vadd.f32 %v2734, %v2740
    %v2743 = vmax.f32 %v2742, 0.0
    %v2745 = vrot.slane %v2743, 1
    %v2747 = vmax.f32 %v2743, %v2745
    %2749 = vrot.lane.b32.xlu0 %v2747, 120
    %v2750 = vpop.permute.xlu0 %2749
    %v2752 = vmax.f32 %v2747, %v2750
    %s2753 = scalar_lea.vmem %s8, 8
    %2754 = vst.msk [vmem:[%s2753] sm:$0x1f] %vm1194, %v2752
    %v2755 = vld [vmem:[%s6] sm:$0x1]
    %v2756 = vld [vmem:[%s5] sm:$0xff]
    %v2757 = vld [vmem:[%s5 + $0x8] sm:$0xff]
    %v2758 = vld [vmem:[%s5 + $0x10] sm:$0xff]
    %v2759 = vld [vmem:[%s5 + $0x18] sm:$0xff]
    %v2760 = vld [vmem:[%s5 + $0x20] sm:$0xff]
    %v2762 = vsel %vm1202, %v2752, 0
    %2764 = vmatprep.subr.mxu0 0.0
    %2765 = vmatpush1.msra.mxu0 %v2756
    %2766 = vmatprep.subr.mxu0 0.0
    %2767 = vmatpush1.msra.mxu0 %v2757
    %2768 = vmatprep.subr.mxu0 0.0
    %2769 = vmatpush1.msra.mxu0 %v2758
    %2770 = vmatprep.subr.mxu0 0.0
    %2771 = vmatpush1.msra.mxu0 %v2759
    %2772 = vmatprep.subr.mxu0 0.0
    %2773 = vmatpush1.msra.mxu0 %v2760
    %2774 = vmatprep.subr.mxu0 0.0
    %2775 = vmatpush1.msra.mxu0 0.0
    %2776 = vmatprep.subr.mxu0 0.0
    %2777 = vmatpush1.msra.mxu0 0.0
    %2778 = vmatprep.subr.mxu0 0.0
    %2779 = vmatpush1.msra.mxu0 0.0
    %2780 = vmatprep.subr.mxu0 0.0
    %2781 = vmatpush1.msra.mxu0 0.0
    %2782 = vmatprep.subr.mxu0 0.0
    %2783 = vmatpush1.msra.mxu0 0.0
    %2784 = vmatprep.subr.mxu0 0.0
    %2785 = vmatpush1.msra.mxu0 0.0
    %2786 = vmatprep.subr.mxu0 0.0
    %2787 = vmatpush1.msra.mxu0 0.0
    %2788 = vmatprep.subr.mxu0 0.0
    %2789 = vmatpush1.msra.mxu0 0.0
    %2790 = vmatprep.subr.mxu0 0.0
    %2791 = vmatpush1.msra.mxu0 0.0
    %2792 = vmatprep.subr.mxu0 0.0
    %2793 = vmatpush1.msra.mxu0 0.0
    %2794 = vmatprep.subr.mxu0 0.0
    %2795 = vmatpush1.msra.mxu0 0.0
    %2796 = vmatprep.subr.mxu0 0.0
    %2797 = vmatpush1.msra.mxu0 0.0
    %2798 = vmatprep.subr.mxu0 0.0
    %2799 = vmatpush1.msra.mxu0 0.0
    %2800 = vmatprep.subr.mxu0 0.0
    %2801 = vmatpush1.msra.mxu0 0.0
    %2802 = vmatprep.subr.mxu0 0.0
    %2803 = vmatpush1.msra.mxu0 0.0
    %2804 = vmatprep.subr.mxu0 0.0
    %2805 = vmatpush1.msra.mxu0 0.0
    %2806 = vmatprep.subr.mxu0 0.0
    %2807 = vmatpush1.msra.mxu0 0.0
    %2808 = vmatprep.subr.mxu0 0.0
    %2809 = vmatpush1.msra.mxu0 0.0
    %2810 = vmatprep.subr.mxu0 0.0
    %2811 = vmatpush1.msra.mxu0 0.0
    %2812 = vmatprep.subr.mxu0 0.0
    %2813 = vmatpush1.msra.mxu0 0.0
    %2814 = vmatprep.subr.mxu0 0.0
    %2815 = vmatpush1.msra.mxu0 0.0
    %2816 = vmatprep.subr.mxu0 0.0
    %2817 = vmatpush1.msra.mxu0 0.0
    %2818 = vmatprep.subr.mxu0 0.0
    %2819 = vmatpush1.msra.mxu0 0.0
    %2820 = vmatprep.subr.mxu0 0.0
    %2821 = vmatpush1.msra.mxu0 0.0
    %2822 = vmatprep.subr.mxu0 0.0
    %2823 = vmatpush1.msra.mxu0 0.0
    %2824 = vmatprep.subr.mxu0 0.0
    %2825 = vmatpush1.msra.mxu0 0.0
    %2826 = vmatprep.subr.mxu0 0.0
    %2827 = vmatpush1.msra.mxu0 0.0
    %2828 = vmatprep.mubr.f32.mxu0 0.0
    %2829 = vmatmul.mubr.f32.gmra.mrb[0].mxu0 %v2762
    %v2830 = vpop.f32.mrb[0].mxu0
    %v2831 = vadd.f32 0.0, %v2830
    %v2832 = vpop.f32.mrb[0].mxu0
    %2833 = vdwg.mxu0
    %v2834 = vadd.f32 %v2755, %v2831
    %v2835 = vld [vmem:[%s1277] sm:$0xff]
    %v2836 = vld [vmem:[%s1277 + $0x8] sm:$0xff]
    %v2837 = vld [vmem:[%s1277 + $0x10] sm:$0xff]
    %v2838 = vld [vmem:[%s1277 + $0x18] sm:$0xff]
    %v2839 = vld [vmem:[%s1277 + $0x20] sm:$0xff]
    %v2840 = vrot.slane %v2752, 1
    %v2841 = vsel %vm1202, %v2840, 0
    %2843 = vmatprep.subr.mxu0 0.0
    %2844 = vmatpush1.msra.mxu0 %v2835
    %2845 = vmatprep.subr.mxu0 0.0
    %2846 = vmatpush1.msra.mxu0 %v2836
    %2847 = vmatprep.subr.mxu0 0.0
    %2848 = vmatpush1.msra.mxu0 %v2837
    %2849 = vmatprep.subr.mxu0 0.0
    %2850 = vmatpush1.msra.mxu0 %v2838
    %2851 = vmatprep.subr.mxu0 0.0
    %2852 = vmatpush1.msra.mxu0 %v2839
    %2853 = vmatprep.subr.mxu0 0.0
    %2854 = vmatpush1.msra.mxu0 0.0
    %2855 = vmatprep.subr.mxu0 0.0
    %2856 = vmatpush1.msra.mxu0 0.0
    %2857 = vmatprep.subr.mxu0 0.0
    %2858 = vmatpush1.msra.mxu0 0.0
    %2859 = vmatprep.subr.mxu0 0.0
    %2860 = vmatpush1.msra.mxu0 0.0
    %2861 = vmatprep.subr.mxu0 0.0
    %2862 = vmatpush1.msra.mxu0 0.0
    %2863 = vmatprep.subr.mxu0 0.0
    %2864 = vmatpush1.msra.mxu0 0.0
    %2865 = vmatprep.subr.mxu0 0.0
    %2866 = vmatpush1.msra.mxu0 0.0
    %2867 = vmatprep.subr.mxu0 0.0
    %2868 = vmatpush1.msra.mxu0 0.0
    %2869 = vmatprep.subr.mxu0 0.0
    %2870 = vmatpush1.msra.mxu0 0.0
    %2871 = vmatprep.subr.mxu0 0.0
    %2872 = vmatpush1.msra.mxu0 0.0
    %2873 = vmatprep.subr.mxu0 0.0
    %2874 = vmatpush1.msra.mxu0 0.0
    %2875 = vmatprep.subr.mxu0 0.0
    %2876 = vmatpush1.msra.mxu0 0.0
    %2877 = vmatprep.subr.mxu0 0.0
    %2878 = vmatpush1.msra.mxu0 0.0
    %2879 = vmatprep.subr.mxu0 0.0
    %2880 = vmatpush1.msra.mxu0 0.0
    %2881 = vmatprep.subr.mxu0 0.0
    %2882 = vmatpush1.msra.mxu0 0.0
    %2883 = vmatprep.subr.mxu0 0.0
    %2884 = vmatpush1.msra.mxu0 0.0
    %2885 = vmatprep.subr.mxu0 0.0
    %2886 = vmatpush1.msra.mxu0 0.0
    %2887 = vmatprep.subr.mxu0 0.0
    %2888 = vmatpush1.msra.mxu0 0.0
    %2889 = vmatprep.subr.mxu0 0.0
    %2890 = vmatpush1.msra.mxu0 0.0
    %2891 = vmatprep.subr.mxu0 0.0
    %2892 = vmatpush1.msra.mxu0 0.0
    %2893 = vmatprep.subr.mxu0 0.0
    %2894 = vmatpush1.msra.mxu0 0.0
    %2895 = vmatprep.subr.mxu0 0.0
    %2896 = vmatpush1.msra.mxu0 0.0
    %2897 = vmatprep.subr.mxu0 0.0
    %2898 = vmatpush1.msra.mxu0 0.0
    %2899 = vmatprep.subr.mxu0 0.0
    %2900 = vmatpush1.msra.mxu0 0.0
    %2901 = vmatprep.subr.mxu0 0.0
    %2902 = vmatpush1.msra.mxu0 0.0
    %2903 = vmatprep.subr.mxu0 0.0
    %2904 = vmatpush1.msra.mxu0 0.0
    %2905 = vmatprep.subr.mxu0 0.0
    %2906 = vmatpush1.msra.mxu0 0.0
    %2907 = vmatprep.mubr.f32.mxu0 0.0
    %2908 = vmatmul.mubr.f32.gmra.mrb[0].mxu0 %v2841
    %v2909 = vpop.f32.mrb[0].mxu0
    %v2910 = vadd.f32 0.0, %v2909
    %v2911 = vpop.f32.mrb[0].mxu0
    %2912 = vdwg.mxu0
    %v2913 = vadd.f32 %v2834, %v2910
    %v2914 = vld [vmem:[%s1357] sm:$0xff]
    %v2915 = vld [vmem:[%s1357 + $0x8] sm:$0xff]
    %v2916 = vld [vmem:[%s1357 + $0x10] sm:$0xff]
    %v2917 = vld [vmem:[%s1357 + $0x18] sm:$0xff]
    %v2918 = vld [vmem:[%s1357 + $0x20] sm:$0xff]
    %v2919 = vrot.slane %v2752, 2
    %v2920 = vsel %vm1202, %v2919, 0
    %2922 = vmatprep.subr.mxu0 0.0
    %2923 = vmatpush1.msra.mxu0 %v2914
    %2924 = vmatprep.subr.mxu0 0.0
    %2925 = vmatpush1.msra.mxu0 %v2915
    %2926 = vmatprep.subr.mxu0 0.0
    %2927 = vmatpush1.msra.mxu0 %v2916
    %2928 = vmatprep.subr.mxu0 0.0
    %2929 = vmatpush1.msra.mxu0 %v2917
    %2930 = vmatprep.subr.mxu0 0.0
    %2931 = vmatpush1.msra.mxu0 %v2918
    %2932 = vmatprep.subr.mxu0 0.0
    %2933 = vmatpush1.msra.mxu0 0.0
    %2934 = vmatprep.subr.mxu0 0.0
    %2935 = vmatpush1.msra.mxu0 0.0
    %2936 = vmatprep.subr.mxu0 0.0
    %2937 = vmatpush1.msra.mxu0 0.0
    %2938 = vmatprep.subr.mxu0 0.0
    %2939 = vmatpush1.msra.mxu0 0.0
    %2940 = vmatprep.subr.mxu0 0.0
    %2941 = vmatpush1.msra.mxu0 0.0
    %2942 = vmatprep.subr.mxu0 0.0
    %2943 = vmatpush1.msra.mxu0 0.0
    %2944 = vmatprep.subr.mxu0 0.0
    %2945 = vmatpush1.msra.mxu0 0.0
    %2946 = vmatprep.subr.mxu0 0.0
    %2947 = vmatpush1.msra.mxu0 0.0
    %2948 = vmatprep.subr.mxu0 0.0
    %2949 = vmatpush1.msra.mxu0 0.0
    %2950 = vmatprep.subr.mxu0 0.0
    %2951 = vmatpush1.msra.mxu0 0.0
    %2952 = vmatprep.subr.mxu0 0.0
    %2953 = vmatpush1.msra.mxu0 0.0
    %2954 = vmatprep.subr.mxu0 0.0
    %2955 = vmatpush1.msra.mxu0 0.0
    %2956 = vmatprep.subr.mxu0 0.0
    %2957 = vmatpush1.msra.mxu0 0.0
    %2958 = vmatprep.subr.mxu0 0.0
    %2959 = vmatpush1.msra.mxu0 0.0
    %2960 = vmatprep.subr.mxu0 0.0
    %2961 = vmatpush1.msra.mxu0 0.0
    %2962 = vmatprep.subr.mxu0 0.0
    %2963 = vmatpush1.msra.mxu0 0.0
    %2964 = vmatprep.subr.mxu0 0.0
    %2965 = vmatpush1.msra.mxu0 0.0
    %2966 = vmatprep.subr.mxu0 0.0
    %2967 = vmatpush1.msra.mxu0 0.0
    %2968 = vmatprep.subr.mxu0 0.0
    %2969 = vmatpush1.msra.mxu0 0.0
    %2970 = vmatprep.subr.mxu0 0.0
    %2971 = vmatpush1.msra.mxu0 0.0
    %2972 = vmatprep.subr.mxu0 0.0
    %2973 = vmatpush1.msra.mxu0 0.0
    %2974 = vmatprep.subr.mxu0 0.0
    %2975 = vmatpush1.msra.mxu0 0.0
    %2976 = vmatprep.subr.mxu0 0.0
    %2977 = vmatpush1.msra.mxu0 0.0
    %2978 = vmatprep.subr.mxu0 0.0
    %2979 = vmatpush1.msra.mxu0 0.0
    %2980 = vmatprep.subr.mxu0 0.0
    %2981 = vmatpush1.msra.mxu0 0.0
    %2982 = vmatprep.subr.mxu0 0.0
    %2983 = vmatpush1.msra.mxu0 0.0
    %2984 = vmatprep.subr.mxu0 0.0
    %2985 = vmatpush1.msra.mxu0 0.0
    %2986 = vmatprep.mubr.f32.mxu0 0.0
    %2987 = vmatmul.mubr.f32.gmra.mrb[0].mxu0 %v2920
    %v2988 = vpop.f32.mrb[0].mxu0
    %v2989 = vadd.f32 0.0, %v2988
    %v2990 = vpop.f32.mrb[0].mxu0
    %2991 = vdwg.mxu0
    %v2992 = vadd.f32 %v2913, %v2989
    %v2993 = vld [vmem:[%s1437] sm:$0xff]
    %v2994 = vld [vmem:[%s1437 + $0x8] sm:$0xff]
    %v2995 = vld [vmem:[%s1437 + $0x10] sm:$0xff]
    %v2996 = vld [vmem:[%s1437 + $0x18] sm:$0xff]
    %v2997 = vld [vmem:[%s1437 + $0x20] sm:$0xff]
    %v2998 = vrot.slane %v2752, 3
    %v2999 = vsel %vm1202, %v2998, 0
    %3001 = vmatprep.subr.mxu0 0.0
    %3002 = vmatpush1.msra.mxu0 %v2993
    %3003 = vmatprep.subr.mxu0 0.0
    %3004 = vmatpush1.msra.mxu0 %v2994
    %3005 = vmatprep.subr.mxu0 0.0
    %3006 = vmatpush1.msra.mxu0 %v2995
    %3007 = vmatprep.subr.mxu0 0.0
    %3008 = vmatpush1.msra.mxu0 %v2996
    %3009 = vmatprep.subr.mxu0 0.0
    %3010 = vmatpush1.msra.mxu0 %v2997
    %3011 = vmatprep.subr.mxu0 0.0
    %3012 = vmatpush1.msra.mxu0 0.0
    %3013 = vmatprep.subr.mxu0 0.0
    %3014 = vmatpush1.msra.mxu0 0.0
    %3015 = vmatprep.subr.mxu0 0.0
    %3016 = vmatpush1.msra.mxu0 0.0
    %3017 = vmatprep.subr.mxu0 0.0
    %3018 = vmatpush1.msra.mxu0 0.0
    %3019 = vmatprep.subr.mxu0 0.0
    %3020 = vmatpush1.msra.mxu0 0.0
    %3021 = vmatprep.subr.mxu0 0.0
    %3022 = vmatpush1.msra.mxu0 0.0
    %3023 = vmatprep.subr.mxu0 0.0
    %3024 = vmatpush1.msra.mxu0 0.0
    %3025 = vmatprep.subr.mxu0 0.0
    %3026 = vmatpush1.msra.mxu0 0.0
    %3027 = vmatprep.subr.mxu0 0.0
    %3028 = vmatpush1.msra.mxu0 0.0
    %3029 = vmatprep.subr.mxu0 0.0
    %3030 = vmatpush1.msra.mxu0 0.0
    %3031 = vmatprep.subr.mxu0 0.0
    %3032 = vmatpush1.msra.mxu0 0.0
    %3033 = vmatprep.subr.mxu0 0.0
    %3034 = vmatpush1.msra.mxu0 0.0
    %3035 = vmatprep.subr.mxu0 0.0
    %3036 = vmatpush1.msra.mxu0 0.0
    %3037 = vmatprep.subr.mxu0 0.0
    %3038 = vmatpush1.msra.mxu0 0.0
    %3039 = vmatprep.subr.mxu0 0.0
    %3040 = vmatpush1.msra.mxu0 0.0
    %3041 = vmatprep.subr.mxu0 0.0
    %3042 = vmatpush1.msra.mxu0 0.0
    %3043 = vmatprep.subr.mxu0 0.0
    %3044 = vmatpush1.msra.mxu0 0.0
    %3045 = vmatprep.subr.mxu0 0.0
    %3046 = vmatpush1.msra.mxu0 0.0
    %3047 = vmatprep.subr.mxu0 0.0
    %3048 = vmatpush1.msra.mxu0 0.0
    %3049 = vmatprep.subr.mxu0 0.0
    %3050 = vmatpush1.msra.mxu0 0.0
    %3051 = vmatprep.subr.mxu0 0.0
    %3052 = vmatpush1.msra.mxu0 0.0
    %3053 = vmatprep.subr.mxu0 0.0
    %3054 = vmatpush1.msra.mxu0 0.0
    %3055 = vmatprep.subr.mxu0 0.0
    %3056 = vmatpush1.msra.mxu0 0.0
    %3057 = vmatprep.subr.mxu0 0.0
    %3058 = vmatpush1.msra.mxu0 0.0
    %3059 = vmatprep.subr.mxu0 0.0
    %3060 = vmatpush1.msra.mxu0 0.0
    %3061 = vmatprep.subr.mxu0 0.0
    %3062 = vmatpush1.msra.mxu0 0.0
    %3063 = vmatprep.subr.mxu0 0.0
    %3064 = vmatpush1.msra.mxu0 0.0
    %3065 = vmatprep.mubr.f32.mxu0 0.0
    %3066 = vmatmul.mubr.f32.gmra.mrb[0].mxu0 %v2999
    %v3067 = vpop.f32.mrb[0].mxu0
    %v3068 = vadd.f32 0.0, %v3067
    %v3069 = vpop.f32.mrb[0].mxu0
    %3070 = vdwg.mxu0
    %v3071 = vadd.f32 %v2992, %v3068
    %v3072 = vld [vmem:[%s1517] sm:$0xff]
    %v3073 = vld [vmem:[%s1517 + $0x8] sm:$0xff]
    %v3074 = vld [vmem:[%s1517 + $0x10] sm:$0xff]
    %v3075 = vld [vmem:[%s1517 + $0x18] sm:$0xff]
    %v3076 = vld [vmem:[%s1517 + $0x20] sm:$0xff]
    %v3077 = vrot.slane %v2752, 4
    %v3078 = vsel %vm1202, %v3077, 0
    %3080 = vmatprep.subr.mxu0 0.0
    %3081 = vmatpush1.msra.mxu0 %v3072
    %3082 = vmatprep.subr.mxu0 0.0
    %3083 = vmatpush1.msra.mxu0 %v3073
    %3084 = vmatprep.subr.mxu0 0.0
    %3085 = vmatpush1.msra.mxu0 %v3074
    %3086 = vmatprep.subr.mxu0 0.0
    %3087 = vmatpush1.msra.mxu0 %v3075
    %3088 = vmatprep.subr.mxu0 0.0
    %3089 = vmatpush1.msra.mxu0 %v3076
    %3090 = vmatprep.subr.mxu0 0.0
    %3091 = vmatpush1.msra.mxu0 0.0
    %3092 = vmatprep.subr.mxu0 0.0
    %3093 = vmatpush1.msra.mxu0 0.0
    %3094 = vmatprep.subr.mxu0 0.0
    %3095 = vmatpush1.msra.mxu0 0.0
    %3096 = vmatprep.subr.mxu0 0.0
    %3097 = vmatpush1.msra.mxu0 0.0
    %3098 = vmatprep.subr.mxu0 0.0
    %3099 = vmatpush1.msra.mxu0 0.0
    %3100 = vmatprep.subr.mxu0 0.0
    %3101 = vmatpush1.msra.mxu0 0.0
    %3102 = vmatprep.subr.mxu0 0.0
    %3103 = vmatpush1.msra.mxu0 0.0
    %3104 = vmatprep.subr.mxu0 0.0
    %3105 = vmatpush1.msra.mxu0 0.0
    %3106 = vmatprep.subr.mxu0 0.0
    %3107 = vmatpush1.msra.mxu0 0.0
    %3108 = vmatprep.subr.mxu0 0.0
    %3109 = vmatpush1.msra.mxu0 0.0
    %3110 = vmatprep.subr.mxu0 0.0
    %3111 = vmatpush1.msra.mxu0 0.0
    %3112 = vmatprep.subr.mxu0 0.0
    %3113 = vmatpush1.msra.mxu0 0.0
    %3114 = vmatprep.subr.mxu0 0.0
    %3115 = vmatpush1.msra.mxu0 0.0
    %3116 = vmatprep.subr.mxu0 0.0
    %3117 = vmatpush1.msra.mxu0 0.0
    %3118 = vmatprep.subr.mxu0 0.0
    %3119 = vmatpush1.msra.mxu0 0.0
    %3120 = vmatprep.subr.mxu0 0.0
    %3121 = vmatpush1.msra.mxu0 0.0
    %3122 = vmatprep.subr.mxu0 0.0
    %3123 = vmatpush1.msra.mxu0 0.0
    %3124 = vmatprep.subr.mxu0 0.0
    %3125 = vmatpush1.msra.mxu0 0.0
    %3126 = vmatprep.subr.mxu0 0.0
    %3127 = vmatpush1.msra.mxu0 0.0
    %3128 = vmatprep.subr.mxu0 0.0
    %3129 = vmatpush1.msra.mxu0 0.0
    %3130 = vmatprep.subr.mxu0 0.0
    %3131 = vmatpush1.msra.mxu0 0.0
    %3132 = vmatprep.subr.mxu0 0.0
    %3133 = vmatpush1.msra.mxu0 0.0
    %3134 = vmatprep.subr.mxu0 0.0
    %3135 = vmatpush1.msra.mxu0 0.0
    %3136 = vmatprep.subr.mxu0 0.0
    %3137 = vmatpush1.msra.mxu0 0.0
    %3138 = vmatprep.subr.mxu0 0.0
    %3139 = vmatpush1.msra.mxu0 0.0
    %3140 = vmatprep.subr.mxu0 0.0
    %3141 = vmatpush1.msra.mxu0 0.0
    %3142 = vmatprep.subr.mxu0 0.0
    %3143 = vmatpush1.msra.mxu0 0.0
    %3144 = vmatprep.mubr.f32.mxu0 0.0
    %3145 = vmatmul.mubr.f32.gmra.mrb[0].mxu0 %v3078
    %v3146 = vpop.f32.mrb[0].mxu0
    %v3147 = vadd.f32 0.0, %v3146
    %v3148 = vpop.f32.mrb[0].mxu0
    %3149 = vdwg.mxu0
    %v3150 = vadd.f32 %v3071, %v3147
    %3151 = vst.msk [vmem:[#allocation2 + $0x1] sm:$0x1] %vm1597, %v3150
    // Predicated region
    $region30: #{convnet_forward.1} parent=1 // pred_check
      _
    $region31: #{convnet_forward.1} parent=1 // pred_check_branch
      %3153 = sbr.rel (0) target = $region33
    $region32: #{convnet_forward.1} parent=1 // pred_region
      %s3155 = ssub.s32 32, 32
      %3156 = vsyncadd [#allocation3], %s3155
      %s3158 = sshll.u32 [#allocation2], 4
      %s3159 = int_to_ptr.vmem [resolvable:$true] %s3158
      %3161 = dma.vmem_to_hbm [thread:$0]  %s3159, 32, %s7, [#allocation3]
    $region33: #{convnet_forward.1} parent=1 // pred_fallthru
      _
    // Predicated region
    $region34: #{convnet_forward.1} parent=1 // pred_check
      _
    $region35: #{convnet_forward.1} parent=1 // pred_check_branch
      %3163 = sbr.rel (0) target = $region37
    $region36: #{convnet_forward.1} parent=1 // pred_region
      _
    $region37: #{convnet_forward.1} parent=1 // pred_fallthru
      _
    // Predicated region
    $region38: #{convnet_forward.1} parent=1 // pred_check
      _
    $region39: #{convnet_forward.1} parent=1 // pred_check_branch
      %3165 = sbr.rel (0) target = $region41
    $region40: #{convnet_forward.1} parent=1 // pred_region
      %3166 = dma.done [#allocation3], 32
    $region41: #{convnet_forward.1} parent=1 // pred_fallthru
      _
    // Predicated region
    $region42: #{convnet_forward.1} parent=1 // pred_check
      _
    $region43: #{convnet_forward.1} parent=1 // pred_check_branch
      %3168 = sbr.rel (0) target = $region45
    $region44: #{convnet_forward.1} parent=1 // pred_region
      _
    $region45: #{convnet_forward.1} parent=1 // pred_fallthru
      _
    %3169 = vsyncpa [#allocation3], 1

</llo_original>
